<compile_context>
chip_gen: v7x
topology: tpu7x:2x2x1
jax: 0.10.0
libtpu: 0.0.40
codegen_flags: <defaults>
</compile_context>

<pallas_src>
import numpy as np
import jax
import jax.numpy as jnp
from jax.experimental import pallas as pl
from jax.experimental.pallas import tpu as pltpu

# ----------------------------- configuration --------------------------------
N_FREQ   = 4                        # frequency bands (stand-in for permuto levels)
ENC_DIM  = 3 * 2 * N_FREQ           # 24
LATENT   = 8                        # n_latent_dim (z_time)
SDF_IN   = ENC_DIM + LATENT         # 32 : concat(enc(x), z_time)
SDF_HID  = 64
N_EXTRA  = 32                       # implicit_surface.n_extra_feat (geometry feat h)
SDF_OUT  = 1 + N_EXTRA              # 33 : sdf + h
APPEAR   = 4                        # h_appear dim
RAD_IN   = 3 + 3 + 3 + N_EXTRA + APPEAR   # 45 : [x, v, n, h, h_appear]
RAD_HID  = 64
FREQS    = tuple(float(2 ** k) for k in range(N_FREQ))   # 1, 2, 4, 8

BLK_OUT  = SDF_OUT + ENC_DIM        # 57 : block-diag matmul output [h | sdf | a]
PACK_W   = SDF_OUT + 3 + 3          # 39 : packed output [h | sdf | nablas | rgb]
CHUNK    = 128                      # rows per inner-loop iteration (bounds live ranges)
HALF_PI  = float(np.pi / 2)


# ------------------------------- kernel -------------------------------------
def _neus_kernel(x_ref, v_ref, z_ref, ha_ref,
                 w1_ref, wblk_ref, rw1_ref, rw2_ref, bias_ref,
                 out_ref):
    n_chunks = x_ref.shape[0] // CHUNK

    def chunk(c, carry):
        row = pl.multiple_of(c * CHUNK, CHUNK)
        x  = x_ref[pl.ds(row, CHUNK), :]                 # [C,3]
        v  = v_ref[pl.ds(row, CHUNK), :]                 # [C,3]
        z  = z_ref[pl.ds(row, CHUNK), :]                 # [C,LATENT]
        ha = ha_ref[pl.ds(row, CHUNK), :]                # [C,APPEAR]

        # small weight loads inside the loop keep live ranges per-chunk
        w1   = w1_ref[...]                               # [32,64]  f32
        wblk = wblk_ref[...]                             # [128,57] bf16 block-diag [w2p | w1et]
        rw1  = rw1_ref[...]                              # [45,64]  bf16 (rows: [h|x|v|n|ha])
        rw2  = rw2_ref[...]                              # [64,3]   bf16
        bsl  = bias_ref[...]                             # [8,64]   f32 packed biases/scales
        b1    = bsl[0:1, :]                              # [1,64]
        b_blk = bsl[1:2, 0:BLK_OUT]                      # [1,57]
        rb1   = bsl[2:3, :]                              # [1,64]
        rb2   = bsl[3:4, 0:3]                            # [1,3]
        w2s   = bsl[4:5, :]                              # [1,64]  = d sdf / d h1

        # --- multi-frequency encoding; cos via phase-shifted sin (one 24-lane sin)
        xr    = jnp.concatenate([x * f for f in FREQS], axis=-1)          # [C,12]
        s24   = jnp.sin(jnp.concatenate([xr, xr + HALF_PI], axis=-1))     # [sin12 | cos12]
        sin12 = s24[:, :12]
        cos12 = s24[:, 12:]
        feat  = jnp.concatenate([s24, z], axis=-1)                        # [C,32]

        # --- SDF layer 1 stays f32 (ReLU mask must match an f32 autograd reference)
        pre1 = jnp.dot(feat, w1, preferred_element_type=jnp.float32) + b1  # [C,64]
        h1   = jnp.maximum(pre1, 0.0)
        g    = (pre1 > 0.0).astype(jnp.float32) * w2s                      # [C,64]

        # --- fused K=128 block-diagonal matmul: [h1|g] @ [[w2p,0],[0,w1et]]
        l_in = jnp.concatenate([h1, g], axis=-1).astype(jnp.bfloat16)      # [C,128]
        blk  = jnp.dot(l_in, wblk, preferred_element_type=jnp.float32) + b_blk  # [C,57]
        h_extra = blk[:, 0:N_EXTRA]                                        # [C,32]
        a       = blk[:, SDF_OUT:BLK_OUT]                                  # [C,24]

        # --- analytic nablas = d sdf / d x (frequencies pre-folded into w1et)
        t   = a[:, :12] * cos12 - a[:, 12:] * sin12                        # [C,12]
        nab = t[:, 0:3] + t[:, 3:6] + t[:, 6:9] + t[:, 9:12]               # [C,3]

        # --- radiance net (lane-aligned feature slab, widest chunk first)
        n_cl   = jnp.clip(nab, -1.0, 1.0)
        rad_in = jnp.concatenate([h_extra, x, v, n_cl, ha],
                                 axis=-1).astype(jnp.bfloat16)             # [C,45]
        rpre = jnp.dot(rad_in, rw1, preferred_element_type=jnp.float32) + rb1
        rh1  = jnp.maximum(rpre, 0.0).astype(jnp.bfloat16)
        rgb  = jax.nn.sigmoid(
            jnp.dot(rh1, rw2, preferred_element_type=jnp.float32) + rb2)   # [C,3]

        # --- single lane-packed store: [h | sdf | nablas | rgb]
        out_ref[pl.ds(row, CHUNK), :] = jnp.concatenate(
            [blk[:, 0:SDF_OUT], nab, rgb], axis=-1)                        # [C,39]
        return carry

    jax.lax.fori_loop(0, n_chunks, chunk, 0)


# ------------------------------- wrapper -------------------------------------
def dynamic_permuto_neus_forward(x, v, z_time, h_appear, params):
    """Returns (sdf [N,1], nablas [N,3], h [N,N_EXTRA], rgb [N,3])."""
    N = x.shape[0]
    w1, b1, w2, b2, rw1, rb1, rw2, rb2 = [jnp.asarray(p, jnp.float32) for p in params]

    # --- derived weight slabs (tiny, computed once per call) ---
    freq12 = np.repeat(np.asarray(FREQS, np.float32), 3)                    # [12]
    freq24 = np.concatenate([freq12, freq12])                               # [24]
    w1et = w1[:ENC_DIM, :].T * freq24[None, :]                              # [64,24]
    w2p  = jnp.concatenate([w2[:, 1:], w2[:, 0:1]], axis=1)                 # cols -> [h|sdf]
    b2p  = jnp.concatenate([b2[:, 1:], b2[:, 0:1]], axis=1)

    wblk = jnp.zeros((2 * SDF_HID, BLK_OUT), jnp.float32)                   # [128,57]
    wblk = wblk.at[0:SDF_HID, 0:SDF_OUT].set(w2p)
    wblk = wblk.at[SDF_HID:, SDF_OUT:].set(w1et)
    wblk = wblk.astype(jnp.bfloat16)

    # radiance layer-1 rows permuted to the [h | x | v | n | ha] input order
    rw1p = jnp.concatenate([rw1[9:9 + N_EXTRA], rw1[0:3], rw1[3:6], rw1[6:9],
                            rw1[9 + N_EXTRA:]], axis=0).astype(jnp.bfloat16)  # [45,64]
    rw2b = rw2.astype(jnp.bfloat16)                                           # [64,3]

    bias = jnp.zeros((8, SDF_HID), jnp.float32)                               # [8,64]
    bias = bias.at[0, :].set(b1[0])
    bias = bias.at[1, 0:SDF_OUT].set(b2p[0])
    bias = bias.at[2, :].set(rb1[0])
    bias = bias.at[3, 0:3].set(rb2[0])
    bias = bias.at[4, :].set(w2[:, 0])            # d sdf / d h1 row for the nabla path

    xf, vf, zf, haf = (jnp.asarray(a, jnp.float32) for a in (x, v, z_time, h_appear))

    # >= 4 grid steps for small batches so both v7x TensorCores get >= 2 steps each
    TN = 512 if N >= 2048 else 256
    n_pad = ((N + TN - 1) // TN) * TN
    if n_pad != N:
        pad = lambda a: jnp.pad(a, ((0, n_pad - N), (0, 0)))
        xf, vf, zf, haf = map(pad, (xf, vf, zf, haf))

    row_spec  = lambda c: pl.BlockSpec((TN, c), lambda i: (i, 0))
    full_spec = lambda a: pl.BlockSpec(a.shape, lambda i: (0,) * a.ndim)

    packed = pl.pallas_call(
        _neus_kernel,
        out_shape=jax.ShapeDtypeStruct((n_pad, PACK_W), jnp.float32),
        grid_spec=pltpu.PrefetchScalarGridSpec(
            num_scalar_prefetch=0,
            grid=(n_pad // TN,),
            in_specs=[row_spec(3), row_spec(3), row_spec(LATENT), row_spec(APPEAR),
                      full_spec(w1), full_spec(wblk), full_spec(rw1p),
                      full_spec(rw2b), full_spec(bias)],
            out_specs=row_spec(PACK_W),
        ),
        compiler_params=pltpu.CompilerParams(dimension_semantics=("parallel",)),
    )(xf, vf, zf, haf, w1, wblk, rw1p, rw2b, bias)

    h      = packed[:N, 0:N_EXTRA]
    sdf    = packed[:N, N_EXTRA:SDF_OUT]
    nablas = packed[:N, SDF_OUT:SDF_OUT + 3]
    rgb    = packed[:N, SDF_OUT + 3:PACK_W]
    return sdf, nablas, h, rgb


# ------------------------- pure-JAX reference --------------------------------
def reference_forward(x, v, z, ha, params):
    w1, b1, w2, b2, rw1, rb1, rw2, rb2 = params

    def enc(xp):
        sins = jnp.concatenate([jnp.sin(xp * f) for f in FREQS], axis=-1)
        coss = jnp.concatenate([jnp.cos(xp * f) for f in FREQS], axis=-1)
        return jnp.concatenate([sins, coss], axis=-1)

    def sdf_and_h(xp, zp):
        feat = jnp.concatenate([enc(xp), zp], axis=-1)
        h1 = jax.nn.relu(feat @ w1 + b1)
        out = h1 @ w2 + b2
        return out[..., 0], out[..., 1:]

    sdf, h_extra = sdf_and_h(x, z)
    grad_fn = jax.vmap(jax.grad(lambda xp, zp: sdf_and_h(xp[None], zp[None])[0][0]))
    nablas = grad_fn(x, z)
    n = jnp.clip(nablas, -1.0, 1.0)
    rad_in = jnp.concatenate([x, v, n, h_extra, ha], axis=-1)
    rh1 = jax.nn.relu(rad_in @ rw1 + rb1)
    rgb = jax.nn.sigmoid(rh1 @ rw2 + rb2)
    return sdf[:, None], nablas, h_extra, rgb


# --------------------------------- main ---------------------------------------
if __name__ == "__main__":
    key = jax.random.PRNGKey(0)
    ks = jax.random.split(key, 12)
    N = 1024   # TN=256 -> 4 grid steps (2 per v7x TensorCore)

    x = jax.random.uniform(ks[0], (N, 3), jnp.float32, -1.0, 1.0)      # normalized coords
    v_raw = jax.random.normal(ks[1], (N, 3), jnp.float32)
    v = v_raw / jnp.linalg.norm(v_raw, axis=-1, keepdims=True)         # view dirs
    z_time = 0.1 * jax.random.normal(ks[2], (N, LATENT), jnp.float32)  # time latent
    h_appear = 0.1 * jax.random.normal(ks[3], (N, APPEAR), jnp.float32)

    def init(k, shape, fan_in):
        return jax.random.normal(k, shape, jnp.float32) / np.sqrt(fan_in)

    params = (
        init(ks[4], (SDF_IN, SDF_HID), SDF_IN),
        0.01 * jax.random.normal(ks[5], (1, SDF_HID), jnp.float32),
        init(ks[6], (SDF_HID, SDF_OUT), SDF_HID),
        0.01 * jax.random.normal(ks[7], (1, SDF_OUT), jnp.float32),
        init(ks[8], (RAD_IN, RAD_HID), RAD_IN),
        0.01 * jax.random.normal(ks[9], (1, RAD_HID), jnp.float32),
        init(ks[10], (RAD_HID, 3), RAD_HID),
        0.01 * jax.random.normal(ks[11], (1, 3), jnp.float32),
    )

    outs = dynamic_permuto_neus_forward(x, v, z_time, h_appear, params)
    outs = jax.block_until_ready(outs)

    refs = reference_forward(x, v, z_time, h_appear, params)
    for got, want in zip(outs, refs):
        np.testing.assert_allclose(np.asarray(got), np.asarray(want),
                                   rtol=2e-2, atol=2e-2)

    print("KERNEL_OK")
</pallas_src>

<mosaic_0001>
module attributes {stable_mosaic.version = 11 : i64} {
  func.func @_neus_kernel(%arg0: i32, %arg1: memref<256x3xf32, #tpu.memory_space<vmem>>, %arg2: memref<256x3xf32, #tpu.memory_space<vmem>>, %arg3: memref<256x8xf32, #tpu.memory_space<vmem>>, %arg4: memref<256x4xf32, #tpu.memory_space<vmem>>, %arg5: memref<32x64xf32, #tpu.memory_space<vmem>>, %arg6: memref<128x57xbf16, #tpu.memory_space<vmem>>, %arg7: memref<45x64xbf16, #tpu.memory_space<vmem>>, %arg8: memref<64x3xbf16, #tpu.memory_space<vmem>>, %arg9: memref<8x64xf32, #tpu.memory_space<vmem>>, %arg10: memref<256x39xf32, #tpu.memory_space<vmem>>) attributes {dimension_semantics = [#tpu.dimension_semantics<parallel>], iteration_bounds = array<i64: 4>, scalar_prefetch = 0 : i64, scratch_operands = 0 : i64, tpu.core_type = #tpu.core_type<tc>, window_params = [{transform_indices = @transform_0, window_bounds = array<i64: 256, 3>}, {transform_indices = @transform_1, window_bounds = array<i64: 256, 3>}, {transform_indices = @transform_2, window_bounds = array<i64: 256, 8>}, {transform_indices = @transform_3, window_bounds = array<i64: 256, 4>}, {pipeline_mode = #tpu.pipeline_mode<synchronous>, transform_indices = @transform_4, window_bounds = array<i64: 32, 64>}, {pipeline_mode = #tpu.pipeline_mode<synchronous>, transform_indices = @transform_5, window_bounds = array<i64: 128, 57>}, {pipeline_mode = #tpu.pipeline_mode<synchronous>, transform_indices = @transform_6, window_bounds = array<i64: 45, 64>}, {pipeline_mode = #tpu.pipeline_mode<synchronous>, transform_indices = @transform_7, window_bounds = array<i64: 64, 3>}, {pipeline_mode = #tpu.pipeline_mode<synchronous>, transform_indices = @transform_8, window_bounds = array<i64: 8, 64>}, {transform_indices = @transform_9, window_bounds = array<i64: 256, 39>}]} {
    %c0_i32 = arith.constant 0 : i32
    %c2_i32 = arith.constant 2 : i32
    %0 = arith.addi %c0_i32, %c2_i32 : i32
    %c1_i32 = arith.constant 1 : i32
    scf.for %arg11 = %c0_i32 to %0 step %c1_i32  : i32 {
      %c128_i32 = arith.constant 128 : i32
      %1 = arith.muli %arg11, %c128_i32 : i32
      %2 = tpu.assume_multiple %1, 128 : i32
      %3 = arith.index_cast %2 : i32 to index
      %c0 = arith.constant 0 : index
      %4 = vector.load %arg1[%3, %c0] : memref<256x3xf32, #tpu.memory_space<vmem>>, vector<128x3xf32>
      %5 = arith.index_cast %2 : i32 to index
      %c0_1 = arith.constant 0 : index
      %6 = vector.load %arg2[%5, %c0_1] : memref<256x3xf32, #tpu.memory_space<vmem>>, vector<128x3xf32>
      %7 = arith.index_cast %2 : i32 to index
      %c0_2 = arith.constant 0 : index
      %8 = vector.load %arg3[%7, %c0_2] : memref<256x8xf32, #tpu.memory_space<vmem>>, vector<128x8xf32>
      %9 = arith.index_cast %2 : i32 to index
      %c0_3 = arith.constant 0 : index
      %10 = vector.load %arg4[%9, %c0_3] : memref<256x4xf32, #tpu.memory_space<vmem>>, vector<128x4xf32>
      %c0_4 = arith.constant 0 : index
      %c0_5 = arith.constant 0 : index
      %11 = vector.load %arg5[%c0_4, %c0_5] : memref<32x64xf32, #tpu.memory_space<vmem>>, vector<32x64xf32>
      %c0_6 = arith.constant 0 : index
      %c0_7 = arith.constant 0 : index
      %12 = vector.load %arg6[%c0_6, %c0_7] : memref<128x57xbf16, #tpu.memory_space<vmem>>, vector<128x57xbf16>
      %c0_8 = arith.constant 0 : index
      %c0_9 = arith.constant 0 : index
      %13 = vector.load %arg7[%c0_8, %c0_9] : memref<45x64xbf16, #tpu.memory_space<vmem>>, vector<45x64xbf16>
      %c0_10 = arith.constant 0 : index
      %c0_11 = arith.constant 0 : index
      %14 = vector.load %arg8[%c0_10, %c0_11] : memref<64x3xbf16, #tpu.memory_space<vmem>>, vector<64x3xbf16>
      %c0_12 = arith.constant 0 : index
      %c0_13 = arith.constant 0 : index
      %15 = vector.load %arg9[%c0_12, %c0_13] : memref<8x64xf32, #tpu.memory_space<vmem>>, vector<8x64xf32>
      %16 = vector.extract_strided_slice %15 {offsets = [0, 0], sizes = [1, 64], strides = [1, 1]} : vector<8x64xf32> to vector<1x64xf32>
      %17 = vector.extract_strided_slice %15 {offsets = [1, 0], sizes = [1, 57], strides = [1, 1]} : vector<8x64xf32> to vector<1x57xf32>
      %18 = vector.extract_strided_slice %15 {offsets = [2, 0], sizes = [1, 64], strides = [1, 1]} : vector<8x64xf32> to vector<1x64xf32>
      %19 = vector.extract_strided_slice %15 {offsets = [3, 0], sizes = [1, 3], strides = [1, 1]} : vector<8x64xf32> to vector<1x3xf32>
      %20 = vector.extract_strided_slice %15 {offsets = [4, 0], sizes = [1, 64], strides = [1, 1]} : vector<8x64xf32> to vector<1x64xf32>
      %cst = arith.constant 1.000000e+00 : f32
      %21 = vector.broadcast %cst : f32 to vector<128x3xf32>
      %22 = arith.mulf %4, %21 : vector<128x3xf32>
      %cst_14 = arith.constant 2.000000e+00 : f32
      %23 = vector.broadcast %cst_14 : f32 to vector<128x3xf32>
      %24 = arith.mulf %4, %23 : vector<128x3xf32>
      %cst_15 = arith.constant 4.000000e+00 : f32
      %25 = vector.broadcast %cst_15 : f32 to vector<128x3xf32>
      %26 = arith.mulf %4, %25 : vector<128x3xf32>
      %cst_16 = arith.constant 8.000000e+00 : f32
      %27 = vector.broadcast %cst_16 : f32 to vector<128x3xf32>
      %28 = arith.mulf %4, %27 : vector<128x3xf32>
      %29 = tpu.concatenate %22, %24, %26, %28 in 1 : vector<128x3xf32>, vector<128x3xf32>, vector<128x3xf32>, vector<128x3xf32> -> vector<128x12xf32>
      %cst_17 = arith.constant 1.57079637 : f32
      %30 = vector.broadcast %cst_17 : f32 to vector<128x12xf32>
      %31 = arith.addf %29, %30 : vector<128x12xf32>
      %32 = tpu.concatenate %29, %31 in 1 : vector<128x12xf32>, vector<128x12xf32> -> vector<128x24xf32>
      %33 = math.sin %32 : vector<128x24xf32>
      %34 = vector.extract_strided_slice %33 {offsets = [0, 0], sizes = [128, 12], strides = [1, 1]} : vector<128x24xf32> to vector<128x12xf32>
      %35 = vector.extract_strided_slice %33 {offsets = [0, 12], sizes = [128, 12], strides = [1, 1]} : vector<128x24xf32> to vector<128x12xf32>
      %36 = tpu.concatenate %33, %8 in 1 : vector<128x24xf32>, vector<128x8xf32> -> vector<128x32xf32>
      %cst_18 = arith.constant dense<0.000000e+00> : vector<128x64xf32>
      %37 = tpu.matmul %36, %11, %cst_18 {dimension_numbers = #tpu.dot_dimension_numbers<[1], [0], [0], [1], [0, 0, 1, 1], [], []>} : vector<128x32xf32>, vector<32x64xf32>, vector<128x64xf32> -> vector<128x64xf32>
      %38 = vector.broadcast %16 : vector<1x64xf32> to vector<128x64xf32>
      %39 = arith.addf %37, %38 : vector<128x64xf32>
      %cst_19 = arith.constant 0.000000e+00 : f32
      %40 = vector.broadcast %cst_19 : f32 to vector<128x64xf32>
      %41 = arith.maximumf %39, %40 : vector<128x64xf32>
      %cst_20 = arith.constant 0.000000e+00 : f32
      %42 = vector.broadcast %cst_20 : f32 to vector<128x64xf32>
      %43 = arith.cmpf ogt, %39, %42 : vector<128x64xf32>
      %44 = arith.extui %43 : vector<128x64xi1> to vector<128x64xi32>
      %45 = arith.sitofp %44 : vector<128x64xi32> to vector<128x64xf32>
      %46 = vector.broadcast %20 : vector<1x64xf32> to vector<128x64xf32>
      %47 = arith.mulf %45, %46 : vector<128x64xf32>
      %48 = tpu.concatenate %41, %47 in 1 : vector<128x64xf32>, vector<128x64xf32> -> vector<128x128xf32>
      %49 = arith.truncf %48 : vector<128x128xf32> to vector<128x128xbf16>
      %cst_21 = arith.constant dense<0.000000e+00> : vector<128x57xf32>
      %50 = tpu.matmul %49, %12, %cst_21 {dimension_numbers = #tpu.dot_dimension_numbers<[1], [0], [0], [1], [0, 0, 1, 1], [], []>} : vector<128x128xbf16>, vector<128x57xbf16>, vector<128x57xf32> -> vector<128x57xf32>
      %51 = vector.broadcast %17 : vector<1x57xf32> to vector<128x57xf32>
      %52 = arith.addf %50, %51 : vector<128x57xf32>
      %53 = vector.extract_strided_slice %52 {offsets = [0, 0], sizes = [128, 32], strides = [1, 1]} : vector<128x57xf32> to vector<128x32xf32>
      %54 = vector.extract_strided_slice %52 {offsets = [0, 33], sizes = [128, 24], strides = [1, 1]} : vector<128x57xf32> to vector<128x24xf32>
      %55 = vector.extract_strided_slice %54 {offsets = [0, 0], sizes = [128, 12], strides = [1, 1]} : vector<128x24xf32> to vector<128x12xf32>
      %56 = arith.mulf %55, %35 : vector<128x12xf32>
      %57 = vector.extract_strided_slice %54 {offsets = [0, 12], sizes = [128, 12], strides = [1, 1]} : vector<128x24xf32> to vector<128x12xf32>
      %58 = arith.mulf %57, %34 : vector<128x12xf32>
      %59 = arith.subf %56, %58 : vector<128x12xf32>
      %60 = vector.extract_strided_slice %59 {offsets = [0, 0], sizes = [128, 3], strides = [1, 1]} : vector<128x12xf32> to vector<128x3xf32>
      %61 = vector.extract_strided_slice %59 {offsets = [0, 3], sizes = [128, 3], strides = [1, 1]} : vector<128x12xf32> to vector<128x3xf32>
      %62 = arith.addf %60, %61 : vector<128x3xf32>
      %63 = vector.extract_strided_slice %59 {offsets = [0, 6], sizes = [128, 3], strides = [1, 1]} : vector<128x12xf32> to vector<128x3xf32>
      %64 = arith.addf %62, %63 : vector<128x3xf32>
      %65 = vector.extract_strided_slice %59 {offsets = [0, 9], sizes = [128, 3], strides = [1, 1]} : vector<128x12xf32> to vector<128x3xf32>
      %66 = arith.addf %64, %65 : vector<128x3xf32>
      %cst_22 = arith.constant -1.000000e+00 : f32
      %cst_23 = arith.constant 1.000000e+00 : f32
      %67 = vector.broadcast %cst_22 : f32 to vector<128x3xf32>
      %68 = arith.maximumf %67, %66 : vector<128x3xf32>
      %69 = vector.broadcast %cst_23 : f32 to vector<128x3xf32>
      %70 = arith.minimumf %69, %68 : vector<128x3xf32>
      %71 = tpu.concatenate %53, %4, %6, %70, %10 in 1 : vector<128x32xf32>, vector<128x3xf32>, vector<128x3xf32>, vector<128x3xf32>, vector<128x4xf32> -> vector<128x45xf32>
      %72 = arith.truncf %71 : vector<128x45xf32> to vector<128x45xbf16>
      %cst_24 = arith.constant dense<0.000000e+00> : vector<128x64xf32>
      %73 = tpu.matmul %72, %13, %cst_24 {dimension_numbers = #tpu.dot_dimension_numbers<[1], [0], [0], [1], [0, 0, 1, 1], [], []>} : vector<128x45xbf16>, vector<45x64xbf16>, vector<128x64xf32> -> vector<128x64xf32>
      %74 = vector.broadcast %18 : vector<1x64xf32> to vector<128x64xf32>
      %75 = arith.addf %73, %74 : vector<128x64xf32>
      %cst_25 = arith.constant 0.000000e+00 : f32
      %76 = vector.broadcast %cst_25 : f32 to vector<128x64xf32>
      %77 = arith.maximumf %75, %76 : vector<128x64xf32>
      %78 = arith.truncf %77 : vector<128x64xf32> to vector<128x64xbf16>
      %cst_26 = arith.constant dense<0.000000e+00> : vector<128x3xf32>
      %79 = tpu.matmul %78, %14, %cst_26 {dimension_numbers = #tpu.dot_dimension_numbers<[1], [0], [0], [1], [0, 0, 1, 1], [], []>} : vector<128x64xbf16>, vector<64x3xbf16>, vector<128x3xf32> -> vector<128x3xf32>
      %80 = vector.broadcast %19 : vector<1x3xf32> to vector<128x3xf32>
      %81 = arith.addf %79, %80 : vector<128x3xf32>
      %82 = arith.negf %81 : vector<128x3xf32>
      %83 = math.exp %82 : vector<128x3xf32>
      %cst_27 = arith.constant 1.000000e+00 : f32
      %84 = vector.broadcast %cst_27 : f32 to vector<128x3xf32>
      %85 = arith.addf %84, %83 : vector<128x3xf32>
      %86 = arith.divf %84, %85 : vector<128x3xf32>
      %87 = vector.extract_strided_slice %52 {offsets = [0, 0], sizes = [128, 33], strides = [1, 1]} : vector<128x57xf32> to vector<128x33xf32>
      %88 = tpu.concatenate %87, %66, %86 in 1 : vector<128x33xf32>, vector<128x3xf32>, vector<128x3xf32> -> vector<128x39xf32>
      %89 = arith.index_cast %2 : i32 to index
      %c0_28 = arith.constant 0 : index
      %90 = vector.load %arg10[%89, %c0_28] : memref<256x39xf32, #tpu.memory_space<vmem>>, vector<128x39xf32>
      tpu.vector_store %arg10[%89, %c0_28], %88 {strides = array<i32>} : memref<256x39xf32, #tpu.memory_space<vmem>>, vector<128x39xf32>,
    }
    %c2_i32_0 = arith.constant 2 : i32
    return
  }
  func.func @transform_0(%arg0: i32) -> (i32, i32) {
    %c0_i32 = arith.constant 0 : i32
    %c0_i32_0 = arith.constant 0 : i32
    return %arg0, %c0_i32 : i32, i32
  }
  func.func @transform_1(%arg0: i32) -> (i32, i32) {
    %c0_i32 = arith.constant 0 : i32
    %c0_i32_0 = arith.constant 0 : i32
    return %arg0, %c0_i32 : i32, i32
  }
  func.func @transform_2(%arg0: i32) -> (i32, i32) {
    %c0_i32 = arith.constant 0 : i32
    %c0_i32_0 = arith.constant 0 : i32
    return %arg0, %c0_i32 : i32, i32
  }
  func.func @transform_3(%arg0: i32) -> (i32, i32) {
    %c0_i32 = arith.constant 0 : i32
    %c0_i32_0 = arith.constant 0 : i32
    return %arg0, %c0_i32 : i32, i32
  }
  func.func @transform_4(%arg0: i32) -> (i32, i32) {
    %c0_i32 = arith.constant 0 : i32
    %c0_i32_0 = arith.constant 0 : i32
    %c0_i32_1 = arith.constant 0 : i32
    return %c0_i32, %c0_i32_0 : i32, i32
  }
  func.func @transform_5(%arg0: i32) -> (i32, i32) {
    %c0_i32 = arith.constant 0 : i32
    %c0_i32_0 = arith.constant 0 : i32
    %c0_i32_1 = arith.constant 0 : i32
    return %c0_i32, %c0_i32_0 : i32, i32
  }
  func.func @transform_6(%arg0: i32) -> (i32, i32) {
    %c0_i32 = arith.constant 0 : i32
    %c0_i32_0 = arith.constant 0 : i32
    %c0_i32_1 = arith.constant 0 : i32
    return %c0_i32, %c0_i32_0 : i32, i32
  }
  func.func @transform_7(%arg0: i32) -> (i32, i32) {
    %c0_i32 = arith.constant 0 : i32
    %c0_i32_0 = arith.constant 0 : i32
    %c0_i32_1 = arith.constant 0 : i32
    return %c0_i32, %c0_i32_0 : i32, i32
  }
  func.func @transform_8(%arg0: i32) -> (i32, i32) {
    %c0_i32 = arith.constant 0 : i32
    %c0_i32_0 = arith.constant 0 : i32
    %c0_i32_1 = arith.constant 0 : i32
    return %c0_i32, %c0_i32_0 : i32, i32
  }
  func.func @transform_9(%arg0: i32) -> (i32, i32) {
    %c0_i32 = arith.constant 0 : i32
    %c0_i32_0 = arith.constant 0 : i32
    return %arg0, %c0_i32 : i32, i32
  }
}

</mosaic_0001>

<llo_original>
// kernel: tpu_custom_call.1
$region0: #{tpu_custom_call.1}
  #allocation0 [shape = 'u32[]', space=smem, size = 0x4, offset = 0x4, fixed_abs, tag = 'smem constant byte address 0x4 - core index']
  #allocation1 [shape = 'u32[144,128]{1,0:T(1,128)}', space=vmem, size = 0x12000, scoped, tag = 'internal scratch']
  %s0 = inlined_call_operand.vmem [shape: f32[1024,3], index: 0, kind: input, shape index: {}]
  %s1 = inlined_call_operand.vmem [shape: f32[1024,3], index: 1, kind: input, shape index: {}]
  %s2 = inlined_call_operand.vmem [shape: f32[1024,8], index: 2, kind: input, shape index: {}]
  %s3 = inlined_call_operand.vmem [shape: f32[1024,4], index: 3, kind: input, shape index: {}]
  %s4 = inlined_call_operand.vmem [shape: f32[32,64], index: 4, kind: input, shape index: {}]
  %s5 = inlined_call_operand.vmem [shape: bf16[128,57], index: 5, kind: input, shape index: {}]
  %s6 = inlined_call_operand.vmem [shape: bf16[45,64], index: 6, kind: input, shape index: {}]
  %s7 = inlined_call_operand.vmem [shape: bf16[64,3], index: 7, kind: input, shape index: {}]
  %s8 = inlined_call_operand.vmem [shape: f32[8,64], index: 8, kind: input, shape index: {}]
  %s9 = inlined_call_operand.vmem [shape: f32[1024,39], index: 9, kind: output, shape index: {}]
  %s10 = sld [smem:[#allocation0]]
  $region76: #{tpu_custom_call.1} parent=0
    _
  %s12 = ssub.s32 1, %s10
  %s13 = scalar_select 0, %s12, %s10
  loop: start=0, step=1, limit=6
  $region2: #{tpu_custom_call.1} parent=0 // loop_pre_header
    _
  $region3: #{tpu_custom_call.1} parent=0 // loop_header
    %s15 = sphi 0, %s19
    %p16 = scmp.ge.s32.totalorder %s15, 6
    %s25 = sphi 0, %s27
    %s28 = sphi 0, %s25
    %s29 = sphi 0, %s28
    %s45 = sphi 0, %s29
    %s51 = sphi 0, %s53
    %s54 = sphi 0, %s51
    %s55 = sphi 0, %s54
    %s71 = sphi 0, %s55
    %s77 = sphi 0, %s79
    %s80 = sphi 0, %s77
    %s81 = sphi 0, %s80
    %s97 = sphi 0, %s81
    %s103 = sphi 0, %s105
    %s106 = sphi 0, %s103
    %s107 = sphi 0, %s106
    %s123 = sphi 0, %s107
    %s127 = sphi 0, %s127
    %s129 = sphi 0, %s127
    %s130 = sphi 0, %s129
    %s144 = sphi 0, %s130
    %s148 = sphi 0, %s148
    %s150 = sphi 0, %s148
    %s151 = sphi 0, %s150
    %s165 = sphi 0, %s151
    %s169 = sphi 0, %s169
    %s171 = sphi 0, %s169
    %s172 = sphi 0, %s171
    %s186 = sphi 0, %s172
    %s190 = sphi 0, %s190
    %s192 = sphi 0, %s190
    %s193 = sphi 0, %s192
    %s207 = sphi 0, %s193
    %s211 = sphi 0, %s211
    %s213 = sphi 0, %s211
    %s214 = sphi 0, %s213
    %s228 = sphi 0, %s214
    %s234 = sphi 0, %s236
    %s237 = sphi 0, %s234
    %s238 = sphi 0, %s237
    %s254 = sphi 0, %s238
  $region4: #{tpu_custom_call.1} parent=0 // loop_header_branch
    %18 = sbr.rel (%p16) target = $region8
  $region5: #{tpu_custom_call.1} parent=0 // loop_body
    %s20 = ssub.s32 %s15, 1
    %s21 = ssub.s32 %s15, 2
    %s22 = sadd.s32 %s15, 1
    %s23 = ssub.s32 %s15, %s22
    %p24 = scmp.eq.s32.totalorder %s23, 0
    %s26 = sadd.s32 %s25, 1
    %s27 = scalar_select %p24, %s25, %s26
    %p30 = pneg %p24
    %p31 = scmp.eq.s32.totalorder %s15, 3
    %p32 = por %p30, %p31
    %p33 = scmp.ne.s32.totalorder %s25, %s28
    %p34 = scmp.eq.s32.totalorder %s15, 0
    %p35 = por %p33, %p34
    %p36 = scmp.ne.s32.totalorder %s25, %s28
    %p37 = scmp.eq.s32.totalorder %s20, 3
    %p38 = por %p36, %p37
    %p39 = scmp.ne.s32.totalorder %s28, %s29
    %p40 = scmp.eq.s32.totalorder %s20, 0
    %p41 = por %p39, %p40
    %p42 = scmp.ne.s32.totalorder %s28, %s29
    %p43 = scmp.eq.s32.totalorder %s21, 3
    %p44 = por %p42, %p43
    %p46 = scmp.ne.s32.totalorder %s29, %s45
    %p47 = scmp.eq.s32.totalorder %s21, 0
    %p48 = por %p46, %p47
    %s49 = ssub.s32 %s15, %s22
    %p50 = scmp.eq.s32.totalorder %s49, 0
    %s52 = sadd.s32 %s51, 1
    %s53 = scalar_select %p50, %s51, %s52
    %p56 = pneg %p50
    %p57 = scmp.eq.s32.totalorder %s15, 3
    %p58 = por %p56, %p57
    %p59 = scmp.ne.s32.totalorder %s51, %s54
    %p60 = scmp.eq.s32.totalorder %s15, 0
    %p61 = por %p59, %p60
    %p62 = scmp.ne.s32.totalorder %s51, %s54
    %p63 = scmp.eq.s32.totalorder %s20, 3
    %p64 = por %p62, %p63
    %p65 = scmp.ne.s32.totalorder %s54, %s55
    %p66 = scmp.eq.s32.totalorder %s20, 0
    %p67 = por %p65, %p66
    %p68 = scmp.ne.s32.totalorder %s54, %s55
    %p69 = scmp.eq.s32.totalorder %s21, 3
    %p70 = por %p68, %p69
    %p72 = scmp.ne.s32.totalorder %s55, %s71
    %p73 = scmp.eq.s32.totalorder %s21, 0
    %p74 = por %p72, %p73
    %s75 = ssub.s32 %s15, %s22
    %p76 = scmp.eq.s32.totalorder %s75, 0
    %s78 = sadd.s32 %s77, 1
    %s79 = scalar_select %p76, %s77, %s78
    %p82 = pneg %p76
    %p83 = scmp.eq.s32.totalorder %s15, 3
    %p84 = por %p82, %p83
    %p85 = scmp.ne.s32.totalorder %s77, %s80
    %p86 = scmp.eq.s32.totalorder %s15, 0
    %p87 = por %p85, %p86
    %p88 = scmp.ne.s32.totalorder %s77, %s80
    %p89 = scmp.eq.s32.totalorder %s20, 3
    %p90 = por %p88, %p89
    %p91 = scmp.ne.s32.totalorder %s80, %s81
    %p92 = scmp.eq.s32.totalorder %s20, 0
    %p93 = por %p91, %p92
    %p94 = scmp.ne.s32.totalorder %s80, %s81
    %p95 = scmp.eq.s32.totalorder %s21, 3
    %p96 = por %p94, %p95
    %p98 = scmp.ne.s32.totalorder %s81, %s97
    %p99 = scmp.eq.s32.totalorder %s21, 0
    %p100 = por %p98, %p99
    %s101 = ssub.s32 %s15, %s22
    %p102 = scmp.eq.s32.totalorder %s101, 0
    %s104 = sadd.s32 %s103, 1
    %s105 = scalar_select %p102, %s103, %s104
    %p108 = pneg %p102
    %p109 = scmp.eq.s32.totalorder %s15, 3
    %p110 = por %p108, %p109
    %p111 = scmp.ne.s32.totalorder %s103, %s106
    %p112 = scmp.eq.s32.totalorder %s15, 0
    %p113 = por %p111, %p112
    %p114 = scmp.ne.s32.totalorder %s103, %s106
    %p115 = scmp.eq.s32.totalorder %s20, 3
    %p116 = por %p114, %p115
    %p117 = scmp.ne.s32.totalorder %s106, %s107
    %p118 = scmp.eq.s32.totalorder %s20, 0
    %p119 = por %p117, %p118
    %p120 = scmp.ne.s32.totalorder %s106, %s107
    %p121 = scmp.eq.s32.totalorder %s21, 3
    %p122 = por %p120, %p121
    %p124 = scmp.ne.s32.totalorder %s107, %s123
    %p125 = scmp.eq.s32.totalorder %s21, 0
    %p126 = por %p124, %p125
    %s128 = sadd.s32 %s127, 1
    %p131 = scmp.eq.s32.totalorder %s15, 3
    %p132 = scmp.ne.s32.totalorder %s127, %s129
    %p133 = scmp.eq.s32.totalorder %s15, 0
    %p134 = por %p132, %p133
    %p135 = scmp.ne.s32.totalorder %s127, %s129
    %p136 = scmp.eq.s32.totalorder %s20, 3
    %p137 = por %p135, %p136
    %p138 = scmp.ne.s32.totalorder %s129, %s130
    %p139 = scmp.eq.s32.totalorder %s20, 0
    %p140 = por %p138, %p139
    %p141 = scmp.ne.s32.totalorder %s129, %s130
    %p142 = scmp.eq.s32.totalorder %s21, 3
    %p143 = por %p141, %p142
    %p145 = scmp.ne.s32.totalorder %s130, %s144
    %p146 = scmp.eq.s32.totalorder %s21, 0
    %p147 = por %p145, %p146
    %s149 = sadd.s32 %s148, 1
    %p152 = scmp.eq.s32.totalorder %s15, 3
    %p153 = scmp.ne.s32.totalorder %s148, %s150
    %p154 = scmp.eq.s32.totalorder %s15, 0
    %p155 = por %p153, %p154
    %p156 = scmp.ne.s32.totalorder %s148, %s150
    %p157 = scmp.eq.s32.totalorder %s20, 3
    %p158 = por %p156, %p157
    %p159 = scmp.ne.s32.totalorder %s150, %s151
    %p160 = scmp.eq.s32.totalorder %s20, 0
    %p161 = por %p159, %p160
    %p162 = scmp.ne.s32.totalorder %s150, %s151
    %p163 = scmp.eq.s32.totalorder %s21, 3
    %p164 = por %p162, %p163
    %p166 = scmp.ne.s32.totalorder %s151, %s165
    %p167 = scmp.eq.s32.totalorder %s21, 0
    %p168 = por %p166, %p167
    %s170 = sadd.s32 %s169, 1
    %p173 = scmp.eq.s32.totalorder %s15, 3
    %p174 = scmp.ne.s32.totalorder %s169, %s171
    %p175 = scmp.eq.s32.totalorder %s15, 0
    %p176 = por %p174, %p175
    %p177 = scmp.ne.s32.totalorder %s169, %s171
    %p178 = scmp.eq.s32.totalorder %s20, 3
    %p179 = por %p177, %p178
    %p180 = scmp.ne.s32.totalorder %s171, %s172
    %p181 = scmp.eq.s32.totalorder %s20, 0
    %p182 = por %p180, %p181
    %p183 = scmp.ne.s32.totalorder %s171, %s172
    %p184 = scmp.eq.s32.totalorder %s21, 3
    %p185 = por %p183, %p184
    %p187 = scmp.ne.s32.totalorder %s172, %s186
    %p188 = scmp.eq.s32.totalorder %s21, 0
    %p189 = por %p187, %p188
    %s191 = sadd.s32 %s190, 1
    %p194 = scmp.eq.s32.totalorder %s15, 3
    %p195 = scmp.ne.s32.totalorder %s190, %s192
    %p196 = scmp.eq.s32.totalorder %s15, 0
    %p197 = por %p195, %p196
    %p198 = scmp.ne.s32.totalorder %s190, %s192
    %p199 = scmp.eq.s32.totalorder %s20, 3
    %p200 = por %p198, %p199
    %p201 = scmp.ne.s32.totalorder %s192, %s193
    %p202 = scmp.eq.s32.totalorder %s20, 0
    %p203 = por %p201, %p202
    %p204 = scmp.ne.s32.totalorder %s192, %s193
    %p205 = scmp.eq.s32.totalorder %s21, 3
    %p206 = por %p204, %p205
    %p208 = scmp.ne.s32.totalorder %s193, %s207
    %p209 = scmp.eq.s32.totalorder %s21, 0
    %p210 = por %p208, %p209
    %s212 = sadd.s32 %s211, 1
    %p215 = scmp.eq.s32.totalorder %s15, 3
    %p216 = scmp.ne.s32.totalorder %s211, %s213
    %p217 = scmp.eq.s32.totalorder %s15, 0
    %p218 = por %p216, %p217
    %p219 = scmp.ne.s32.totalorder %s211, %s213
    %p220 = scmp.eq.s32.totalorder %s20, 3
    %p221 = por %p219, %p220
    %p222 = scmp.ne.s32.totalorder %s213, %s214
    %p223 = scmp.eq.s32.totalorder %s20, 0
    %p224 = por %p222, %p223
    %p225 = scmp.ne.s32.totalorder %s213, %s214
    %p226 = scmp.eq.s32.totalorder %s21, 3
    %p227 = por %p225, %p226
    %p229 = scmp.ne.s32.totalorder %s214, %s228
    %p230 = scmp.eq.s32.totalorder %s21, 0
    %p231 = por %p229, %p230
    %s232 = ssub.s32 %s15, %s22
    %p233 = scmp.eq.s32.totalorder %s232, 0
    %s235 = sadd.s32 %s234, 1
    %s236 = scalar_select %p233, %s234, %s235
    %p239 = pneg %p233
    %p240 = scmp.eq.s32.totalorder %s15, 3
    %p241 = por %p239, %p240
    %p242 = scmp.ne.s32.totalorder %s234, %s237
    %p243 = scmp.eq.s32.totalorder %s15, 0
    %p244 = por %p242, %p243
    %p245 = scmp.ne.s32.totalorder %s234, %s237
    %p246 = scmp.eq.s32.totalorder %s20, 3
    %p247 = por %p245, %p246
    %p248 = scmp.ne.s32.totalorder %s237, %s238
    %p249 = scmp.eq.s32.totalorder %s20, 0
    %p250 = por %p248, %p249
    %p251 = scmp.ne.s32.totalorder %s237, %s238
    %p252 = scmp.eq.s32.totalorder %s21, 3
    %p253 = por %p251, %p252
    %p255 = scmp.ne.s32.totalorder %s238, %s254
    %p256 = scmp.eq.s32.totalorder %s21, 0
    %p257 = por %p255, %p256
    %p258 = scmp.le.s32.totalorder 1, %s15
    %p259 = scmp.lt.s32.totalorder %s15, 5
    %p260 = pnand %p258, %p259
    %p261 = pneg %p260
    // Predicated region
    $region9: #{tpu_custom_call.1} parent=5 // pred_check
      _
    $region10: #{tpu_custom_call.1} parent=5 // pred_check_branch
      %263 = sbr.rel (%p260) target = $region12
    $region11: #{tpu_custom_call.1} parent=5 // pred_region
      %s264 = ssub.s32 %s15, 1
      // Predicated region
      $region13: #{tpu_custom_call.1} parent=11 // pred_check
        %p265 = pneg %p140
      $region14: #{tpu_custom_call.1} parent=11 // pred_check_branch
        %267 = sbr.rel (%p265) target = $region16
      $region15: #{tpu_custom_call.1} parent=11 // pred_region
        _
      $region16: #{tpu_custom_call.1} parent=11 // pred_fallthru
        _
      // Predicated region
      $region17: #{tpu_custom_call.1} parent=11 // pred_check
        %p268 = pneg %p161
      $region18: #{tpu_custom_call.1} parent=11 // pred_check_branch
        %270 = sbr.rel (%p268) target = $region20
      $region19: #{tpu_custom_call.1} parent=11 // pred_region
        _
      $region20: #{tpu_custom_call.1} parent=11 // pred_fallthru
        _
      // Predicated region
      $region21: #{tpu_custom_call.1} parent=11 // pred_check
        %p271 = pneg %p182
      $region22: #{tpu_custom_call.1} parent=11 // pred_check_branch
        %273 = sbr.rel (%p271) target = $region24
      $region23: #{tpu_custom_call.1} parent=11 // pred_region
        _
      $region24: #{tpu_custom_call.1} parent=11 // pred_fallthru
        _
      // Predicated region
      $region25: #{tpu_custom_call.1} parent=11 // pred_check
        %p274 = pneg %p203
      $region26: #{tpu_custom_call.1} parent=11 // pred_check_branch
        %276 = sbr.rel (%p274) target = $region28
      $region27: #{tpu_custom_call.1} parent=11 // pred_region
        _
      $region28: #{tpu_custom_call.1} parent=11 // pred_fallthru
        _
      // Predicated region
      $region29: #{tpu_custom_call.1} parent=11 // pred_check
        %p277 = pneg %p224
      $region30: #{tpu_custom_call.1} parent=11 // pred_check_branch
        %279 = sbr.rel (%p277) target = $region32
      $region31: #{tpu_custom_call.1} parent=11 // pred_region
        _
      $region32: #{tpu_custom_call.1} parent=11 // pred_fallthru
        _
    $region12: #{tpu_custom_call.1} parent=5 // pred_fallthru
      _
    %p280 = scmp.lt.s32.totalorder %s15, 4
    // Predicated region
    $region33: #{tpu_custom_call.1} parent=5 // pred_check
      %p281 = pneg %p280
    $region34: #{tpu_custom_call.1} parent=5 // pred_check_branch
      %283 = sbr.rel (%p281) target = $region36
    $region35: #{tpu_custom_call.1} parent=5 // pred_region
      // Predicated region
      $region37: #{tpu_custom_call.1} parent=35 // pred_check
        %p284 = pneg %p35
      $region38: #{tpu_custom_call.1} parent=35 // pred_check_branch
        %286 = sbr.rel (%p284) target = $region40
      $region39: #{tpu_custom_call.1} parent=35 // pred_region
        %s287 = smul.u32 32, %s15
        %p288 = scmp.lt.s32.totalorder %s287, 127
        %s289 = scalar_select %p288, %s287, 127
        %s290 = smul.addr %s289, 8
        %s291 = scalar_lea.vmem %s0, %s290
        %s292 = smul.u32 32, %s15
      $region40: #{tpu_custom_call.1} parent=35 // pred_fallthru
        _
      // Predicated region
      $region41: #{tpu_custom_call.1} parent=35 // pred_check
        %p293 = pneg %p61
      $region42: #{tpu_custom_call.1} parent=35 // pred_check_branch
        %295 = sbr.rel (%p293) target = $region44
      $region43: #{tpu_custom_call.1} parent=35 // pred_region
        %s296 = smul.u32 32, %s15
        %p297 = scmp.lt.s32.totalorder %s296, 127
        %s298 = scalar_select %p297, %s296, 127
        %s299 = smul.addr %s298, 8
        %s300 = scalar_lea.vmem %s1, %s299
        %s301 = smul.u32 32, %s15
      $region44: #{tpu_custom_call.1} parent=35 // pred_fallthru
        _
      // Predicated region
      $region45: #{tpu_custom_call.1} parent=35 // pred_check
        %p302 = pneg %p87
      $region46: #{tpu_custom_call.1} parent=35 // pred_check_branch
        %304 = sbr.rel (%p302) target = $region48
      $region47: #{tpu_custom_call.1} parent=35 // pred_region
        %s305 = smul.u32 32, %s15
        %p306 = scmp.lt.s32.totalorder %s305, 127
        %s307 = scalar_select %p306, %s305, 127
        %s308 = smul.addr %s307, 8
        %s309 = scalar_lea.vmem %s2, %s308
        %s310 = smul.u32 32, %s15
      $region48: #{tpu_custom_call.1} parent=35 // pred_fallthru
        _
      // Predicated region
      $region49: #{tpu_custom_call.1} parent=35 // pred_check
        %p311 = pneg %p113
      $region50: #{tpu_custom_call.1} parent=35 // pred_check_branch
        %313 = sbr.rel (%p311) target = $region52
      $region51: #{tpu_custom_call.1} parent=35 // pred_region
        %s314 = smul.u32 32, %s15
        %p315 = scmp.lt.s32.totalorder %s314, 127
        %s316 = scalar_select %p315, %s314, 127
        %s317 = smul.addr %s316, 8
        %s318 = scalar_lea.vmem %s3, %s317
        %s319 = smul.u32 32, %s15
      $region52: #{tpu_custom_call.1} parent=35 // pred_fallthru
        _
    $region36: #{tpu_custom_call.1} parent=5 // pred_fallthru
      _
    %p320 = scmp.le.s32.totalorder 1, %s15
    %p321 = scmp.lt.s32.totalorder %s15, 5
    %p322 = pnand %p320, %p321
    %p323 = pneg %p322
    // Predicated region
    $region53: #{tpu_custom_call.1} parent=5 // pred_check
      _
    $region54: #{tpu_custom_call.1} parent=5 // pred_check_branch
      %325 = sbr.rel (%p322) target = $region56
    $region55: #{tpu_custom_call.1} parent=5 // pred_region
      %s326 = ssub.s32 %s15, 1
      %s327 = smul.u32 32, %s20
      %p328 = scmp.lt.s32.totalorder %s327, 127
      %s329 = scalar_select %p328, %s327, 127
      %s330 = smul.addr %s329, 8
      %s331 = scalar_lea.vmem %s0, %s330
      %p332 = pneg %p41
      %p333 = pneg %p38
      %s334 = smul.u32 32, %s20
      %p335 = scmp.lt.s32.totalorder %s334, 127
      %s336 = scalar_select %p335, %s334, 127
      %s337 = smul.addr %s336, 8
      %s338 = scalar_lea.vmem %s1, %s337
      %p339 = pneg %p67
      %p340 = pneg %p64
      %s341 = smul.u32 32, %s20
      %p342 = scmp.lt.s32.totalorder %s341, 127
      %s343 = scalar_select %p342, %s341, 127
      %s344 = smul.addr %s343, 8
      %s345 = scalar_lea.vmem %s2, %s344
      %p346 = pneg %p93
      %p347 = pneg %p90
      %s348 = smul.u32 32, %s20
      %p349 = scmp.lt.s32.totalorder %s348, 127
      %s350 = scalar_select %p349, %s348, 127
      %s351 = smul.addr %s350, 8
      %s352 = scalar_lea.vmem %s3, %s351
      %p353 = pneg %p119
      %p354 = pneg %p116
      %p355 = pneg %p140
      %p356 = pneg %p137
      %p357 = pneg %p161
      %p358 = pneg %p158
      %p359 = pneg %p182
      %p360 = pneg %p179
      %p361 = pneg %p203
      %p362 = pneg %p200
      %p363 = pneg %p224
      %p364 = pneg %p221
      %p365 = pneg %p250
      %p366 = pneg %p247
      %s367 = smul.u32 32, %s20
      %p368 = scmp.lt.s32.totalorder %s367, 127
      %s369 = scalar_select %p368, %s367, 127
      %s370 = smul.addr %s369, 8
      %s371 = scalar_lea.vmem %s9, %s370
      %s372 = smul.u32 32, %s20
      %p373 = scmp.lt.s32.totalorder %s372, 127
      %s374 = scalar_select %p373, %s372, 127
      %s375 = smul.addr %s374, 8
      %s376 = scalar_lea.vmem %s0, %s375
      %s377 = smul.u32 32, %s20
      %s378 = smul.u32 32, %s20
      %p379 = scmp.lt.s32.totalorder %s378, 127
      %s380 = scalar_select %p379, %s378, 127
      %s381 = smul.addr %s380, 8
      %s382 = scalar_lea.vmem %s1, %s381
      %s383 = smul.u32 32, %s20
      %s384 = smul.u32 32, %s20
      %p385 = scmp.lt.s32.totalorder %s384, 127
      %s386 = scalar_select %p385, %s384, 127
      %s387 = smul.addr %s386, 8
      %s388 = scalar_lea.vmem %s2, %s387
      %s389 = smul.u32 32, %s20
      %s390 = smul.u32 32, %s20
      %p391 = scmp.lt.s32.totalorder %s390, 127
      %s392 = scalar_select %p391, %s390, 127
      %s393 = smul.addr %s392, 8
      %s394 = scalar_lea.vmem %s3, %s393
      %s395 = smul.u32 32, %s20
      %s396 = smul.u32 32, %s20
      %p397 = scmp.lt.s32.totalorder %s396, 127
      %s398 = scalar_select %p397, %s396, 127
      %s399 = smul.addr %s398, 8
      %s400 = scalar_lea.vmem %s9, %s399
      %s401 = smul.u32 32, %s20
      loop: start=0, step=1, limit=2
      $region57: #{tpu_custom_call.1} parent=55 // loop_pre_header
        _
      $region58: #{tpu_custom_call.1} parent=55 // loop_header
        %s404 = sphi 0, %s408
        %p405 = scmp.ge.s32.totalorder %s404, 2
      $region59: #{tpu_custom_call.1} parent=55 // loop_header_branch
        %407 = sbr.rel (%p405) target = $region63
      $region60: #{tpu_custom_call.1} parent=55 // loop_body
        %s409 = smul.u32 %s404, 128
        %s410 = scalar_lea.vmem %s376, %s409
        %v411 = vld [vmem:[%s410] sm:$0xff]
        %v412 = vld [vmem:[%s410 + $0x8] sm:$0xff]
        %v413 = vld [vmem:[%s410 + $0x10] sm:$0xff]
        %v414 = vld [vmem:[%s410 + $0x18] sm:$0xff]
        %v415 = vld [vmem:[%s410 + $0x20] sm:$0xff]
        %v416 = vld [vmem:[%s410 + $0x28] sm:$0xff]
        %v417 = vld [vmem:[%s410 + $0x30] sm:$0xff]
        %v418 = vld [vmem:[%s410 + $0x38] sm:$0xff]
        %v419 = vld [vmem:[%s410 + $0x40] sm:$0xff]
        %v420 = vld [vmem:[%s410 + $0x48] sm:$0xff]
        %v421 = vld [vmem:[%s410 + $0x50] sm:$0xff]
        %v422 = vld [vmem:[%s410 + $0x58] sm:$0xff]
        %v423 = vld [vmem:[%s410 + $0x60] sm:$0xff]
        %v424 = vld [vmem:[%s410 + $0x68] sm:$0xff]
        %v425 = vld [vmem:[%s410 + $0x70] sm:$0xff]
        %v426 = vld [vmem:[%s410 + $0x78] sm:$0xff]
        %s427 = scalar_lea.vmem %s382, %s409
        %v428 = vld [vmem:[%s427] sm:$0xff]
        %v429 = vld [vmem:[%s427 + $0x8] sm:$0xff]
        %v430 = vld [vmem:[%s427 + $0x10] sm:$0xff]
        %v431 = vld [vmem:[%s427 + $0x18] sm:$0xff]
        %v432 = vld [vmem:[%s427 + $0x20] sm:$0xff]
        %v433 = vld [vmem:[%s427 + $0x28] sm:$0xff]
        %v434 = vld [vmem:[%s427 + $0x30] sm:$0xff]
        %v435 = vld [vmem:[%s427 + $0x38] sm:$0xff]
        %v436 = vld [vmem:[%s427 + $0x40] sm:$0xff]
        %v437 = vld [vmem:[%s427 + $0x48] sm:$0xff]
        %v438 = vld [vmem:[%s427 + $0x50] sm:$0xff]
        %v439 = vld [vmem:[%s427 + $0x58] sm:$0xff]
        %v440 = vld [vmem:[%s427 + $0x60] sm:$0xff]
        %v441 = vld [vmem:[%s427 + $0x68] sm:$0xff]
        %v442 = vld [vmem:[%s427 + $0x70] sm:$0xff]
        %v443 = vld [vmem:[%s427 + $0x78] sm:$0xff]
        %s444 = scalar_lea.vmem %s388, %s409
        %v445 = vld [vmem:[%s444] sm:$0xff]
        %v446 = vld [vmem:[%s444 + $0x8] sm:$0xff]
        %v447 = vld [vmem:[%s444 + $0x10] sm:$0xff]
        %v448 = vld [vmem:[%s444 + $0x18] sm:$0xff]
        %v449 = vld [vmem:[%s444 + $0x20] sm:$0xff]
        %v450 = vld [vmem:[%s444 + $0x28] sm:$0xff]
        %v451 = vld [vmem:[%s444 + $0x30] sm:$0xff]
        %v452 = vld [vmem:[%s444 + $0x38] sm:$0xff]
        %v453 = vld [vmem:[%s444 + $0x40] sm:$0xff]
        %v454 = vld [vmem:[%s444 + $0x48] sm:$0xff]
        %v455 = vld [vmem:[%s444 + $0x50] sm:$0xff]
        %v456 = vld [vmem:[%s444 + $0x58] sm:$0xff]
        %v457 = vld [vmem:[%s444 + $0x60] sm:$0xff]
        %v458 = vld [vmem:[%s444 + $0x68] sm:$0xff]
        %v459 = vld [vmem:[%s444 + $0x70] sm:$0xff]
        %v460 = vld [vmem:[%s444 + $0x78] sm:$0xff]
        %s461 = scalar_lea.vmem %s394, %s409
        %v462 = vld [vmem:[%s461] sm:$0xff]
        %v463 = vld [vmem:[%s461 + $0x8] sm:$0xff]
        %v464 = vld [vmem:[%s461 + $0x10] sm:$0xff]
        %v465 = vld [vmem:[%s461 + $0x18] sm:$0xff]
        %v466 = vld [vmem:[%s461 + $0x20] sm:$0xff]
        %v467 = vld [vmem:[%s461 + $0x28] sm:$0xff]
        %v468 = vld [vmem:[%s461 + $0x30] sm:$0xff]
        %v469 = vld [vmem:[%s461 + $0x38] sm:$0xff]
        %v470 = vld [vmem:[%s461 + $0x40] sm:$0xff]
        %v471 = vld [vmem:[%s461 + $0x48] sm:$0xff]
        %v472 = vld [vmem:[%s461 + $0x50] sm:$0xff]
        %v473 = vld [vmem:[%s461 + $0x58] sm:$0xff]
        %v474 = vld [vmem:[%s461 + $0x60] sm:$0xff]
        %v475 = vld [vmem:[%s461 + $0x68] sm:$0xff]
        %v476 = vld [vmem:[%s461 + $0x70] sm:$0xff]
        %v477 = vld [vmem:[%s461 + $0x78] sm:$0xff]
        %v478 = vld [vmem:[%s4] sm:$0xff]
        %v479 = vld [vmem:[%s4 + $0x8] sm:$0xff]
        %v480 = vld [vmem:[%s4 + $0x10] sm:$0xff]
        %v481 = vld [vmem:[%s4 + $0x18] sm:$0xff]
        %v482 = vld [vmem:[%s5] sm:$0xf]
        %v483 = vld [vmem:[%s5 + $0x4] sm:$0xf]
        %v484 = vld [vmem:[%s5 + $0x8] sm:$0xf]
        %v485 = vld [vmem:[%s5 + $0xc] sm:$0xf]
        %v486 = vld [vmem:[%s5 + $0x10] sm:$0xf]
        %v487 = vld [vmem:[%s5 + $0x14] sm:$0xf]
        %v488 = vld [vmem:[%s5 + $0x18] sm:$0xf]
        %v489 = vld [vmem:[%s5 + $0x1c] sm:$0xf]
        %v490 = vld [vmem:[%s5 + $0x20] sm:$0xf]
        %v491 = vld [vmem:[%s5 + $0x24] sm:$0xf]
        %v492 = vld [vmem:[%s5 + $0x28] sm:$0xf]
        %v493 = vld [vmem:[%s5 + $0x2c] sm:$0xf]
        %v494 = vld [vmem:[%s5 + $0x30] sm:$0xf]
        %v495 = vld [vmem:[%s5 + $0x34] sm:$0xf]
        %v496 = vld [vmem:[%s5 + $0x38] sm:$0xf]
        %v497 = vld [vmem:[%s5 + $0x3c] sm:$0xf]
        %v498 = vld [vmem:[%s6] sm:$0xf]
        %v499 = vld [vmem:[%s6 + $0x4] sm:$0xf]
        %v500 = vld [vmem:[%s6 + $0x8] sm:$0xf]
        %v501 = vld [vmem:[%s6 + $0xc] sm:$0xf]
        %v502 = vld [vmem:[%s6 + $0x10] sm:$0xf]
        %v503 = vld [vmem:[%s6 + $0x14] sm:$0x7]
        %v504 = vld [vmem:[%s7] sm:$0xf]
        %v505 = vld [vmem:[%s7 + $0x4] sm:$0xf]
        %v506 = vld [vmem:[%s7 + $0x8] sm:$0xf]
        %v507 = vld [vmem:[%s7 + $0xc] sm:$0xf]
        %v508 = vld [vmem:[%s7 + $0x10] sm:$0xf]
        %v509 = vld [vmem:[%s7 + $0x14] sm:$0xf]
        %v510 = vld [vmem:[%s7 + $0x18] sm:$0xf]
        %v511 = vld [vmem:[%s7 + $0x1c] sm:$0xf]
        %v512 = vld [vmem:[%s8] sm:$0xff]
        %v513 = vmul.f32 %v411, 2.0
        %v514 = vmul.f32 %v412, 2.0
        %v515 = vmul.f32 %v413, 2.0
        %v516 = vmul.f32 %v414, 2.0
        %v517 = vmul.f32 %v415, 2.0
        %v518 = vmul.f32 %v416, 2.0
        %v519 = vmul.f32 %v417, 2.0
        %v520 = vmul.f32 %v418, 2.0
        %v521 = vmul.f32 %v419, 2.0
        %v522 = vmul.f32 %v420, 2.0
        %v523 = vmul.f32 %v421, 2.0
        %v524 = vmul.f32 %v422, 2.0
        %v525 = vmul.f32 %v423, 2.0
        %v526 = vmul.f32 %v424, 2.0
        %v527 = vmul.f32 %v425, 2.0
        %v528 = vmul.f32 %v426, 2.0
        %v529 = vmul.f32 %v411, 4.0
        %v530 = vmul.f32 %v412, 4.0
        %v531 = vmul.f32 %v413, 4.0
        %v532 = vmul.f32 %v414, 4.0
        %v533 = vmul.f32 %v415, 4.0
        %v534 = vmul.f32 %v416, 4.0
        %v535 = vmul.f32 %v417, 4.0
        %v536 = vmul.f32 %v418, 4.0
        %v537 = vmul.f32 %v419, 4.0
        %v538 = vmul.f32 %v420, 4.0
        %v539 = vmul.f32 %v421, 4.0
        %v540 = vmul.f32 %v422, 4.0
        %v541 = vmul.f32 %v423, 4.0
        %v542 = vmul.f32 %v424, 4.0
        %v543 = vmul.f32 %v425, 4.0
        %v544 = vmul.f32 %v426, 4.0
        %v545 = vmul.f32 %v411, 8.0
        %v546 = vmul.f32 %v412, 8.0
        %v547 = vmul.f32 %v413, 8.0
        %v548 = vmul.f32 %v414, 8.0
        %v549 = vmul.f32 %v415, 8.0
        %v550 = vmul.f32 %v416, 8.0
        %v551 = vmul.f32 %v417, 8.0
        %v552 = vmul.f32 %v418, 8.0
        %v553 = vmul.f32 %v419, 8.0
        %v554 = vmul.f32 %v420, 8.0
        %v555 = vmul.f32 %v421, 8.0
        %v556 = vmul.f32 %v422, 8.0
        %v557 = vmul.f32 %v423, 8.0
        %v558 = vmul.f32 %v424, 8.0
        %v559 = vmul.f32 %v425, 8.0
        %v560 = vmul.f32 %v426, 8.0
        %577 = vrot.lane.b32.xlu0 %v513, 3
        %v578 = vpop.permute.xlu0 %577
        %579 = vrot.lane.b32.xlu0 %v514, 3
        %v580 = vpop.permute.xlu0 %579
        %581 = vrot.lane.b32.xlu0 %v515, 3
        %v582 = vpop.permute.xlu0 %581
        %583 = vrot.lane.b32.xlu0 %v516, 3
        %v584 = vpop.permute.xlu0 %583
        %585 = vrot.lane.b32.xlu0 %v517, 3
        %v586 = vpop.permute.xlu0 %585
        %587 = vrot.lane.b32.xlu0 %v518, 3
        %v588 = vpop.permute.xlu0 %587
        %589 = vrot.lane.b32.xlu0 %v519, 3
        %v590 = vpop.permute.xlu0 %589
        %591 = vrot.lane.b32.xlu0 %v520, 3
        %v592 = vpop.permute.xlu0 %591
        %593 = vrot.lane.b32.xlu0 %v521, 3
        %v594 = vpop.permute.xlu0 %593
        %595 = vrot.lane.b32.xlu0 %v522, 3
        %v596 = vpop.permute.xlu0 %595
        %597 = vrot.lane.b32.xlu0 %v523, 3
        %v598 = vpop.permute.xlu0 %597
        %599 = vrot.lane.b32.xlu0 %v524, 3
        %v600 = vpop.permute.xlu0 %599
        %601 = vrot.lane.b32.xlu0 %v525, 3
        %v602 = vpop.permute.xlu0 %601
        %603 = vrot.lane.b32.xlu0 %v526, 3
        %v604 = vpop.permute.xlu0 %603
        %605 = vrot.lane.b32.xlu0 %v527, 3
        %v606 = vpop.permute.xlu0 %605
        %607 = vrot.lane.b32.xlu0 %v528, 3
        %v608 = vpop.permute.xlu0 %607
        %641 = vrot.lane.b32.xlu0 %v529, 6
        %v642 = vpop.permute.xlu0 %641
        %643 = vrot.lane.b32.xlu0 %v530, 6
        %v644 = vpop.permute.xlu0 %643
        %645 = vrot.lane.b32.xlu0 %v531, 6
        %v646 = vpop.permute.xlu0 %645
        %647 = vrot.lane.b32.xlu0 %v532, 6
        %v648 = vpop.permute.xlu0 %647
        %649 = vrot.lane.b32.xlu0 %v533, 6
        %v650 = vpop.permute.xlu0 %649
        %651 = vrot.lane.b32.xlu0 %v534, 6
        %v652 = vpop.permute.xlu0 %651
        %653 = vrot.lane.b32.xlu0 %v535, 6
        %v654 = vpop.permute.xlu0 %653
        %655 = vrot.lane.b32.xlu0 %v536, 6
        %v656 = vpop.permute.xlu0 %655
        %657 = vrot.lane.b32.xlu0 %v537, 6
        %v658 = vpop.permute.xlu0 %657
        %659 = vrot.lane.b32.xlu0 %v538, 6
        %v660 = vpop.permute.xlu0 %659
        %661 = vrot.lane.b32.xlu0 %v539, 6
        %v662 = vpop.permute.xlu0 %661
        %663 = vrot.lane.b32.xlu0 %v540, 6
        %v664 = vpop.permute.xlu0 %663
        %665 = vrot.lane.b32.xlu0 %v541, 6
        %v666 = vpop.permute.xlu0 %665
        %667 = vrot.lane.b32.xlu0 %v542, 6
        %v668 = vpop.permute.xlu0 %667
        %669 = vrot.lane.b32.xlu0 %v543, 6
        %v670 = vpop.permute.xlu0 %669
        %671 = vrot.lane.b32.xlu0 %v544, 6
        %v672 = vpop.permute.xlu0 %671
        %705 = vrot.lane.b32.xlu0 %v545, 9
        %v706 = vpop.permute.xlu0 %705
        %707 = vrot.lane.b32.xlu0 %v546, 9
        %v708 = vpop.permute.xlu0 %707
        %709 = vrot.lane.b32.xlu0 %v547, 9
        %v710 = vpop.permute.xlu0 %709
        %711 = vrot.lane.b32.xlu0 %v548, 9
        %v712 = vpop.permute.xlu0 %711
        %713 = vrot.lane.b32.xlu0 %v549, 9
        %v714 = vpop.permute.xlu0 %713
        %715 = vrot.lane.b32.xlu0 %v550, 9
        %v716 = vpop.permute.xlu0 %715
        %717 = vrot.lane.b32.xlu0 %v551, 9
        %v718 = vpop.permute.xlu0 %717
        %719 = vrot.lane.b32.xlu0 %v552, 9
        %v720 = vpop.permute.xlu0 %719
        %721 = vrot.lane.b32.xlu0 %v553, 9
        %v722 = vpop.permute.xlu0 %721
        %723 = vrot.lane.b32.xlu0 %v554, 9
        %v724 = vpop.permute.xlu0 %723
        %725 = vrot.lane.b32.xlu0 %v555, 9
        %v726 = vpop.permute.xlu0 %725
        %727 = vrot.lane.b32.xlu0 %v556, 9
        %v728 = vpop.permute.xlu0 %727
        %729 = vrot.lane.b32.xlu0 %v557, 9
        %v730 = vpop.permute.xlu0 %729
        %731 = vrot.lane.b32.xlu0 %v558, 9
        %v732 = vpop.permute.xlu0 %731
        %733 = vrot.lane.b32.xlu0 %v559, 9
        %v734 = vpop.permute.xlu0 %733
        %735 = vrot.lane.b32.xlu0 %v560, 9
        %v736 = vpop.permute.xlu0 %735
        %vm753 = vcmask 23552
        %v754 = vsel %vm753, %v411, %v578
        %v755 = vsel %vm753, %v412, %v580
        %v756 = vsel %vm753, %v413, %v582
        %v757 = vsel %vm753, %v414, %v584
        %v758 = vsel %vm753, %v415, %v586
        %v759 = vsel %vm753, %v416, %v588
        %v760 = vsel %vm753, %v417, %v590
        %v761 = vsel %vm753, %v418, %v592
        %v762 = vsel %vm753, %v419, %v594
        %v763 = vsel %vm753, %v420, %v596
        %v764 = vsel %vm753, %v421, %v598
        %v765 = vsel %vm753, %v422, %v600
        %v766 = vsel %vm753, %v423, %v602
        %v767 = vsel %vm753, %v424, %v604
        %v768 = vsel %vm753, %v425, %v606
        %v769 = vsel %vm753, %v426, %v608
        %vm770 = vcmask 48128
        %v771 = vsel %vm770, %v754, %v642
        %v772 = vsel %vm770, %v755, %v644
        %v773 = vsel %vm770, %v756, %v646
        %v774 = vsel %vm770, %v757, %v648
        %v775 = vsel %vm770, %v758, %v650
        %v776 = vsel %vm770, %v759, %v652
        %v777 = vsel %vm770, %v760, %v654
        %v778 = vsel %vm770, %v761, %v656
        %v779 = vsel %vm770, %v762, %v658
        %v780 = vsel %vm770, %v763, %v660
        %v781 = vsel %vm770, %v764, %v662
        %v782 = vsel %vm770, %v765, %v664
        %v783 = vsel %vm770, %v766, %v666
        %v784 = vsel %vm770, %v767, %v668
        %v785 = vsel %vm770, %v768, %v670
        %v786 = vsel %vm770, %v769, %v672
        %vm787 = vcmask 72704
        %v788 = vsel %vm787, %v771, %v706
        %v789 = vsel %vm787, %v772, %v708
        %v790 = vsel %vm787, %v773, %v710
        %v791 = vsel %vm787, %v774, %v712
        %v792 = vsel %vm787, %v775, %v714
        %v793 = vsel %vm787, %v776, %v716
        %v794 = vsel %vm787, %v777, %v718
        %v795 = vsel %vm787, %v778, %v720
        %v796 = vsel %vm787, %v779, %v722
        %v797 = vsel %vm787, %v780, %v724
        %v798 = vsel %vm787, %v781, %v726
        %v799 = vsel %vm787, %v782, %v728
        %v800 = vsel %vm787, %v783, %v730
        %v801 = vsel %vm787, %v784, %v732
        %v802 = vsel %vm787, %v785, %v734
        %v803 = vsel %vm787, %v786, %v736
        %v804 = vadd.f32 %v788, 1.5707964
        %v805 = vadd.f32 %v789, 1.5707964
        %v806 = vadd.f32 %v790, 1.5707964
        %v807 = vadd.f32 %v791, 1.5707964
        %v808 = vadd.f32 %v792, 1.5707964
        %v809 = vadd.f32 %v793, 1.5707964
        %v810 = vadd.f32 %v794, 1.5707964
        %v811 = vadd.f32 %v795, 1.5707964
        %v812 = vadd.f32 %v796, 1.5707964
        %v813 = vadd.f32 %v797, 1.5707964
        %v814 = vadd.f32 %v798, 1.5707964
        %v815 = vadd.f32 %v799, 1.5707964
        %v816 = vadd.f32 %v800, 1.5707964
        %v817 = vadd.f32 %v801, 1.5707964
        %v818 = vadd.f32 %v802, 1.5707964
        %v819 = vadd.f32 %v803, 1.5707964
        %836 = vrot.lane.b32.xlu0 %v804, 12
        %v837 = vpop.permute.xlu0 %836
        %838 = vrot.lane.b32.xlu0 %v805, 12
        %v839 = vpop.permute.xlu0 %838
        %840 = vrot.lane.b32.xlu0 %v806, 12
        %v841 = vpop.permute.xlu0 %840
        %842 = vrot.lane.b32.xlu0 %v807, 12
        %v843 = vpop.permute.xlu0 %842
        %844 = vrot.lane.b32.xlu0 %v808, 12
        %v845 = vpop.permute.xlu0 %844
        %846 = vrot.lane.b32.xlu0 %v809, 12
        %v847 = vpop.permute.xlu0 %846
        %848 = vrot.lane.b32.xlu0 %v810, 12
        %v849 = vpop.permute.xlu0 %848
        %850 = vrot.lane.b32.xlu0 %v811, 12
        %v851 = vpop.permute.xlu0 %850
        %852 = vrot.lane.b32.xlu0 %v812, 12
        %v853 = vpop.permute.xlu0 %852
        %854 = vrot.lane.b32.xlu0 %v813, 12
        %v855 = vpop.permute.xlu0 %854
        %856 = vrot.lane.b32.xlu0 %v814, 12
        %v857 = vpop.permute.xlu0 %856
        %858 = vrot.lane.b32.xlu0 %v815, 12
        %v859 = vpop.permute.xlu0 %858
        %860 = vrot.lane.b32.xlu0 %v816, 12
        %v861 = vpop.permute.xlu0 %860
        %862 = vrot.lane.b32.xlu0 %v817, 12
        %v863 = vpop.permute.xlu0 %862
        %864 = vrot.lane.b32.xlu0 %v818, 12
        %v865 = vpop.permute.xlu0 %864
        %866 = vrot.lane.b32.xlu0 %v819, 12
        %v867 = vpop.permute.xlu0 %866
        %vm884 = vcmask 97280
        %v885 = vsel %vm884, %v788, %v837
        %v886 = vsel %vm884, %v789, %v839
        %v887 = vsel %vm884, %v790, %v841
        %v888 = vsel %vm884, %v791, %v843
        %v889 = vsel %vm884, %v792, %v845
        %v890 = vsel %vm884, %v793, %v847
        %v891 = vsel %vm884, %v794, %v849
        %v892 = vsel %vm884, %v795, %v851
        %v893 = vsel %vm884, %v796, %v853
        %v894 = vsel %vm884, %v797, %v855
        %v895 = vsel %vm884, %v798, %v857
        %v896 = vsel %vm884, %v799, %v859
        %v897 = vsel %vm884, %v800, %v861
        %v898 = vsel %vm884, %v801, %v863
        %v899 = vsel %vm884, %v802, %v865
        %v900 = vsel %vm884, %v803, %v867
        %v901 = vand.u32 2147483647, %v885
        %vm902 = vcmp.le.f32.partialorder %v901, 0.7853982
        %vm903 = vcmp.lt.s32.totalorder %v885, 0
        %v904 = vand.u32 %v885, 2139095040
        %v905 = vshrl.u32 %v904, 23
        %v906 = vsub.s32 %v905, 127
        %v907 = vand.u32 2147483647, %v885
        %v908 = vand.u32 %v907, 8388607
        %v909 = vor.u32 %v908, 8388608
        %v910 = vsub.s32 0, %v909
        %v911 = vadd.s32 %v906, 1
        %vm912 = vcmp.gt.s32.totalorder %v911, 0
        %v913 = vsel %vm912, %v911, 0
        %v914 = vshrl.u32 %v913, 5
        %v915 = vand.u32 %v913, 31
        %v916 = vsub.s32 32, %v915
        %v917 = vshrl.u32 683565275, %v916
        %v918 = vshll.u32 683565275, %v915
        %v919 = vshrl.u32 2475754826, %v916
        %v920 = vor.u32 %v918, %v919
        %v921 = vshll.u32 2475754826, %v915
        %v922 = vshrl.u32 2131351028, %v916
        %v923 = vor.u32 %v921, %v922
        %v924 = vshll.u32 2131351028, %v915
        %v925 = vshrl.u32 2102212464, %v916
        %v926 = vor.u32 %v924, %v925
        %v927 = vshll.u32 2102212464, %v915
        %v928 = vshrl.u32 920167782, %v916
        %v929 = vor.u32 %v927, %v928
        %v930 = vshll.u32 920167782, %v915
        %v931 = vshrl.u32 1326507024, %v916
        %v932 = vor.u32 %v930, %v931
        %vm933 = vcmp.lt.s32.totalorder %v914, 1
        %vm934 = vcmp.lt.s32.totalorder %v914, 2
        %vm935 = vcmp.lt.s32.totalorder %v914, 3
        %vm936 = vcmp.lt.s32.totalorder %v914, 4
        %v937 = vsel %vm933, %v917, %v920
        %v938 = vsel %vm936, %v926, 2102212464
        %v939 = vsel %vm935, %v923, %v938
        %v940 = vsel %vm934, %v937, %v939
        %v941 = vsel %vm933, %v920, %v923
        %v942 = vsel %vm936, %v929, 920167782
        %v943 = vsel %vm935, %v926, %v942
        %v944 = vsel %vm934, %v941, %v943
        %v945 = vsel %vm933, %v923, %v926
        %v946 = vsel %vm936, %v932, 1326507024
        %v947 = vsel %vm935, %v929, %v946
        %v948 = vsel %vm934, %v945, %v947
        %v949 = vshll.u32 %v909, 8
        %v950 = vmul.u32.u64.compose %v949, %v948
        %v951 = vextract.low.u32 %v950
        %v952 = vextract.high.u32 %v950
        %v953 = vmul.u32.u64.compose %v949, %v944
        %v954 = vextract.low.u32 %v953
        %v955 = vextract.high.u32 %v953
        %v956 = vmul.u32 %v949, %v940
        %v957 = vadd.s32 %v952, %v954
        %vm958 = vc.u32 %v952, %v954
        %v959 = vadd.s32 %v955, 1
        %v960 = vsel %vm958, %v959, %v955
        %v961 = vadd.s32 %v956, %v960
        %v962 = vadd.s32 %v961, 536870912
        %v963 = vshrl.u32 %v962, 30
        %v964 = vshll.u32 %v963, 30
        %v965 = vsub.s32 %v961, %v964
        %vm966 = vcmp.lt.s32.totalorder %v965, 0
        %v967 = vsub.s32 0, %v965
        %v968 = vsel %vm966, %v967, %v965
        %v969 = vclz %v968
        %v970 = vsub.s32 %v969, 2
        %vm971 = vcmp.gt.s32.totalorder 0, %v970
        %v972 = vsel %vm971, 0, %v970
        %v973 = vsub.s32 32, %v972
        %v974 = vshll.u32 %v965, %v972
        %v975 = vshrl.u32 %v957, %v973
        %v976 = vor.u32 %v974, %v975
        %v977 = vsub.s32 4294967266, %v972
        %v978 = vadd.s32 %v977, 127
        %v979 = vshll.u32 %v978, 23
        %v980 = vor.u32 4788187, %v979
        %v981 = vand.u32 2147483647, %v980
        %v983 = vcvt.s32.f32 %v976
        %v984 = vmul.f32 %v983, %v981
        %v985 = vxor.u32 %v984, 2147483648
        %v986 = vsel %vm903, %v985, %v984
        %v987 = vsub.s32 4, %v963
        %v988 = vsel %vm903, %v987, %v963
        %v989 = vsel %vm902, %v885, %v986
        %v990 = vsel %vm902, 0, %v988
        %v991 = vcosq.f32.pop %v989
        %v992 = vsinq.f32.pop %v989
        %vm993 = vweird.f32 %v885
        %v994 = vadd.s32 %v990, 3
        %v995 = vand.u32 %v994, 3
        %vm996 = vcmp.lt.s32.totalorder %v995, 2
        %vm997 = vcmp.eq.s32.totalorder %v995, 0
        %v998 = vxor.u32 %v992, 2147483648
        %v999 = vsel %vm997, %v991, %v998
        %vm1000 = vcmp.eq.s32.totalorder %v995, 2
        %v1001 = vxor.u32 %v991, 2147483648
        %v1002 = vsel %vm1000, %v1001, %v992
        %v1003 = vsel %vm996, %v999, %v1002
        %v1004 = vsel %vm993, nan, %v1003
        %v1005 = vand.u32 2147483647, %v886
        %vm1006 = vcmp.le.f32.partialorder %v1005, 0.7853982
        %vm1007 = vcmp.lt.s32.totalorder %v886, 0
        %v1008 = vand.u32 %v886, 2139095040
        %v1009 = vshrl.u32 %v1008, 23
        %v1010 = vsub.s32 %v1009, 127
        %v1011 = vand.u32 2147483647, %v886
        %v1012 = vand.u32 %v1011, 8388607
        %v1013 = vor.u32 %v1012, 8388608
        %v1014 = vsub.s32 0, %v1013
        %v1015 = vadd.s32 %v1010, 1
        %vm1016 = vcmp.gt.s32.totalorder %v1015, 0
        %v1017 = vsel %vm1016, %v1015, 0
        %v1018 = vshrl.u32 %v1017, 5
        %v1019 = vand.u32 %v1017, 31
        %v1020 = vsub.s32 32, %v1019
        %v1021 = vshrl.u32 683565275, %v1020
        %v1022 = vshll.u32 683565275, %v1019
        %v1023 = vshrl.u32 2475754826, %v1020
        %v1024 = vor.u32 %v1022, %v1023
        %v1025 = vshll.u32 2475754826, %v1019
        %v1026 = vshrl.u32 2131351028, %v1020
        %v1027 = vor.u32 %v1025, %v1026
        %v1028 = vshll.u32 2131351028, %v1019
        %v1029 = vshrl.u32 2102212464, %v1020
        %v1030 = vor.u32 %v1028, %v1029
        %v1031 = vshll.u32 2102212464, %v1019
        %v1032 = vshrl.u32 920167782, %v1020
        %v1033 = vor.u32 %v1031, %v1032
        %v1034 = vshll.u32 920167782, %v1019
        %v1035 = vshrl.u32 1326507024, %v1020
        %v1036 = vor.u32 %v1034, %v1035
        %vm1037 = vcmp.lt.s32.totalorder %v1018, 1
        %vm1038 = vcmp.lt.s32.totalorder %v1018, 2
        %vm1039 = vcmp.lt.s32.totalorder %v1018, 3
        %vm1040 = vcmp.lt.s32.totalorder %v1018, 4
        %v1041 = vsel %vm1037, %v1021, %v1024
        %v1042 = vsel %vm1040, %v1030, 2102212464
        %v1043 = vsel %vm1039, %v1027, %v1042
        %v1044 = vsel %vm1038, %v1041, %v1043
        %v1045 = vsel %vm1037, %v1024, %v1027
        %v1046 = vsel %vm1040, %v1033, 920167782
        %v1047 = vsel %vm1039, %v1030, %v1046
        %v1048 = vsel %vm1038, %v1045, %v1047
        %v1049 = vsel %vm1037, %v1027, %v1030
        %v1050 = vsel %vm1040, %v1036, 1326507024
        %v1051 = vsel %vm1039, %v1033, %v1050
        %v1052 = vsel %vm1038, %v1049, %v1051
        %v1053 = vshll.u32 %v1013, 8
        %v1054 = vmul.u32.u64.compose %v1053, %v1052
        %v1055 = vextract.low.u32 %v1054
        %v1056 = vextract.high.u32 %v1054
        %v1057 = vmul.u32.u64.compose %v1053, %v1048
        %v1058 = vextract.low.u32 %v1057
        %v1059 = vextract.high.u32 %v1057
        %v1060 = vmul.u32 %v1053, %v1044
        %v1061 = vadd.s32 %v1056, %v1058
        %vm1062 = vc.u32 %v1056, %v1058
        %v1063 = vadd.s32 %v1059, 1
        %v1064 = vsel %vm1062, %v1063, %v1059
        %v1065 = vadd.s32 %v1060, %v1064
        %v1066 = vadd.s32 %v1065, 536870912
        %v1067 = vshrl.u32 %v1066, 30
        %v1068 = vshll.u32 %v1067, 30
        %v1069 = vsub.s32 %v1065, %v1068
        %vm1070 = vcmp.lt.s32.totalorder %v1069, 0
        %v1071 = vsub.s32 0, %v1069
        %v1072 = vsel %vm1070, %v1071, %v1069
        %v1073 = vclz %v1072
        %v1074 = vsub.s32 %v1073, 2
        %vm1075 = vcmp.gt.s32.totalorder 0, %v1074
        %v1076 = vsel %vm1075, 0, %v1074
        %v1077 = vsub.s32 32, %v1076
        %v1078 = vshll.u32 %v1069, %v1076
        %v1079 = vshrl.u32 %v1061, %v1077
        %v1080 = vor.u32 %v1078, %v1079
        %v1081 = vsub.s32 4294967266, %v1076
        %v1082 = vadd.s32 %v1081, 127
        %v1083 = vshll.u32 %v1082, 23
        %v1084 = vor.u32 4788187, %v1083
        %v1085 = vand.u32 2147483647, %v1084
        %v1087 = vcvt.s32.f32 %v1080
        %v1088 = vmul.f32 %v1087, %v1085
        %v1089 = vxor.u32 %v1088, 2147483648
        %v1090 = vsel %vm1007, %v1089, %v1088
        %v1091 = vsub.s32 4, %v1067
        %v1092 = vsel %vm1007, %v1091, %v1067
        %v1093 = vsel %vm1006, %v886, %v1090
        %v1094 = vsel %vm1006, 0, %v1092
        %v1095 = vcosq.f32.pop %v1093
        %v1096 = vsinq.f32.pop %v1093
        %vm1097 = vweird.f32 %v886
        %v1098 = vadd.s32 %v1094, 3
        %v1099 = vand.u32 %v1098, 3
        %vm1100 = vcmp.lt.s32.totalorder %v1099, 2
        %vm1101 = vcmp.eq.s32.totalorder %v1099, 0
        %v1102 = vxor.u32 %v1096, 2147483648
        %v1103 = vsel %vm1101, %v1095, %v1102
        %vm1104 = vcmp.eq.s32.totalorder %v1099, 2
        %v1105 = vxor.u32 %v1095, 2147483648
        %v1106 = vsel %vm1104, %v1105, %v1096
        %v1107 = vsel %vm1100, %v1103, %v1106
        %v1108 = vsel %vm1097, nan, %v1107
        %v1109 = vand.u32 2147483647, %v887
        %vm1110 = vcmp.le.f32.partialorder %v1109, 0.7853982
        %vm1111 = vcmp.lt.s32.totalorder %v887, 0
        %v1112 = vand.u32 %v887, 2139095040
        %v1113 = vshrl.u32 %v1112, 23
        %v1114 = vsub.s32 %v1113, 127
        %v1115 = vand.u32 2147483647, %v887
        %v1116 = vand.u32 %v1115, 8388607
        %v1117 = vor.u32 %v1116, 8388608
        %v1118 = vsub.s32 0, %v1117
        %v1119 = vadd.s32 %v1114, 1
        %vm1120 = vcmp.gt.s32.totalorder %v1119, 0
        %v1121 = vsel %vm1120, %v1119, 0
        %v1122 = vshrl.u32 %v1121, 5
        %v1123 = vand.u32 %v1121, 31
        %v1124 = vsub.s32 32, %v1123
        %v1125 = vshrl.u32 683565275, %v1124
        %v1126 = vshll.u32 683565275, %v1123
        %v1127 = vshrl.u32 2475754826, %v1124
        %v1128 = vor.u32 %v1126, %v1127
        %v1129 = vshll.u32 2475754826, %v1123
        %v1130 = vshrl.u32 2131351028, %v1124
        %v1131 = vor.u32 %v1129, %v1130
        %v1132 = vshll.u32 2131351028, %v1123
        %v1133 = vshrl.u32 2102212464, %v1124
        %v1134 = vor.u32 %v1132, %v1133
        %v1135 = vshll.u32 2102212464, %v1123
        %v1136 = vshrl.u32 920167782, %v1124
        %v1137 = vor.u32 %v1135, %v1136
        %v1138 = vshll.u32 920167782, %v1123
        %v1139 = vshrl.u32 1326507024, %v1124
        %v1140 = vor.u32 %v1138, %v1139
        %vm1141 = vcmp.lt.s32.totalorder %v1122, 1
        %vm1142 = vcmp.lt.s32.totalorder %v1122, 2
        %vm1143 = vcmp.lt.s32.totalorder %v1122, 3
        %vm1144 = vcmp.lt.s32.totalorder %v1122, 4
        %v1145 = vsel %vm1141, %v1125, %v1128
        %v1146 = vsel %vm1144, %v1134, 2102212464
        %v1147 = vsel %vm1143, %v1131, %v1146
        %v1148 = vsel %vm1142, %v1145, %v1147
        %v1149 = vsel %vm1141, %v1128, %v1131
        %v1150 = vsel %vm1144, %v1137, 920167782
        %v1151 = vsel %vm1143, %v1134, %v1150
        %v1152 = vsel %vm1142, %v1149, %v1151
        %v1153 = vsel %vm1141, %v1131, %v1134
        %v1154 = vsel %vm1144, %v1140, 1326507024
        %v1155 = vsel %vm1143, %v1137, %v1154
        %v1156 = vsel %vm1142, %v1153, %v1155
        %v1157 = vshll.u32 %v1117, 8
        %v1158 = vmul.u32.u64.compose %v1157, %v1156
        %v1159 = vextract.low.u32 %v1158
        %v1160 = vextract.high.u32 %v1158
        %v1161 = vmul.u32.u64.compose %v1157, %v1152
        %v1162 = vextract.low.u32 %v1161
        %v1163 = vextract.high.u32 %v1161
        %v1164 = vmul.u32 %v1157, %v1148
        %v1165 = vadd.s32 %v1160, %v1162
        %vm1166 = vc.u32 %v1160, %v1162
        %v1167 = vadd.s32 %v1163, 1
        %v1168 = vsel %vm1166, %v1167, %v1163
        %v1169 = vadd.s32 %v1164, %v1168
        %v1170 = vadd.s32 %v1169, 536870912
        %v1171 = vshrl.u32 %v1170, 30
        %v1172 = vshll.u32 %v1171, 30
        %v1173 = vsub.s32 %v1169, %v1172
        %vm1174 = vcmp.lt.s32.totalorder %v1173, 0
        %v1175 = vsub.s32 0, %v1173
        %v1176 = vsel %vm1174, %v1175, %v1173
        %v1177 = vclz %v1176
        %v1178 = vsub.s32 %v1177, 2
        %vm1179 = vcmp.gt.s32.totalorder 0, %v1178
        %v1180 = vsel %vm1179, 0, %v1178
        %v1181 = vsub.s32 32, %v1180
        %v1182 = vshll.u32 %v1173, %v1180
        %v1183 = vshrl.u32 %v1165, %v1181
        %v1184 = vor.u32 %v1182, %v1183
        %v1185 = vsub.s32 4294967266, %v1180
        %v1186 = vadd.s32 %v1185, 127
        %v1187 = vshll.u32 %v1186, 23
        %v1188 = vor.u32 4788187, %v1187
        %v1189 = vand.u32 2147483647, %v1188
        %v1191 = vcvt.s32.f32 %v1184
        %v1192 = vmul.f32 %v1191, %v1189
        %v1193 = vxor.u32 %v1192, 2147483648
        %v1194 = vsel %vm1111, %v1193, %v1192
        %v1195 = vsub.s32 4, %v1171
        %v1196 = vsel %vm1111, %v1195, %v1171
        %v1197 = vsel %vm1110, %v887, %v1194
        %v1198 = vsel %vm1110, 0, %v1196
        %v1199 = vcosq.f32.pop %v1197
        %v1200 = vsinq.f32.pop %v1197
        %vm1201 = vweird.f32 %v887
        %v1202 = vadd.s32 %v1198, 3
        %v1203 = vand.u32 %v1202, 3
        %vm1204 = vcmp.lt.s32.totalorder %v1203, 2
        %vm1205 = vcmp.eq.s32.totalorder %v1203, 0
        %v1206 = vxor.u32 %v1200, 2147483648
        %v1207 = vsel %vm1205, %v1199, %v1206
        %vm1208 = vcmp.eq.s32.totalorder %v1203, 2
        %v1209 = vxor.u32 %v1199, 2147483648
        %v1210 = vsel %vm1208, %v1209, %v1200
        %v1211 = vsel %vm1204, %v1207, %v1210
        %v1212 = vsel %vm1201, nan, %v1211
        %v1213 = vand.u32 2147483647, %v888
        %vm1214 = vcmp.le.f32.partialorder %v1213, 0.7853982
        %vm1215 = vcmp.lt.s32.totalorder %v888, 0
        %v1216 = vand.u32 %v888, 2139095040
        %v1217 = vshrl.u32 %v1216, 23
        %v1218 = vsub.s32 %v1217, 127
        %v1219 = vand.u32 2147483647, %v888
        %v1220 = vand.u32 %v1219, 8388607
        %v1221 = vor.u32 %v1220, 8388608
        %v1222 = vsub.s32 0, %v1221
        %v1223 = vadd.s32 %v1218, 1
        %vm1224 = vcmp.gt.s32.totalorder %v1223, 0
        %v1225 = vsel %vm1224, %v1223, 0
        %v1226 = vshrl.u32 %v1225, 5
        %v1227 = vand.u32 %v1225, 31
        %v1228 = vsub.s32 32, %v1227
        %v1229 = vshrl.u32 683565275, %v1228
        %v1230 = vshll.u32 683565275, %v1227
        %v1231 = vshrl.u32 2475754826, %v1228
        %v1232 = vor.u32 %v1230, %v1231
        %v1233 = vshll.u32 2475754826, %v1227
        %v1234 = vshrl.u32 2131351028, %v1228
        %v1235 = vor.u32 %v1233, %v1234
        %v1236 = vshll.u32 2131351028, %v1227
        %v1237 = vshrl.u32 2102212464, %v1228
        %v1238 = vor.u32 %v1236, %v1237
        %v1239 = vshll.u32 2102212464, %v1227
        %v1240 = vshrl.u32 920167782, %v1228
        %v1241 = vor.u32 %v1239, %v1240
        %v1242 = vshll.u32 920167782, %v1227
        %v1243 = vshrl.u32 1326507024, %v1228
        %v1244 = vor.u32 %v1242, %v1243
        %vm1245 = vcmp.lt.s32.totalorder %v1226, 1
        %vm1246 = vcmp.lt.s32.totalorder %v1226, 2
        %vm1247 = vcmp.lt.s32.totalorder %v1226, 3
        %vm1248 = vcmp.lt.s32.totalorder %v1226, 4
        %v1249 = vsel %vm1245, %v1229, %v1232
        %v1250 = vsel %vm1248, %v1238, 2102212464
        %v1251 = vsel %vm1247, %v1235, %v1250
        %v1252 = vsel %vm1246, %v1249, %v1251
        %v1253 = vsel %vm1245, %v1232, %v1235
        %v1254 = vsel %vm1248, %v1241, 920167782
        %v1255 = vsel %vm1247, %v1238, %v1254
        %v1256 = vsel %vm1246, %v1253, %v1255
        %v1257 = vsel %vm1245, %v1235, %v1238
        %v1258 = vsel %vm1248, %v1244, 1326507024
        %v1259 = vsel %vm1247, %v1241, %v1258
        %v1260 = vsel %vm1246, %v1257, %v1259
        %v1261 = vshll.u32 %v1221, 8
        %v1262 = vmul.u32.u64.compose %v1261, %v1260
        %v1263 = vextract.low.u32 %v1262
        %v1264 = vextract.high.u32 %v1262
        %v1265 = vmul.u32.u64.compose %v1261, %v1256
        %v1266 = vextract.low.u32 %v1265
        %v1267 = vextract.high.u32 %v1265
        %v1268 = vmul.u32 %v1261, %v1252
        %v1269 = vadd.s32 %v1264, %v1266
        %vm1270 = vc.u32 %v1264, %v1266
        %v1271 = vadd.s32 %v1267, 1
        %v1272 = vsel %vm1270, %v1271, %v1267
        %v1273 = vadd.s32 %v1268, %v1272
        %v1274 = vadd.s32 %v1273, 536870912
        %v1275 = vshrl.u32 %v1274, 30
        %v1276 = vshll.u32 %v1275, 30
        %v1277 = vsub.s32 %v1273, %v1276
        %vm1278 = vcmp.lt.s32.totalorder %v1277, 0
        %v1279 = vsub.s32 0, %v1277
        %v1280 = vsel %vm1278, %v1279, %v1277
        %v1281 = vclz %v1280
        %v1282 = vsub.s32 %v1281, 2
        %vm1283 = vcmp.gt.s32.totalorder 0, %v1282
        %v1284 = vsel %vm1283, 0, %v1282
        %v1285 = vsub.s32 32, %v1284
        %v1286 = vshll.u32 %v1277, %v1284
        %v1287 = vshrl.u32 %v1269, %v1285
        %v1288 = vor.u32 %v1286, %v1287
        %v1289 = vsub.s32 4294967266, %v1284
        %v1290 = vadd.s32 %v1289, 127
        %v1291 = vshll.u32 %v1290, 23
        %v1292 = vor.u32 4788187, %v1291
        %v1293 = vand.u32 2147483647, %v1292
        %v1295 = vcvt.s32.f32 %v1288
        %v1296 = vmul.f32 %v1295, %v1293
        %v1297 = vxor.u32 %v1296, 2147483648
        %v1298 = vsel %vm1215, %v1297, %v1296
        %v1299 = vsub.s32 4, %v1275
        %v1300 = vsel %vm1215, %v1299, %v1275
        %v1301 = vsel %vm1214, %v888, %v1298
        %v1302 = vsel %vm1214, 0, %v1300
        %v1303 = vcosq.f32.pop %v1301
        %v1304 = vsinq.f32.pop %v1301
        %vm1305 = vweird.f32 %v888
        %v1306 = vadd.s32 %v1302, 3
        %v1307 = vand.u32 %v1306, 3
        %vm1308 = vcmp.lt.s32.totalorder %v1307, 2
        %vm1309 = vcmp.eq.s32.totalorder %v1307, 0
        %v1310 = vxor.u32 %v1304, 2147483648
        %v1311 = vsel %vm1309, %v1303, %v1310
        %vm1312 = vcmp.eq.s32.totalorder %v1307, 2
        %v1313 = vxor.u32 %v1303, 2147483648
        %v1314 = vsel %vm1312, %v1313, %v1304
        %v1315 = vsel %vm1308, %v1311, %v1314
        %v1316 = vsel %vm1305, nan, %v1315
        %v1317 = vand.u32 2147483647, %v889
        %vm1318 = vcmp.le.f32.partialorder %v1317, 0.7853982
        %vm1319 = vcmp.lt.s32.totalorder %v889, 0
        %v1320 = vand.u32 %v889, 2139095040
        %v1321 = vshrl.u32 %v1320, 23
        %v1322 = vsub.s32 %v1321, 127
        %v1323 = vand.u32 2147483647, %v889
        %v1324 = vand.u32 %v1323, 8388607
        %v1325 = vor.u32 %v1324, 8388608
        %v1326 = vsub.s32 0, %v1325
        %v1327 = vadd.s32 %v1322, 1
        %vm1328 = vcmp.gt.s32.totalorder %v1327, 0
        %v1329 = vsel %vm1328, %v1327, 0
        %v1330 = vshrl.u32 %v1329, 5
        %v1331 = vand.u32 %v1329, 31
        %v1332 = vsub.s32 32, %v1331
        %v1333 = vshrl.u32 683565275, %v1332
        %v1334 = vshll.u32 683565275, %v1331
        %v1335 = vshrl.u32 2475754826, %v1332
        %v1336 = vor.u32 %v1334, %v1335
        %v1337 = vshll.u32 2475754826, %v1331
        %v1338 = vshrl.u32 2131351028, %v1332
        %v1339 = vor.u32 %v1337, %v1338
        %v1340 = vshll.u32 2131351028, %v1331
        %v1341 = vshrl.u32 2102212464, %v1332
        %v1342 = vor.u32 %v1340, %v1341
        %v1343 = vshll.u32 2102212464, %v1331
        %v1344 = vshrl.u32 920167782, %v1332
        %v1345 = vor.u32 %v1343, %v1344
        %v1346 = vshll.u32 920167782, %v1331
        %v1347 = vshrl.u32 1326507024, %v1332
        %v1348 = vor.u32 %v1346, %v1347
        %vm1349 = vcmp.lt.s32.totalorder %v1330, 1
        %vm1350 = vcmp.lt.s32.totalorder %v1330, 2
        %vm1351 = vcmp.lt.s32.totalorder %v1330, 3
        %vm1352 = vcmp.lt.s32.totalorder %v1330, 4
        %v1353 = vsel %vm1349, %v1333, %v1336
        %v1354 = vsel %vm1352, %v1342, 2102212464
        %v1355 = vsel %vm1351, %v1339, %v1354
        %v1356 = vsel %vm1350, %v1353, %v1355
        %v1357 = vsel %vm1349, %v1336, %v1339
        %v1358 = vsel %vm1352, %v1345, 920167782
        %v1359 = vsel %vm1351, %v1342, %v1358
        %v1360 = vsel %vm1350, %v1357, %v1359
        %v1361 = vsel %vm1349, %v1339, %v1342
        %v1362 = vsel %vm1352, %v1348, 1326507024
        %v1363 = vsel %vm1351, %v1345, %v1362
        %v1364 = vsel %vm1350, %v1361, %v1363
        %v1365 = vshll.u32 %v1325, 8
        %v1366 = vmul.u32.u64.compose %v1365, %v1364
        %v1367 = vextract.low.u32 %v1366
        %v1368 = vextract.high.u32 %v1366
        %v1369 = vmul.u32.u64.compose %v1365, %v1360
        %v1370 = vextract.low.u32 %v1369
        %v1371 = vextract.high.u32 %v1369
        %v1372 = vmul.u32 %v1365, %v1356
        %v1373 = vadd.s32 %v1368, %v1370
        %vm1374 = vc.u32 %v1368, %v1370
        %v1375 = vadd.s32 %v1371, 1
        %v1376 = vsel %vm1374, %v1375, %v1371
        %v1377 = vadd.s32 %v1372, %v1376
        %v1378 = vadd.s32 %v1377, 536870912
        %v1379 = vshrl.u32 %v1378, 30
        %v1380 = vshll.u32 %v1379, 30
        %v1381 = vsub.s32 %v1377, %v1380
        %vm1382 = vcmp.lt.s32.totalorder %v1381, 0
        %v1383 = vsub.s32 0, %v1381
        %v1384 = vsel %vm1382, %v1383, %v1381
        %v1385 = vclz %v1384
        %v1386 = vsub.s32 %v1385, 2
        %vm1387 = vcmp.gt.s32.totalorder 0, %v1386
        %v1388 = vsel %vm1387, 0, %v1386
        %v1389 = vsub.s32 32, %v1388
        %v1390 = vshll.u32 %v1381, %v1388
        %v1391 = vshrl.u32 %v1373, %v1389
        %v1392 = vor.u32 %v1390, %v1391
        %v1393 = vsub.s32 4294967266, %v1388
        %v1394 = vadd.s32 %v1393, 127
        %v1395 = vshll.u32 %v1394, 23
        %v1396 = vor.u32 4788187, %v1395
        %v1397 = vand.u32 2147483647, %v1396
        %v1399 = vcvt.s32.f32 %v1392
        %v1400 = vmul.f32 %v1399, %v1397
        %v1401 = vxor.u32 %v1400, 2147483648
        %v1402 = vsel %vm1319, %v1401, %v1400
        %v1403 = vsub.s32 4, %v1379
        %v1404 = vsel %vm1319, %v1403, %v1379
        %v1405 = vsel %vm1318, %v889, %v1402
        %v1406 = vsel %vm1318, 0, %v1404
        %v1407 = vcosq.f32.pop %v1405
        %v1408 = vsinq.f32.pop %v1405
        %vm1409 = vweird.f32 %v889
        %v1410 = vadd.s32 %v1406, 3
        %v1411 = vand.u32 %v1410, 3
        %vm1412 = vcmp.lt.s32.totalorder %v1411, 2
        %vm1413 = vcmp.eq.s32.totalorder %v1411, 0
        %v1414 = vxor.u32 %v1408, 2147483648
        %v1415 = vsel %vm1413, %v1407, %v1414
        %vm1416 = vcmp.eq.s32.totalorder %v1411, 2
        %v1417 = vxor.u32 %v1407, 2147483648
        %v1418 = vsel %vm1416, %v1417, %v1408
        %v1419 = vsel %vm1412, %v1415, %v1418
        %v1420 = vsel %vm1409, nan, %v1419
        %v1421 = vand.u32 2147483647, %v890
        %vm1422 = vcmp.le.f32.partialorder %v1421, 0.7853982
        %vm1423 = vcmp.lt.s32.totalorder %v890, 0
        %v1424 = vand.u32 %v890, 2139095040
        %v1425 = vshrl.u32 %v1424, 23
        %v1426 = vsub.s32 %v1425, 127
        %v1427 = vand.u32 2147483647, %v890
        %v1428 = vand.u32 %v1427, 8388607
        %v1429 = vor.u32 %v1428, 8388608
        %v1430 = vsub.s32 0, %v1429
        %v1431 = vadd.s32 %v1426, 1
        %vm1432 = vcmp.gt.s32.totalorder %v1431, 0
        %v1433 = vsel %vm1432, %v1431, 0
        %v1434 = vshrl.u32 %v1433, 5
        %v1435 = vand.u32 %v1433, 31
        %v1436 = vsub.s32 32, %v1435
        %v1437 = vshrl.u32 683565275, %v1436
        %v1438 = vshll.u32 683565275, %v1435
        %v1439 = vshrl.u32 2475754826, %v1436
        %v1440 = vor.u32 %v1438, %v1439
        %v1441 = vshll.u32 2475754826, %v1435
        %v1442 = vshrl.u32 2131351028, %v1436
        %v1443 = vor.u32 %v1441, %v1442
        %v1444 = vshll.u32 2131351028, %v1435
        %v1445 = vshrl.u32 2102212464, %v1436
        %v1446 = vor.u32 %v1444, %v1445
        %v1447 = vshll.u32 2102212464, %v1435
        %v1448 = vshrl.u32 920167782, %v1436
        %v1449 = vor.u32 %v1447, %v1448
        %v1450 = vshll.u32 920167782, %v1435
        %v1451 = vshrl.u32 1326507024, %v1436
        %v1452 = vor.u32 %v1450, %v1451
        %vm1453 = vcmp.lt.s32.totalorder %v1434, 1
        %vm1454 = vcmp.lt.s32.totalorder %v1434, 2
        %vm1455 = vcmp.lt.s32.totalorder %v1434, 3
        %vm1456 = vcmp.lt.s32.totalorder %v1434, 4
        %v1457 = vsel %vm1453, %v1437, %v1440
        %v1458 = vsel %vm1456, %v1446, 2102212464
        %v1459 = vsel %vm1455, %v1443, %v1458
        %v1460 = vsel %vm1454, %v1457, %v1459
        %v1461 = vsel %vm1453, %v1440, %v1443
        %v1462 = vsel %vm1456, %v1449, 920167782
        %v1463 = vsel %vm1455, %v1446, %v1462
        %v1464 = vsel %vm1454, %v1461, %v1463
        %v1465 = vsel %vm1453, %v1443, %v1446
        %v1466 = vsel %vm1456, %v1452, 1326507024
        %v1467 = vsel %vm1455, %v1449, %v1466
        %v1468 = vsel %vm1454, %v1465, %v1467
        %v1469 = vshll.u32 %v1429, 8
        %v1470 = vmul.u32.u64.compose %v1469, %v1468
        %v1471 = vextract.low.u32 %v1470
        %v1472 = vextract.high.u32 %v1470
        %v1473 = vmul.u32.u64.compose %v1469, %v1464
        %v1474 = vextract.low.u32 %v1473
        %v1475 = vextract.high.u32 %v1473
        %v1476 = vmul.u32 %v1469, %v1460
        %v1477 = vadd.s32 %v1472, %v1474
        %vm1478 = vc.u32 %v1472, %v1474
        %v1479 = vadd.s32 %v1475, 1
        %v1480 = vsel %vm1478, %v1479, %v1475
        %v1481 = vadd.s32 %v1476, %v1480
        %v1482 = vadd.s32 %v1481, 536870912
        %v1483 = vshrl.u32 %v1482, 30
        %v1484 = vshll.u32 %v1483, 30
        %v1485 = vsub.s32 %v1481, %v1484
        %vm1486 = vcmp.lt.s32.totalorder %v1485, 0
        %v1487 = vsub.s32 0, %v1485
        %v1488 = vsel %vm1486, %v1487, %v1485
        %v1489 = vclz %v1488
        %v1490 = vsub.s32 %v1489, 2
        %vm1491 = vcmp.gt.s32.totalorder 0, %v1490
        %v1492 = vsel %vm1491, 0, %v1490
        %v1493 = vsub.s32 32, %v1492
        %v1494 = vshll.u32 %v1485, %v1492
        %v1495 = vshrl.u32 %v1477, %v1493
        %v1496 = vor.u32 %v1494, %v1495
        %v1497 = vsub.s32 4294967266, %v1492
        %v1498 = vadd.s32 %v1497, 127
        %v1499 = vshll.u32 %v1498, 23
        %v1500 = vor.u32 4788187, %v1499
        %v1501 = vand.u32 2147483647, %v1500
        %v1503 = vcvt.s32.f32 %v1496
        %v1504 = vmul.f32 %v1503, %v1501
        %v1505 = vxor.u32 %v1504, 2147483648
        %v1506 = vsel %vm1423, %v1505, %v1504
        %v1507 = vsub.s32 4, %v1483
        %v1508 = vsel %vm1423, %v1507, %v1483
        %v1509 = vsel %vm1422, %v890, %v1506
        %v1510 = vsel %vm1422, 0, %v1508
        %v1511 = vcosq.f32.pop %v1509
        %v1512 = vsinq.f32.pop %v1509
        %vm1513 = vweird.f32 %v890
        %v1514 = vadd.s32 %v1510, 3
        %v1515 = vand.u32 %v1514, 3
        %vm1516 = vcmp.lt.s32.totalorder %v1515, 2
        %vm1517 = vcmp.eq.s32.totalorder %v1515, 0
        %v1518 = vxor.u32 %v1512, 2147483648
        %v1519 = vsel %vm1517, %v1511, %v1518
        %vm1520 = vcmp.eq.s32.totalorder %v1515, 2
        %v1521 = vxor.u32 %v1511, 2147483648
        %v1522 = vsel %vm1520, %v1521, %v1512
        %v1523 = vsel %vm1516, %v1519, %v1522
        %v1524 = vsel %vm1513, nan, %v1523
        %v1525 = vand.u32 2147483647, %v891
        %vm1526 = vcmp.le.f32.partialorder %v1525, 0.7853982
        %vm1527 = vcmp.lt.s32.totalorder %v891, 0
        %v1528 = vand.u32 %v891, 2139095040
        %v1529 = vshrl.u32 %v1528, 23
        %v1530 = vsub.s32 %v1529, 127
        %v1531 = vand.u32 2147483647, %v891
        %v1532 = vand.u32 %v1531, 8388607
        %v1533 = vor.u32 %v1532, 8388608
        %v1534 = vsub.s32 0, %v1533
        %v1535 = vadd.s32 %v1530, 1
        %vm1536 = vcmp.gt.s32.totalorder %v1535, 0
        %v1537 = vsel %vm1536, %v1535, 0
        %v1538 = vshrl.u32 %v1537, 5
        %v1539 = vand.u32 %v1537, 31
        %v1540 = vsub.s32 32, %v1539
        %v1541 = vshrl.u32 683565275, %v1540
        %v1542 = vshll.u32 683565275, %v1539
        %v1543 = vshrl.u32 2475754826, %v1540
        %v1544 = vor.u32 %v1542, %v1543
        %v1545 = vshll.u32 2475754826, %v1539
        %v1546 = vshrl.u32 2131351028, %v1540
        %v1547 = vor.u32 %v1545, %v1546
        %v1548 = vshll.u32 2131351028, %v1539
        %v1549 = vshrl.u32 2102212464, %v1540
        %v1550 = vor.u32 %v1548, %v1549
        %v1551 = vshll.u32 2102212464, %v1539
        %v1552 = vshrl.u32 920167782, %v1540
        %v1553 = vor.u32 %v1551, %v1552
        %v1554 = vshll.u32 920167782, %v1539
        %v1555 = vshrl.u32 1326507024, %v1540
        %v1556 = vor.u32 %v1554, %v1555
        %vm1557 = vcmp.lt.s32.totalorder %v1538, 1
        %vm1558 = vcmp.lt.s32.totalorder %v1538, 2
        %vm1559 = vcmp.lt.s32.totalorder %v1538, 3
        %vm1560 = vcmp.lt.s32.totalorder %v1538, 4
        %v1561 = vsel %vm1557, %v1541, %v1544
        %v1562 = vsel %vm1560, %v1550, 2102212464
        %v1563 = vsel %vm1559, %v1547, %v1562
        %v1564 = vsel %vm1558, %v1561, %v1563
        %v1565 = vsel %vm1557, %v1544, %v1547
        %v1566 = vsel %vm1560, %v1553, 920167782
        %v1567 = vsel %vm1559, %v1550, %v1566
        %v1568 = vsel %vm1558, %v1565, %v1567
        %v1569 = vsel %vm1557, %v1547, %v1550
        %v1570 = vsel %vm1560, %v1556, 1326507024
        %v1571 = vsel %vm1559, %v1553, %v1570
        %v1572 = vsel %vm1558, %v1569, %v1571
        %v1573 = vshll.u32 %v1533, 8
        %v1574 = vmul.u32.u64.compose %v1573, %v1572
        %v1575 = vextract.low.u32 %v1574
        %v1576 = vextract.high.u32 %v1574
        %v1577 = vmul.u32.u64.compose %v1573, %v1568
        %v1578 = vextract.low.u32 %v1577
        %v1579 = vextract.high.u32 %v1577
        %v1580 = vmul.u32 %v1573, %v1564
        %v1581 = vadd.s32 %v1576, %v1578
        %vm1582 = vc.u32 %v1576, %v1578
        %v1583 = vadd.s32 %v1579, 1
        %v1584 = vsel %vm1582, %v1583, %v1579
        %v1585 = vadd.s32 %v1580, %v1584
        %v1586 = vadd.s32 %v1585, 536870912
        %v1587 = vshrl.u32 %v1586, 30
        %v1588 = vshll.u32 %v1587, 30
        %v1589 = vsub.s32 %v1585, %v1588
        %vm1590 = vcmp.lt.s32.totalorder %v1589, 0
        %v1591 = vsub.s32 0, %v1589
        %v1592 = vsel %vm1590, %v1591, %v1589
        %v1593 = vclz %v1592
        %v1594 = vsub.s32 %v1593, 2
        %vm1595 = vcmp.gt.s32.totalorder 0, %v1594
        %v1596 = vsel %vm1595, 0, %v1594
        %v1597 = vsub.s32 32, %v1596
        %v1598 = vshll.u32 %v1589, %v1596
        %v1599 = vshrl.u32 %v1581, %v1597
        %v1600 = vor.u32 %v1598, %v1599
        %v1601 = vsub.s32 4294967266, %v1596
        %v1602 = vadd.s32 %v1601, 127
        %v1603 = vshll.u32 %v1602, 23
        %v1604 = vor.u32 4788187, %v1603
        %v1605 = vand.u32 2147483647, %v1604
        %v1607 = vcvt.s32.f32 %v1600
        %v1608 = vmul.f32 %v1607, %v1605
        %v1609 = vxor.u32 %v1608, 2147483648
        %v1610 = vsel %vm1527, %v1609, %v1608
        %v1611 = vsub.s32 4, %v1587
        %v1612 = vsel %vm1527, %v1611, %v1587
        %v1613 = vsel %vm1526, %v891, %v1610
        %v1614 = vsel %vm1526, 0, %v1612
        %v1615 = vcosq.f32.pop %v1613
        %v1616 = vsinq.f32.pop %v1613
        %vm1617 = vweird.f32 %v891
        %v1618 = vadd.s32 %v1614, 3
        %v1619 = vand.u32 %v1618, 3
        %vm1620 = vcmp.lt.s32.totalorder %v1619, 2
        %vm1621 = vcmp.eq.s32.totalorder %v1619, 0
        %v1622 = vxor.u32 %v1616, 2147483648
        %v1623 = vsel %vm1621, %v1615, %v1622
        %vm1624 = vcmp.eq.s32.totalorder %v1619, 2
        %v1625 = vxor.u32 %v1615, 2147483648
        %v1626 = vsel %vm1624, %v1625, %v1616
        %v1627 = vsel %vm1620, %v1623, %v1626
        %v1628 = vsel %vm1617, nan, %v1627
        %v1629 = vand.u32 2147483647, %v892
        %vm1630 = vcmp.le.f32.partialorder %v1629, 0.7853982
        %vm1631 = vcmp.lt.s32.totalorder %v892, 0
        %v1632 = vand.u32 %v892, 2139095040
        %v1633 = vshrl.u32 %v1632, 23
        %v1634 = vsub.s32 %v1633, 127
        %v1635 = vand.u32 2147483647, %v892
        %v1636 = vand.u32 %v1635, 8388607
        %v1637 = vor.u32 %v1636, 8388608
        %v1638 = vsub.s32 0, %v1637
        %v1639 = vadd.s32 %v1634, 1
        %vm1640 = vcmp.gt.s32.totalorder %v1639, 0
        %v1641 = vsel %vm1640, %v1639, 0
        %v1642 = vshrl.u32 %v1641, 5
        %v1643 = vand.u32 %v1641, 31
        %v1644 = vsub.s32 32, %v1643
        %v1645 = vshrl.u32 683565275, %v1644
        %v1646 = vshll.u32 683565275, %v1643
        %v1647 = vshrl.u32 2475754826, %v1644
        %v1648 = vor.u32 %v1646, %v1647
        %v1649 = vshll.u32 2475754826, %v1643
        %v1650 = vshrl.u32 2131351028, %v1644
        %v1651 = vor.u32 %v1649, %v1650
        %v1652 = vshll.u32 2131351028, %v1643
        %v1653 = vshrl.u32 2102212464, %v1644
        %v1654 = vor.u32 %v1652, %v1653
        %v1655 = vshll.u32 2102212464, %v1643
        %v1656 = vshrl.u32 920167782, %v1644
        %v1657 = vor.u32 %v1655, %v1656
        %v1658 = vshll.u32 920167782, %v1643
        %v1659 = vshrl.u32 1326507024, %v1644
        %v1660 = vor.u32 %v1658, %v1659
        %vm1661 = vcmp.lt.s32.totalorder %v1642, 1
        %vm1662 = vcmp.lt.s32.totalorder %v1642, 2
        %vm1663 = vcmp.lt.s32.totalorder %v1642, 3
        %vm1664 = vcmp.lt.s32.totalorder %v1642, 4
        %v1665 = vsel %vm1661, %v1645, %v1648
        %v1666 = vsel %vm1664, %v1654, 2102212464
        %v1667 = vsel %vm1663, %v1651, %v1666
        %v1668 = vsel %vm1662, %v1665, %v1667
        %v1669 = vsel %vm1661, %v1648, %v1651
        %v1670 = vsel %vm1664, %v1657, 920167782
        %v1671 = vsel %vm1663, %v1654, %v1670
        %v1672 = vsel %vm1662, %v1669, %v1671
        %v1673 = vsel %vm1661, %v1651, %v1654
        %v1674 = vsel %vm1664, %v1660, 1326507024
        %v1675 = vsel %vm1663, %v1657, %v1674
        %v1676 = vsel %vm1662, %v1673, %v1675
        %v1677 = vshll.u32 %v1637, 8
        %v1678 = vmul.u32.u64.compose %v1677, %v1676
        %v1679 = vextract.low.u32 %v1678
        %v1680 = vextract.high.u32 %v1678
        %v1681 = vmul.u32.u64.compose %v1677, %v1672
        %v1682 = vextract.low.u32 %v1681
        %v1683 = vextract.high.u32 %v1681
        %v1684 = vmul.u32 %v1677, %v1668
        %v1685 = vadd.s32 %v1680, %v1682
        %vm1686 = vc.u32 %v1680, %v1682
        %v1687 = vadd.s32 %v1683, 1
        %v1688 = vsel %vm1686, %v1687, %v1683
        %v1689 = vadd.s32 %v1684, %v1688
        %v1690 = vadd.s32 %v1689, 536870912
        %v1691 = vshrl.u32 %v1690, 30
        %v1692 = vshll.u32 %v1691, 30
        %v1693 = vsub.s32 %v1689, %v1692
        %vm1694 = vcmp.lt.s32.totalorder %v1693, 0
        %v1695 = vsub.s32 0, %v1693
        %v1696 = vsel %vm1694, %v1695, %v1693
        %v1697 = vclz %v1696
        %v1698 = vsub.s32 %v1697, 2
        %vm1699 = vcmp.gt.s32.totalorder 0, %v1698
        %v1700 = vsel %vm1699, 0, %v1698
        %v1701 = vsub.s32 32, %v1700
        %v1702 = vshll.u32 %v1693, %v1700
        %v1703 = vshrl.u32 %v1685, %v1701
        %v1704 = vor.u32 %v1702, %v1703
        %v1705 = vsub.s32 4294967266, %v1700
        %v1706 = vadd.s32 %v1705, 127
        %v1707 = vshll.u32 %v1706, 23
        %v1708 = vor.u32 4788187, %v1707
        %v1709 = vand.u32 2147483647, %v1708
        %v1711 = vcvt.s32.f32 %v1704
        %v1712 = vmul.f32 %v1711, %v1709
        %v1713 = vxor.u32 %v1712, 2147483648
        %v1714 = vsel %vm1631, %v1713, %v1712
        %v1715 = vsub.s32 4, %v1691
        %v1716 = vsel %vm1631, %v1715, %v1691
        %v1717 = vsel %vm1630, %v892, %v1714
        %v1718 = vsel %vm1630, 0, %v1716
        %v1719 = vcosq.f32.pop %v1717
        %v1720 = vsinq.f32.pop %v1717
        %vm1721 = vweird.f32 %v892
        %v1722 = vadd.s32 %v1718, 3
        %v1723 = vand.u32 %v1722, 3
        %vm1724 = vcmp.lt.s32.totalorder %v1723, 2
        %vm1725 = vcmp.eq.s32.totalorder %v1723, 0
        %v1726 = vxor.u32 %v1720, 2147483648
        %v1727 = vsel %vm1725, %v1719, %v1726
        %vm1728 = vcmp.eq.s32.totalorder %v1723, 2
        %v1729 = vxor.u32 %v1719, 2147483648
        %v1730 = vsel %vm1728, %v1729, %v1720
        %v1731 = vsel %vm1724, %v1727, %v1730
        %v1732 = vsel %vm1721, nan, %v1731
        %v1733 = vand.u32 2147483647, %v893
        %vm1734 = vcmp.le.f32.partialorder %v1733, 0.7853982
        %vm1735 = vcmp.lt.s32.totalorder %v893, 0
        %v1736 = vand.u32 %v893, 2139095040
        %v1737 = vshrl.u32 %v1736, 23
        %v1738 = vsub.s32 %v1737, 127
        %v1739 = vand.u32 2147483647, %v893
        %v1740 = vand.u32 %v1739, 8388607
        %v1741 = vor.u32 %v1740, 8388608
        %v1742 = vsub.s32 0, %v1741
        %v1743 = vadd.s32 %v1738, 1
        %vm1744 = vcmp.gt.s32.totalorder %v1743, 0
        %v1745 = vsel %vm1744, %v1743, 0
        %v1746 = vshrl.u32 %v1745, 5
        %v1747 = vand.u32 %v1745, 31
        %v1748 = vsub.s32 32, %v1747
        %v1749 = vshrl.u32 683565275, %v1748
        %v1750 = vshll.u32 683565275, %v1747
        %v1751 = vshrl.u32 2475754826, %v1748
        %v1752 = vor.u32 %v1750, %v1751
        %v1753 = vshll.u32 2475754826, %v1747
        %v1754 = vshrl.u32 2131351028, %v1748
        %v1755 = vor.u32 %v1753, %v1754
        %v1756 = vshll.u32 2131351028, %v1747
        %v1757 = vshrl.u32 2102212464, %v1748
        %v1758 = vor.u32 %v1756, %v1757
        %v1759 = vshll.u32 2102212464, %v1747
        %v1760 = vshrl.u32 920167782, %v1748
        %v1761 = vor.u32 %v1759, %v1760
        %v1762 = vshll.u32 920167782, %v1747
        %v1763 = vshrl.u32 1326507024, %v1748
        %v1764 = vor.u32 %v1762, %v1763
        %vm1765 = vcmp.lt.s32.totalorder %v1746, 1
        %vm1766 = vcmp.lt.s32.totalorder %v1746, 2
        %vm1767 = vcmp.lt.s32.totalorder %v1746, 3
        %vm1768 = vcmp.lt.s32.totalorder %v1746, 4
        %v1769 = vsel %vm1765, %v1749, %v1752
        %v1770 = vsel %vm1768, %v1758, 2102212464
        %v1771 = vsel %vm1767, %v1755, %v1770
        %v1772 = vsel %vm1766, %v1769, %v1771
        %v1773 = vsel %vm1765, %v1752, %v1755
        %v1774 = vsel %vm1768, %v1761, 920167782
        %v1775 = vsel %vm1767, %v1758, %v1774
        %v1776 = vsel %vm1766, %v1773, %v1775
        %v1777 = vsel %vm1765, %v1755, %v1758
        %v1778 = vsel %vm1768, %v1764, 1326507024
        %v1779 = vsel %vm1767, %v1761, %v1778
        %v1780 = vsel %vm1766, %v1777, %v1779
        %v1781 = vshll.u32 %v1741, 8
        %v1782 = vmul.u32.u64.compose %v1781, %v1780
        %v1783 = vextract.low.u32 %v1782
        %v1784 = vextract.high.u32 %v1782
        %v1785 = vmul.u32.u64.compose %v1781, %v1776
        %v1786 = vextract.low.u32 %v1785
        %v1787 = vextract.high.u32 %v1785
        %v1788 = vmul.u32 %v1781, %v1772
        %v1789 = vadd.s32 %v1784, %v1786
        %vm1790 = vc.u32 %v1784, %v1786
        %v1791 = vadd.s32 %v1787, 1
        %v1792 = vsel %vm1790, %v1791, %v1787
        %v1793 = vadd.s32 %v1788, %v1792
        %v1794 = vadd.s32 %v1793, 536870912
        %v1795 = vshrl.u32 %v1794, 30
        %v1796 = vshll.u32 %v1795, 30
        %v1797 = vsub.s32 %v1793, %v1796
        %vm1798 = vcmp.lt.s32.totalorder %v1797, 0
        %v1799 = vsub.s32 0, %v1797
        %v1800 = vsel %vm1798, %v1799, %v1797
        %v1801 = vclz %v1800
        %v1802 = vsub.s32 %v1801, 2
        %vm1803 = vcmp.gt.s32.totalorder 0, %v1802
        %v1804 = vsel %vm1803, 0, %v1802
        %v1805 = vsub.s32 32, %v1804
        %v1806 = vshll.u32 %v1797, %v1804
        %v1807 = vshrl.u32 %v1789, %v1805
        %v1808 = vor.u32 %v1806, %v1807
        %v1809 = vsub.s32 4294967266, %v1804
        %v1810 = vadd.s32 %v1809, 127
        %v1811 = vshll.u32 %v1810, 23
        %v1812 = vor.u32 4788187, %v1811
        %v1813 = vand.u32 2147483647, %v1812
        %v1815 = vcvt.s32.f32 %v1808
        %v1816 = vmul.f32 %v1815, %v1813
        %v1817 = vxor.u32 %v1816, 2147483648
        %v1818 = vsel %vm1735, %v1817, %v1816
        %v1819 = vsub.s32 4, %v1795
        %v1820 = vsel %vm1735, %v1819, %v1795
        %v1821 = vsel %vm1734, %v893, %v1818
        %v1822 = vsel %vm1734, 0, %v1820
        %v1823 = vcosq.f32.pop %v1821
        %v1824 = vsinq.f32.pop %v1821
        %vm1825 = vweird.f32 %v893
        %v1826 = vadd.s32 %v1822, 3
        %v1827 = vand.u32 %v1826, 3
        %vm1828 = vcmp.lt.s32.totalorder %v1827, 2
        %vm1829 = vcmp.eq.s32.totalorder %v1827, 0
        %v1830 = vxor.u32 %v1824, 2147483648
        %v1831 = vsel %vm1829, %v1823, %v1830
        %vm1832 = vcmp.eq.s32.totalorder %v1827, 2
        %v1833 = vxor.u32 %v1823, 2147483648
        %v1834 = vsel %vm1832, %v1833, %v1824
        %v1835 = vsel %vm1828, %v1831, %v1834
        %v1836 = vsel %vm1825, nan, %v1835
        %v1837 = vand.u32 2147483647, %v894
        %vm1838 = vcmp.le.f32.partialorder %v1837, 0.7853982
        %vm1839 = vcmp.lt.s32.totalorder %v894, 0
        %v1840 = vand.u32 %v894, 2139095040
        %v1841 = vshrl.u32 %v1840, 23
        %v1842 = vsub.s32 %v1841, 127
        %v1843 = vand.u32 2147483647, %v894
        %v1844 = vand.u32 %v1843, 8388607
        %v1845 = vor.u32 %v1844, 8388608
        %v1846 = vsub.s32 0, %v1845
        %v1847 = vadd.s32 %v1842, 1
        %vm1848 = vcmp.gt.s32.totalorder %v1847, 0
        %v1849 = vsel %vm1848, %v1847, 0
        %v1850 = vshrl.u32 %v1849, 5
        %v1851 = vand.u32 %v1849, 31
        %v1852 = vsub.s32 32, %v1851
        %v1853 = vshrl.u32 683565275, %v1852
        %v1854 = vshll.u32 683565275, %v1851
        %v1855 = vshrl.u32 2475754826, %v1852
        %v1856 = vor.u32 %v1854, %v1855
        %v1857 = vshll.u32 2475754826, %v1851
        %v1858 = vshrl.u32 2131351028, %v1852
        %v1859 = vor.u32 %v1857, %v1858
        %v1860 = vshll.u32 2131351028, %v1851
        %v1861 = vshrl.u32 2102212464, %v1852
        %v1862 = vor.u32 %v1860, %v1861
        %v1863 = vshll.u32 2102212464, %v1851
        %v1864 = vshrl.u32 920167782, %v1852
        %v1865 = vor.u32 %v1863, %v1864
        %v1866 = vshll.u32 920167782, %v1851
        %v1867 = vshrl.u32 1326507024, %v1852
        %v1868 = vor.u32 %v1866, %v1867
        %vm1869 = vcmp.lt.s32.totalorder %v1850, 1
        %vm1870 = vcmp.lt.s32.totalorder %v1850, 2
        %vm1871 = vcmp.lt.s32.totalorder %v1850, 3
        %vm1872 = vcmp.lt.s32.totalorder %v1850, 4
        %v1873 = vsel %vm1869, %v1853, %v1856
        %v1874 = vsel %vm1872, %v1862, 2102212464
        %v1875 = vsel %vm1871, %v1859, %v1874
        %v1876 = vsel %vm1870, %v1873, %v1875
        %v1877 = vsel %vm1869, %v1856, %v1859
        %v1878 = vsel %vm1872, %v1865, 920167782
        %v1879 = vsel %vm1871, %v1862, %v1878
        %v1880 = vsel %vm1870, %v1877, %v1879
        %v1881 = vsel %vm1869, %v1859, %v1862
        %v1882 = vsel %vm1872, %v1868, 1326507024
        %v1883 = vsel %vm1871, %v1865, %v1882
        %v1884 = vsel %vm1870, %v1881, %v1883
        %v1885 = vshll.u32 %v1845, 8
        %v1886 = vmul.u32.u64.compose %v1885, %v1884
        %v1887 = vextract.low.u32 %v1886
        %v1888 = vextract.high.u32 %v1886
        %v1889 = vmul.u32.u64.compose %v1885, %v1880
        %v1890 = vextract.low.u32 %v1889
        %v1891 = vextract.high.u32 %v1889
        %v1892 = vmul.u32 %v1885, %v1876
        %v1893 = vadd.s32 %v1888, %v1890
        %vm1894 = vc.u32 %v1888, %v1890
        %v1895 = vadd.s32 %v1891, 1
        %v1896 = vsel %vm1894, %v1895, %v1891
        %v1897 = vadd.s32 %v1892, %v1896
        %v1898 = vadd.s32 %v1897, 536870912
        %v1899 = vshrl.u32 %v1898, 30
        %v1900 = vshll.u32 %v1899, 30
        %v1901 = vsub.s32 %v1897, %v1900
        %vm1902 = vcmp.lt.s32.totalorder %v1901, 0
        %v1903 = vsub.s32 0, %v1901
        %v1904 = vsel %vm1902, %v1903, %v1901
        %v1905 = vclz %v1904
        %v1906 = vsub.s32 %v1905, 2
        %vm1907 = vcmp.gt.s32.totalorder 0, %v1906
        %v1908 = vsel %vm1907, 0, %v1906
        %v1909 = vsub.s32 32, %v1908
        %v1910 = vshll.u32 %v1901, %v1908
        %v1911 = vshrl.u32 %v1893, %v1909
        %v1912 = vor.u32 %v1910, %v1911
        %v1913 = vsub.s32 4294967266, %v1908
        %v1914 = vadd.s32 %v1913, 127
        %v1915 = vshll.u32 %v1914, 23
        %v1916 = vor.u32 4788187, %v1915
        %v1917 = vand.u32 2147483647, %v1916
        %v1919 = vcvt.s32.f32 %v1912
        %v1920 = vmul.f32 %v1919, %v1917
        %v1921 = vxor.u32 %v1920, 2147483648
        %v1922 = vsel %vm1839, %v1921, %v1920
        %v1923 = vsub.s32 4, %v1899
        %v1924 = vsel %vm1839, %v1923, %v1899
        %v1925 = vsel %vm1838, %v894, %v1922
        %v1926 = vsel %vm1838, 0, %v1924
        %v1927 = vcosq.f32.pop %v1925
        %v1928 = vsinq.f32.pop %v1925
        %vm1929 = vweird.f32 %v894
        %v1930 = vadd.s32 %v1926, 3
        %v1931 = vand.u32 %v1930, 3
        %vm1932 = vcmp.lt.s32.totalorder %v1931, 2
        %vm1933 = vcmp.eq.s32.totalorder %v1931, 0
        %v1934 = vxor.u32 %v1928, 2147483648
        %v1935 = vsel %vm1933, %v1927, %v1934
        %vm1936 = vcmp.eq.s32.totalorder %v1931, 2
        %v1937 = vxor.u32 %v1927, 2147483648
        %v1938 = vsel %vm1936, %v1937, %v1928
        %v1939 = vsel %vm1932, %v1935, %v1938
        %v1940 = vsel %vm1929, nan, %v1939
        %v1941 = vand.u32 2147483647, %v895
        %vm1942 = vcmp.le.f32.partialorder %v1941, 0.7853982
        %vm1943 = vcmp.lt.s32.totalorder %v895, 0
        %v1944 = vand.u32 %v895, 2139095040
        %v1945 = vshrl.u32 %v1944, 23
        %v1946 = vsub.s32 %v1945, 127
        %v1947 = vand.u32 2147483647, %v895
        %v1948 = vand.u32 %v1947, 8388607
        %v1949 = vor.u32 %v1948, 8388608
        %v1950 = vsub.s32 0, %v1949
        %v1951 = vadd.s32 %v1946, 1
        %vm1952 = vcmp.gt.s32.totalorder %v1951, 0
        %v1953 = vsel %vm1952, %v1951, 0
        %v1954 = vshrl.u32 %v1953, 5
        %v1955 = vand.u32 %v1953, 31
        %v1956 = vsub.s32 32, %v1955
        %v1957 = vshrl.u32 683565275, %v1956
        %v1958 = vshll.u32 683565275, %v1955
        %v1959 = vshrl.u32 2475754826, %v1956
        %v1960 = vor.u32 %v1958, %v1959
        %v1961 = vshll.u32 2475754826, %v1955
        %v1962 = vshrl.u32 2131351028, %v1956
        %v1963 = vor.u32 %v1961, %v1962
        %v1964 = vshll.u32 2131351028, %v1955
        %v1965 = vshrl.u32 2102212464, %v1956
        %v1966 = vor.u32 %v1964, %v1965
        %v1967 = vshll.u32 2102212464, %v1955
        %v1968 = vshrl.u32 920167782, %v1956
        %v1969 = vor.u32 %v1967, %v1968
        %v1970 = vshll.u32 920167782, %v1955
        %v1971 = vshrl.u32 1326507024, %v1956
        %v1972 = vor.u32 %v1970, %v1971
        %vm1973 = vcmp.lt.s32.totalorder %v1954, 1
        %vm1974 = vcmp.lt.s32.totalorder %v1954, 2
        %vm1975 = vcmp.lt.s32.totalorder %v1954, 3
        %vm1976 = vcmp.lt.s32.totalorder %v1954, 4
        %v1977 = vsel %vm1973, %v1957, %v1960
        %v1978 = vsel %vm1976, %v1966, 2102212464
        %v1979 = vsel %vm1975, %v1963, %v1978
        %v1980 = vsel %vm1974, %v1977, %v1979
        %v1981 = vsel %vm1973, %v1960, %v1963
        %v1982 = vsel %vm1976, %v1969, 920167782
        %v1983 = vsel %vm1975, %v1966, %v1982
        %v1984 = vsel %vm1974, %v1981, %v1983
        %v1985 = vsel %vm1973, %v1963, %v1966
        %v1986 = vsel %vm1976, %v1972, 1326507024
        %v1987 = vsel %vm1975, %v1969, %v1986
        %v1988 = vsel %vm1974, %v1985, %v1987
        %v1989 = vshll.u32 %v1949, 8
        %v1990 = vmul.u32.u64.compose %v1989, %v1988
        %v1991 = vextract.low.u32 %v1990
        %v1992 = vextract.high.u32 %v1990
        %v1993 = vmul.u32.u64.compose %v1989, %v1984
        %v1994 = vextract.low.u32 %v1993
        %v1995 = vextract.high.u32 %v1993
        %v1996 = vmul.u32 %v1989, %v1980
        %v1997 = vadd.s32 %v1992, %v1994
        %vm1998 = vc.u32 %v1992, %v1994
        %v1999 = vadd.s32 %v1995, 1
        %v2000 = vsel %vm1998, %v1999, %v1995
        %v2001 = vadd.s32 %v1996, %v2000
        %v2002 = vadd.s32 %v2001, 536870912
        %v2003 = vshrl.u32 %v2002, 30
        %v2004 = vshll.u32 %v2003, 30
        %v2005 = vsub.s32 %v2001, %v2004
        %vm2006 = vcmp.lt.s32.totalorder %v2005, 0
        %v2007 = vsub.s32 0, %v2005
        %v2008 = vsel %vm2006, %v2007, %v2005
        %v2009 = vclz %v2008
        %v2010 = vsub.s32 %v2009, 2
        %vm2011 = vcmp.gt.s32.totalorder 0, %v2010
        %v2012 = vsel %vm2011, 0, %v2010
        %v2013 = vsub.s32 32, %v2012
        %v2014 = vshll.u32 %v2005, %v2012
        %v2015 = vshrl.u32 %v1997, %v2013
        %v2016 = vor.u32 %v2014, %v2015
        %v2017 = vsub.s32 4294967266, %v2012
        %v2018 = vadd.s32 %v2017, 127
        %v2019 = vshll.u32 %v2018, 23
        %v2020 = vor.u32 4788187, %v2019
        %v2021 = vand.u32 2147483647, %v2020
        %v2023 = vcvt.s32.f32 %v2016
        %v2024 = vmul.f32 %v2023, %v2021
        %v2025 = vxor.u32 %v2024, 2147483648
        %v2026 = vsel %vm1943, %v2025, %v2024
        %v2027 = vsub.s32 4, %v2003
        %v2028 = vsel %vm1943, %v2027, %v2003
        %v2029 = vsel %vm1942, %v895, %v2026
        %v2030 = vsel %vm1942, 0, %v2028
        %v2031 = vcosq.f32.pop %v2029
        %v2032 = vsinq.f32.pop %v2029
        %vm2033 = vweird.f32 %v895
        %v2034 = vadd.s32 %v2030, 3
        %v2035 = vand.u32 %v2034, 3
        %vm2036 = vcmp.lt.s32.totalorder %v2035, 2
        %vm2037 = vcmp.eq.s32.totalorder %v2035, 0
        %v2038 = vxor.u32 %v2032, 2147483648
        %v2039 = vsel %vm2037, %v2031, %v2038
        %vm2040 = vcmp.eq.s32.totalorder %v2035, 2
        %v2041 = vxor.u32 %v2031, 2147483648
        %v2042 = vsel %vm2040, %v2041, %v2032
        %v2043 = vsel %vm2036, %v2039, %v2042
        %v2044 = vsel %vm2033, nan, %v2043
        %v2045 = vand.u32 2147483647, %v896
        %vm2046 = vcmp.le.f32.partialorder %v2045, 0.7853982
        %vm2047 = vcmp.lt.s32.totalorder %v896, 0
        %v2048 = vand.u32 %v896, 2139095040
        %v2049 = vshrl.u32 %v2048, 23
        %v2050 = vsub.s32 %v2049, 127
        %v2051 = vand.u32 2147483647, %v896
        %v2052 = vand.u32 %v2051, 8388607
        %v2053 = vor.u32 %v2052, 8388608
        %v2054 = vsub.s32 0, %v2053
        %v2055 = vadd.s32 %v2050, 1
        %vm2056 = vcmp.gt.s32.totalorder %v2055, 0
        %v2057 = vsel %vm2056, %v2055, 0
        %v2058 = vshrl.u32 %v2057, 5
        %v2059 = vand.u32 %v2057, 31
        %v2060 = vsub.s32 32, %v2059
        %v2061 = vshrl.u32 683565275, %v2060
        %v2062 = vshll.u32 683565275, %v2059
        %v2063 = vshrl.u32 2475754826, %v2060
        %v2064 = vor.u32 %v2062, %v2063
        %v2065 = vshll.u32 2475754826, %v2059
        %v2066 = vshrl.u32 2131351028, %v2060
        %v2067 = vor.u32 %v2065, %v2066
        %v2068 = vshll.u32 2131351028, %v2059
        %v2069 = vshrl.u32 2102212464, %v2060
        %v2070 = vor.u32 %v2068, %v2069
        %v2071 = vshll.u32 2102212464, %v2059
        %v2072 = vshrl.u32 920167782, %v2060
        %v2073 = vor.u32 %v2071, %v2072
        %v2074 = vshll.u32 920167782, %v2059
        %v2075 = vshrl.u32 1326507024, %v2060
        %v2076 = vor.u32 %v2074, %v2075
        %vm2077 = vcmp.lt.s32.totalorder %v2058, 1
        %vm2078 = vcmp.lt.s32.totalorder %v2058, 2
        %vm2079 = vcmp.lt.s32.totalorder %v2058, 3
        %vm2080 = vcmp.lt.s32.totalorder %v2058, 4
        %v2081 = vsel %vm2077, %v2061, %v2064
        %v2082 = vsel %vm2080, %v2070, 2102212464
        %v2083 = vsel %vm2079, %v2067, %v2082
        %v2084 = vsel %vm2078, %v2081, %v2083
        %v2085 = vsel %vm2077, %v2064, %v2067
        %v2086 = vsel %vm2080, %v2073, 920167782
        %v2087 = vsel %vm2079, %v2070, %v2086
        %v2088 = vsel %vm2078, %v2085, %v2087
        %v2089 = vsel %vm2077, %v2067, %v2070
        %v2090 = vsel %vm2080, %v2076, 1326507024
        %v2091 = vsel %vm2079, %v2073, %v2090
        %v2092 = vsel %vm2078, %v2089, %v2091
        %v2093 = vshll.u32 %v2053, 8
        %v2094 = vmul.u32.u64.compose %v2093, %v2092
        %v2095 = vextract.low.u32 %v2094
        %v2096 = vextract.high.u32 %v2094
        %v2097 = vmul.u32.u64.compose %v2093, %v2088
        %v2098 = vextract.low.u32 %v2097
        %v2099 = vextract.high.u32 %v2097
        %v2100 = vmul.u32 %v2093, %v2084
        %v2101 = vadd.s32 %v2096, %v2098
        %vm2102 = vc.u32 %v2096, %v2098
        %v2103 = vadd.s32 %v2099, 1
        %v2104 = vsel %vm2102, %v2103, %v2099
        %v2105 = vadd.s32 %v2100, %v2104
        %v2106 = vadd.s32 %v2105, 536870912
        %v2107 = vshrl.u32 %v2106, 30
        %v2108 = vshll.u32 %v2107, 30
        %v2109 = vsub.s32 %v2105, %v2108
        %vm2110 = vcmp.lt.s32.totalorder %v2109, 0
        %v2111 = vsub.s32 0, %v2109
        %v2112 = vsel %vm2110, %v2111, %v2109
        %v2113 = vclz %v2112
        %v2114 = vsub.s32 %v2113, 2
        %vm2115 = vcmp.gt.s32.totalorder 0, %v2114
        %v2116 = vsel %vm2115, 0, %v2114
        %v2117 = vsub.s32 32, %v2116
        %v2118 = vshll.u32 %v2109, %v2116
        %v2119 = vshrl.u32 %v2101, %v2117
        %v2120 = vor.u32 %v2118, %v2119
        %v2121 = vsub.s32 4294967266, %v2116
        %v2122 = vadd.s32 %v2121, 127
        %v2123 = vshll.u32 %v2122, 23
        %v2124 = vor.u32 4788187, %v2123
        %v2125 = vand.u32 2147483647, %v2124
        %v2127 = vcvt.s32.f32 %v2120
        %v2128 = vmul.f32 %v2127, %v2125
        %v2129 = vxor.u32 %v2128, 2147483648
        %v2130 = vsel %vm2047, %v2129, %v2128
        %v2131 = vsub.s32 4, %v2107
        %v2132 = vsel %vm2047, %v2131, %v2107
        %v2133 = vsel %vm2046, %v896, %v2130
        %v2134 = vsel %vm2046, 0, %v2132
        %v2135 = vcosq.f32.pop %v2133
        %v2136 = vsinq.f32.pop %v2133
        %vm2137 = vweird.f32 %v896
        %v2138 = vadd.s32 %v2134, 3
        %v2139 = vand.u32 %v2138, 3
        %vm2140 = vcmp.lt.s32.totalorder %v2139, 2
        %vm2141 = vcmp.eq.s32.totalorder %v2139, 0
        %v2142 = vxor.u32 %v2136, 2147483648
        %v2143 = vsel %vm2141, %v2135, %v2142
        %vm2144 = vcmp.eq.s32.totalorder %v2139, 2
        %v2145 = vxor.u32 %v2135, 2147483648
        %v2146 = vsel %vm2144, %v2145, %v2136
        %v2147 = vsel %vm2140, %v2143, %v2146
        %v2148 = vsel %vm2137, nan, %v2147
        %v2149 = vand.u32 2147483647, %v897
        %vm2150 = vcmp.le.f32.partialorder %v2149, 0.7853982
        %vm2151 = vcmp.lt.s32.totalorder %v897, 0
        %v2152 = vand.u32 %v897, 2139095040
        %v2153 = vshrl.u32 %v2152, 23
        %v2154 = vsub.s32 %v2153, 127
        %v2155 = vand.u32 2147483647, %v897
        %v2156 = vand.u32 %v2155, 8388607
        %v2157 = vor.u32 %v2156, 8388608
        %v2158 = vsub.s32 0, %v2157
        %v2159 = vadd.s32 %v2154, 1
        %vm2160 = vcmp.gt.s32.totalorder %v2159, 0
        %v2161 = vsel %vm2160, %v2159, 0
        %v2162 = vshrl.u32 %v2161, 5
        %v2163 = vand.u32 %v2161, 31
        %v2164 = vsub.s32 32, %v2163
        %v2165 = vshrl.u32 683565275, %v2164
        %v2166 = vshll.u32 683565275, %v2163
        %v2167 = vshrl.u32 2475754826, %v2164
        %v2168 = vor.u32 %v2166, %v2167
        %v2169 = vshll.u32 2475754826, %v2163
        %v2170 = vshrl.u32 2131351028, %v2164
        %v2171 = vor.u32 %v2169, %v2170
        %v2172 = vshll.u32 2131351028, %v2163
        %v2173 = vshrl.u32 2102212464, %v2164
        %v2174 = vor.u32 %v2172, %v2173
        %v2175 = vshll.u32 2102212464, %v2163
        %v2176 = vshrl.u32 920167782, %v2164
        %v2177 = vor.u32 %v2175, %v2176
        %v2178 = vshll.u32 920167782, %v2163
        %v2179 = vshrl.u32 1326507024, %v2164
        %v2180 = vor.u32 %v2178, %v2179
        %vm2181 = vcmp.lt.s32.totalorder %v2162, 1
        %vm2182 = vcmp.lt.s32.totalorder %v2162, 2
        %vm2183 = vcmp.lt.s32.totalorder %v2162, 3
        %vm2184 = vcmp.lt.s32.totalorder %v2162, 4
        %v2185 = vsel %vm2181, %v2165, %v2168
        %v2186 = vsel %vm2184, %v2174, 2102212464
        %v2187 = vsel %vm2183, %v2171, %v2186
        %v2188 = vsel %vm2182, %v2185, %v2187
        %v2189 = vsel %vm2181, %v2168, %v2171
        %v2190 = vsel %vm2184, %v2177, 920167782
        %v2191 = vsel %vm2183, %v2174, %v2190
        %v2192 = vsel %vm2182, %v2189, %v2191
        %v2193 = vsel %vm2181, %v2171, %v2174
        %v2194 = vsel %vm2184, %v2180, 1326507024
        %v2195 = vsel %vm2183, %v2177, %v2194
        %v2196 = vsel %vm2182, %v2193, %v2195
        %v2197 = vshll.u32 %v2157, 8
        %v2198 = vmul.u32.u64.compose %v2197, %v2196
        %v2199 = vextract.low.u32 %v2198
        %v2200 = vextract.high.u32 %v2198
        %v2201 = vmul.u32.u64.compose %v2197, %v2192
        %v2202 = vextract.low.u32 %v2201
        %v2203 = vextract.high.u32 %v2201
        %v2204 = vmul.u32 %v2197, %v2188
        %v2205 = vadd.s32 %v2200, %v2202
        %vm2206 = vc.u32 %v2200, %v2202
        %v2207 = vadd.s32 %v2203, 1
        %v2208 = vsel %vm2206, %v2207, %v2203
        %v2209 = vadd.s32 %v2204, %v2208
        %v2210 = vadd.s32 %v2209, 536870912
        %v2211 = vshrl.u32 %v2210, 30
        %v2212 = vshll.u32 %v2211, 30
        %v2213 = vsub.s32 %v2209, %v2212
        %vm2214 = vcmp.lt.s32.totalorder %v2213, 0
        %v2215 = vsub.s32 0, %v2213
        %v2216 = vsel %vm2214, %v2215, %v2213
        %v2217 = vclz %v2216
        %v2218 = vsub.s32 %v2217, 2
        %vm2219 = vcmp.gt.s32.totalorder 0, %v2218
        %v2220 = vsel %vm2219, 0, %v2218
        %v2221 = vsub.s32 32, %v2220
        %v2222 = vshll.u32 %v2213, %v2220
        %v2223 = vshrl.u32 %v2205, %v2221
        %v2224 = vor.u32 %v2222, %v2223
        %v2225 = vsub.s32 4294967266, %v2220
        %v2226 = vadd.s32 %v2225, 127
        %v2227 = vshll.u32 %v2226, 23
        %v2228 = vor.u32 4788187, %v2227
        %v2229 = vand.u32 2147483647, %v2228
        %v2231 = vcvt.s32.f32 %v2224
        %v2232 = vmul.f32 %v2231, %v2229
        %v2233 = vxor.u32 %v2232, 2147483648
        %v2234 = vsel %vm2151, %v2233, %v2232
        %v2235 = vsub.s32 4, %v2211
        %v2236 = vsel %vm2151, %v2235, %v2211
        %v2237 = vsel %vm2150, %v897, %v2234
        %v2238 = vsel %vm2150, 0, %v2236
        %v2239 = vcosq.f32.pop %v2237
        %v2240 = vsinq.f32.pop %v2237
        %vm2241 = vweird.f32 %v897
        %v2242 = vadd.s32 %v2238, 3
        %v2243 = vand.u32 %v2242, 3
        %vm2244 = vcmp.lt.s32.totalorder %v2243, 2
        %vm2245 = vcmp.eq.s32.totalorder %v2243, 0
        %v2246 = vxor.u32 %v2240, 2147483648
        %v2247 = vsel %vm2245, %v2239, %v2246
        %vm2248 = vcmp.eq.s32.totalorder %v2243, 2
        %v2249 = vxor.u32 %v2239, 2147483648
        %v2250 = vsel %vm2248, %v2249, %v2240
        %v2251 = vsel %vm2244, %v2247, %v2250
        %v2252 = vsel %vm2241, nan, %v2251
        %v2253 = vand.u32 2147483647, %v898
        %vm2254 = vcmp.le.f32.partialorder %v2253, 0.7853982
        %vm2255 = vcmp.lt.s32.totalorder %v898, 0
        %v2256 = vand.u32 %v898, 2139095040
        %v2257 = vshrl.u32 %v2256, 23
        %v2258 = vsub.s32 %v2257, 127
        %v2259 = vand.u32 2147483647, %v898
        %v2260 = vand.u32 %v2259, 8388607
        %v2261 = vor.u32 %v2260, 8388608
        %v2262 = vsub.s32 0, %v2261
        %v2263 = vadd.s32 %v2258, 1
        %vm2264 = vcmp.gt.s32.totalorder %v2263, 0
        %v2265 = vsel %vm2264, %v2263, 0
        %v2266 = vshrl.u32 %v2265, 5
        %v2267 = vand.u32 %v2265, 31
        %v2268 = vsub.s32 32, %v2267
        %v2269 = vshrl.u32 683565275, %v2268
        %v2270 = vshll.u32 683565275, %v2267
        %v2271 = vshrl.u32 2475754826, %v2268
        %v2272 = vor.u32 %v2270, %v2271
        %v2273 = vshll.u32 2475754826, %v2267
        %v2274 = vshrl.u32 2131351028, %v2268
        %v2275 = vor.u32 %v2273, %v2274
        %v2276 = vshll.u32 2131351028, %v2267
        %v2277 = vshrl.u32 2102212464, %v2268
        %v2278 = vor.u32 %v2276, %v2277
        %v2279 = vshll.u32 2102212464, %v2267
        %v2280 = vshrl.u32 920167782, %v2268
        %v2281 = vor.u32 %v2279, %v2280
        %v2282 = vshll.u32 920167782, %v2267
        %v2283 = vshrl.u32 1326507024, %v2268
        %v2284 = vor.u32 %v2282, %v2283
        %vm2285 = vcmp.lt.s32.totalorder %v2266, 1
        %vm2286 = vcmp.lt.s32.totalorder %v2266, 2
        %vm2287 = vcmp.lt.s32.totalorder %v2266, 3
        %vm2288 = vcmp.lt.s32.totalorder %v2266, 4
        %v2289 = vsel %vm2285, %v2269, %v2272
        %v2290 = vsel %vm2288, %v2278, 2102212464
        %v2291 = vsel %vm2287, %v2275, %v2290
        %v2292 = vsel %vm2286, %v2289, %v2291
        %v2293 = vsel %vm2285, %v2272, %v2275
        %v2294 = vsel %vm2288, %v2281, 920167782
        %v2295 = vsel %vm2287, %v2278, %v2294
        %v2296 = vsel %vm2286, %v2293, %v2295
        %v2297 = vsel %vm2285, %v2275, %v2278
        %v2298 = vsel %vm2288, %v2284, 1326507024
        %v2299 = vsel %vm2287, %v2281, %v2298
        %v2300 = vsel %vm2286, %v2297, %v2299
        %v2301 = vshll.u32 %v2261, 8
        %v2302 = vmul.u32.u64.compose %v2301, %v2300
        %v2303 = vextract.low.u32 %v2302
        %v2304 = vextract.high.u32 %v2302
        %v2305 = vmul.u32.u64.compose %v2301, %v2296
        %v2306 = vextract.low.u32 %v2305
        %v2307 = vextract.high.u32 %v2305
        %v2308 = vmul.u32 %v2301, %v2292
        %v2309 = vadd.s32 %v2304, %v2306
        %vm2310 = vc.u32 %v2304, %v2306
        %v2311 = vadd.s32 %v2307, 1
        %v2312 = vsel %vm2310, %v2311, %v2307
        %v2313 = vadd.s32 %v2308, %v2312
        %v2314 = vadd.s32 %v2313, 536870912
        %v2315 = vshrl.u32 %v2314, 30
        %v2316 = vshll.u32 %v2315, 30
        %v2317 = vsub.s32 %v2313, %v2316
        %vm2318 = vcmp.lt.s32.totalorder %v2317, 0
        %v2319 = vsub.s32 0, %v2317
        %v2320 = vsel %vm2318, %v2319, %v2317
        %v2321 = vclz %v2320
        %v2322 = vsub.s32 %v2321, 2
        %vm2323 = vcmp.gt.s32.totalorder 0, %v2322
        %v2324 = vsel %vm2323, 0, %v2322
        %v2325 = vsub.s32 32, %v2324
        %v2326 = vshll.u32 %v2317, %v2324
        %v2327 = vshrl.u32 %v2309, %v2325
        %v2328 = vor.u32 %v2326, %v2327
        %v2329 = vsub.s32 4294967266, %v2324
        %v2330 = vadd.s32 %v2329, 127
        %v2331 = vshll.u32 %v2330, 23
        %v2332 = vor.u32 4788187, %v2331
        %v2333 = vand.u32 2147483647, %v2332
        %v2335 = vcvt.s32.f32 %v2328
        %v2336 = vmul.f32 %v2335, %v2333
        %v2337 = vxor.u32 %v2336, 2147483648
        %v2338 = vsel %vm2255, %v2337, %v2336
        %v2339 = vsub.s32 4, %v2315
        %v2340 = vsel %vm2255, %v2339, %v2315
        %v2341 = vsel %vm2254, %v898, %v2338
        %v2342 = vsel %vm2254, 0, %v2340
        %v2343 = vcosq.f32.pop %v2341
        %v2344 = vsinq.f32.pop %v2341
        %vm2345 = vweird.f32 %v898
        %v2346 = vadd.s32 %v2342, 3
        %v2347 = vand.u32 %v2346, 3
        %vm2348 = vcmp.lt.s32.totalorder %v2347, 2
        %vm2349 = vcmp.eq.s32.totalorder %v2347, 0
        %v2350 = vxor.u32 %v2344, 2147483648
        %v2351 = vsel %vm2349, %v2343, %v2350
        %vm2352 = vcmp.eq.s32.totalorder %v2347, 2
        %v2353 = vxor.u32 %v2343, 2147483648
        %v2354 = vsel %vm2352, %v2353, %v2344
        %v2355 = vsel %vm2348, %v2351, %v2354
        %v2356 = vsel %vm2345, nan, %v2355
        %v2357 = vand.u32 2147483647, %v899
        %vm2358 = vcmp.le.f32.partialorder %v2357, 0.7853982
        %vm2359 = vcmp.lt.s32.totalorder %v899, 0
        %v2360 = vand.u32 %v899, 2139095040
        %v2361 = vshrl.u32 %v2360, 23
        %v2362 = vsub.s32 %v2361, 127
        %v2363 = vand.u32 2147483647, %v899
        %v2364 = vand.u32 %v2363, 8388607
        %v2365 = vor.u32 %v2364, 8388608
        %v2366 = vsub.s32 0, %v2365
        %v2367 = vadd.s32 %v2362, 1
        %vm2368 = vcmp.gt.s32.totalorder %v2367, 0
        %v2369 = vsel %vm2368, %v2367, 0
        %v2370 = vshrl.u32 %v2369, 5
        %v2371 = vand.u32 %v2369, 31
        %v2372 = vsub.s32 32, %v2371
        %v2373 = vshrl.u32 683565275, %v2372
        %v2374 = vshll.u32 683565275, %v2371
        %v2375 = vshrl.u32 2475754826, %v2372
        %v2376 = vor.u32 %v2374, %v2375
        %v2377 = vshll.u32 2475754826, %v2371
        %v2378 = vshrl.u32 2131351028, %v2372
        %v2379 = vor.u32 %v2377, %v2378
        %v2380 = vshll.u32 2131351028, %v2371
        %v2381 = vshrl.u32 2102212464, %v2372
        %v2382 = vor.u32 %v2380, %v2381
        %v2383 = vshll.u32 2102212464, %v2371
        %v2384 = vshrl.u32 920167782, %v2372
        %v2385 = vor.u32 %v2383, %v2384
        %v2386 = vshll.u32 920167782, %v2371
        %v2387 = vshrl.u32 1326507024, %v2372
        %v2388 = vor.u32 %v2386, %v2387
        %vm2389 = vcmp.lt.s32.totalorder %v2370, 1
        %vm2390 = vcmp.lt.s32.totalorder %v2370, 2
        %vm2391 = vcmp.lt.s32.totalorder %v2370, 3
        %vm2392 = vcmp.lt.s32.totalorder %v2370, 4
        %v2393 = vsel %vm2389, %v2373, %v2376
        %v2394 = vsel %vm2392, %v2382, 2102212464
        %v2395 = vsel %vm2391, %v2379, %v2394
        %v2396 = vsel %vm2390, %v2393, %v2395
        %v2397 = vsel %vm2389, %v2376, %v2379
        %v2398 = vsel %vm2392, %v2385, 920167782
        %v2399 = vsel %vm2391, %v2382, %v2398
        %v2400 = vsel %vm2390, %v2397, %v2399
        %v2401 = vsel %vm2389, %v2379, %v2382
        %v2402 = vsel %vm2392, %v2388, 1326507024
        %v2403 = vsel %vm2391, %v2385, %v2402
        %v2404 = vsel %vm2390, %v2401, %v2403
        %v2405 = vshll.u32 %v2365, 8
        %v2406 = vmul.u32.u64.compose %v2405, %v2404
        %v2407 = vextract.low.u32 %v2406
        %v2408 = vextract.high.u32 %v2406
        %v2409 = vmul.u32.u64.compose %v2405, %v2400
        %v2410 = vextract.low.u32 %v2409
        %v2411 = vextract.high.u32 %v2409
        %v2412 = vmul.u32 %v2405, %v2396
        %v2413 = vadd.s32 %v2408, %v2410
        %vm2414 = vc.u32 %v2408, %v2410
        %v2415 = vadd.s32 %v2411, 1
        %v2416 = vsel %vm2414, %v2415, %v2411
        %v2417 = vadd.s32 %v2412, %v2416
        %v2418 = vadd.s32 %v2417, 536870912
        %v2419 = vshrl.u32 %v2418, 30
        %v2420 = vshll.u32 %v2419, 30
        %v2421 = vsub.s32 %v2417, %v2420
        %vm2422 = vcmp.lt.s32.totalorder %v2421, 0
        %v2423 = vsub.s32 0, %v2421
        %v2424 = vsel %vm2422, %v2423, %v2421
        %v2425 = vclz %v2424
        %v2426 = vsub.s32 %v2425, 2
        %vm2427 = vcmp.gt.s32.totalorder 0, %v2426
        %v2428 = vsel %vm2427, 0, %v2426
        %v2429 = vsub.s32 32, %v2428
        %v2430 = vshll.u32 %v2421, %v2428
        %v2431 = vshrl.u32 %v2413, %v2429
        %v2432 = vor.u32 %v2430, %v2431
        %v2433 = vsub.s32 4294967266, %v2428
        %v2434 = vadd.s32 %v2433, 127
        %v2435 = vshll.u32 %v2434, 23
        %v2436 = vor.u32 4788187, %v2435
        %v2437 = vand.u32 2147483647, %v2436
        %v2439 = vcvt.s32.f32 %v2432
        %v2440 = vmul.f32 %v2439, %v2437
        %v2441 = vxor.u32 %v2440, 2147483648
        %v2442 = vsel %vm2359, %v2441, %v2440
        %v2443 = vsub.s32 4, %v2419
        %v2444 = vsel %vm2359, %v2443, %v2419
        %v2445 = vsel %vm2358, %v899, %v2442
        %v2446 = vsel %vm2358, 0, %v2444
        %v2447 = vcosq.f32.pop %v2445
        %v2448 = vsinq.f32.pop %v2445
        %vm2449 = vweird.f32 %v899
        %v2450 = vadd.s32 %v2446, 3
        %v2451 = vand.u32 %v2450, 3
        %vm2452 = vcmp.lt.s32.totalorder %v2451, 2
        %vm2453 = vcmp.eq.s32.totalorder %v2451, 0
        %v2454 = vxor.u32 %v2448, 2147483648
        %v2455 = vsel %vm2453, %v2447, %v2454
        %vm2456 = vcmp.eq.s32.totalorder %v2451, 2
        %v2457 = vxor.u32 %v2447, 2147483648
        %v2458 = vsel %vm2456, %v2457, %v2448
        %v2459 = vsel %vm2452, %v2455, %v2458
        %v2460 = vsel %vm2449, nan, %v2459
        %v2461 = vand.u32 2147483647, %v900
        %vm2462 = vcmp.le.f32.partialorder %v2461, 0.7853982
        %vm2463 = vcmp.lt.s32.totalorder %v900, 0
        %v2464 = vand.u32 %v900, 2139095040
        %v2465 = vshrl.u32 %v2464, 23
        %v2466 = vsub.s32 %v2465, 127
        %v2467 = vand.u32 2147483647, %v900
        %v2468 = vand.u32 %v2467, 8388607
        %v2469 = vor.u32 %v2468, 8388608
        %v2470 = vsub.s32 0, %v2469
        %v2471 = vadd.s32 %v2466, 1
        %vm2472 = vcmp.gt.s32.totalorder %v2471, 0
        %v2473 = vsel %vm2472, %v2471, 0
        %v2474 = vshrl.u32 %v2473, 5
        %v2475 = vand.u32 %v2473, 31
        %v2476 = vsub.s32 32, %v2475
        %v2477 = vshrl.u32 683565275, %v2476
        %v2478 = vshll.u32 683565275, %v2475
        %v2479 = vshrl.u32 2475754826, %v2476
        %v2480 = vor.u32 %v2478, %v2479
        %v2481 = vshll.u32 2475754826, %v2475
        %v2482 = vshrl.u32 2131351028, %v2476
        %v2483 = vor.u32 %v2481, %v2482
        %v2484 = vshll.u32 2131351028, %v2475
        %v2485 = vshrl.u32 2102212464, %v2476
        %v2486 = vor.u32 %v2484, %v2485
        %v2487 = vshll.u32 2102212464, %v2475
        %v2488 = vshrl.u32 920167782, %v2476
        %v2489 = vor.u32 %v2487, %v2488
        %v2490 = vshll.u32 920167782, %v2475
        %v2491 = vshrl.u32 1326507024, %v2476
        %v2492 = vor.u32 %v2490, %v2491
        %vm2493 = vcmp.lt.s32.totalorder %v2474, 1
        %vm2494 = vcmp.lt.s32.totalorder %v2474, 2
        %vm2495 = vcmp.lt.s32.totalorder %v2474, 3
        %vm2496 = vcmp.lt.s32.totalorder %v2474, 4
        %v2497 = vsel %vm2493, %v2477, %v2480
        %v2498 = vsel %vm2496, %v2486, 2102212464
        %v2499 = vsel %vm2495, %v2483, %v2498
        %v2500 = vsel %vm2494, %v2497, %v2499
        %v2501 = vsel %vm2493, %v2480, %v2483
        %v2502 = vsel %vm2496, %v2489, 920167782
        %v2503 = vsel %vm2495, %v2486, %v2502
        %v2504 = vsel %vm2494, %v2501, %v2503
        %v2505 = vsel %vm2493, %v2483, %v2486
        %v2506 = vsel %vm2496, %v2492, 1326507024
        %v2507 = vsel %vm2495, %v2489, %v2506
        %v2508 = vsel %vm2494, %v2505, %v2507
        %v2509 = vshll.u32 %v2469, 8
        %v2510 = vmul.u32.u64.compose %v2509, %v2508
        %v2511 = vextract.low.u32 %v2510
        %v2512 = vextract.high.u32 %v2510
        %v2513 = vmul.u32.u64.compose %v2509, %v2504
        %v2514 = vextract.low.u32 %v2513
        %v2515 = vextract.high.u32 %v2513
        %v2516 = vmul.u32 %v2509, %v2500
        %v2517 = vadd.s32 %v2512, %v2514
        %vm2518 = vc.u32 %v2512, %v2514
        %v2519 = vadd.s32 %v2515, 1
        %v2520 = vsel %vm2518, %v2519, %v2515
        %v2521 = vadd.s32 %v2516, %v2520
        %v2522 = vadd.s32 %v2521, 536870912
        %v2523 = vshrl.u32 %v2522, 30
        %v2524 = vshll.u32 %v2523, 30
        %v2525 = vsub.s32 %v2521, %v2524
        %vm2526 = vcmp.lt.s32.totalorder %v2525, 0
        %v2527 = vsub.s32 0, %v2525
        %v2528 = vsel %vm2526, %v2527, %v2525
        %v2529 = vclz %v2528
        %v2530 = vsub.s32 %v2529, 2
        %vm2531 = vcmp.gt.s32.totalorder 0, %v2530
        %v2532 = vsel %vm2531, 0, %v2530
        %v2533 = vsub.s32 32, %v2532
        %v2534 = vshll.u32 %v2525, %v2532
        %v2535 = vshrl.u32 %v2517, %v2533
        %v2536 = vor.u32 %v2534, %v2535
        %v2537 = vsub.s32 4294967266, %v2532
        %v2538 = vadd.s32 %v2537, 127
        %v2539 = vshll.u32 %v2538, 23
        %v2540 = vor.u32 4788187, %v2539
        %v2541 = vand.u32 2147483647, %v2540
        %v2543 = vcvt.s32.f32 %v2536
        %v2544 = vmul.f32 %v2543, %v2541
        %v2545 = vxor.u32 %v2544, 2147483648
        %v2546 = vsel %vm2463, %v2545, %v2544
        %v2547 = vsub.s32 4, %v2523
        %v2548 = vsel %vm2463, %v2547, %v2523
        %v2549 = vsel %vm2462, %v900, %v2546
        %v2550 = vsel %vm2462, 0, %v2548
        %v2551 = vcosq.f32.pop %v2549
        %v2552 = vsinq.f32.pop %v2549
        %vm2553 = vweird.f32 %v900
        %v2554 = vadd.s32 %v2550, 3
        %v2555 = vand.u32 %v2554, 3
        %vm2556 = vcmp.lt.s32.totalorder %v2555, 2
        %vm2557 = vcmp.eq.s32.totalorder %v2555, 0
        %v2558 = vxor.u32 %v2552, 2147483648
        %v2559 = vsel %vm2557, %v2551, %v2558
        %vm2560 = vcmp.eq.s32.totalorder %v2555, 2
        %v2561 = vxor.u32 %v2551, 2147483648
        %v2562 = vsel %vm2560, %v2561, %v2552
        %v2563 = vsel %vm2556, %v2559, %v2562
        %v2564 = vsel %vm2553, nan, %v2563
        %2581 = vrot.lane.b32.xlu0 %v445, 24
        %v2582 = vpop.permute.xlu0 %2581
        %2583 = vrot.lane.b32.xlu0 %v446, 24
        %v2584 = vpop.permute.xlu0 %2583
        %2585 = vrot.lane.b32.xlu0 %v447, 24
        %v2586 = vpop.permute.xlu0 %2585
        %2587 = vrot.lane.b32.xlu0 %v448, 24
        %v2588 = vpop.permute.xlu0 %2587
        %2589 = vrot.lane.b32.xlu0 %v449, 24
        %v2590 = vpop.permute.xlu0 %2589
        %2591 = vrot.lane.b32.xlu0 %v450, 24
        %v2592 = vpop.permute.xlu0 %2591
        %2593 = vrot.lane.b32.xlu0 %v451, 24
        %v2594 = vpop.permute.xlu0 %2593
        %2595 = vrot.lane.b32.xlu0 %v452, 24
        %v2596 = vpop.permute.xlu0 %2595
        %2597 = vrot.lane.b32.xlu0 %v453, 24
        %v2598 = vpop.permute.xlu0 %2597
        %2599 = vrot.lane.b32.xlu0 %v454, 24
        %v2600 = vpop.permute.xlu0 %2599
        %2601 = vrot.lane.b32.xlu0 %v455, 24
        %v2602 = vpop.permute.xlu0 %2601
        %2603 = vrot.lane.b32.xlu0 %v456, 24
        %v2604 = vpop.permute.xlu0 %2603
        %2605 = vrot.lane.b32.xlu0 %v457, 24
        %v2606 = vpop.permute.xlu0 %2605
        %2607 = vrot.lane.b32.xlu0 %v458, 24
        %v2608 = vpop.permute.xlu0 %2607
        %2609 = vrot.lane.b32.xlu0 %v459, 24
        %v2610 = vpop.permute.xlu0 %2609
        %2611 = vrot.lane.b32.xlu0 %v460, 24
        %v2612 = vpop.permute.xlu0 %2611
        %vm2629 = vcmask 195584
        %v2630 = vsel %vm2629, %v1004, %v2582
        %v2631 = vsel %vm2629, %v1108, %v2584
        %v2632 = vsel %vm2629, %v1212, %v2586
        %v2633 = vsel %vm2629, %v1316, %v2588
        %v2634 = vsel %vm2629, %v1420, %v2590
        %v2635 = vsel %vm2629, %v1524, %v2592
        %v2636 = vsel %vm2629, %v1628, %v2594
        %v2637 = vsel %vm2629, %v1732, %v2596
        %v2638 = vsel %vm2629, %v1836, %v2598
        %v2639 = vsel %vm2629, %v1940, %v2600
        %v2640 = vsel %vm2629, %v2044, %v2602
        %v2641 = vsel %vm2629, %v2148, %v2604
        %v2642 = vsel %vm2629, %v2252, %v2606
        %v2643 = vsel %vm2629, %v2356, %v2608
        %v2644 = vsel %vm2629, %v2460, %v2610
        %v2645 = vsel %vm2629, %v2564, %v2612
        %v2646 = vlaneseq
        %v2647 = vshrl.u32 %v2646, 7
        %v2648 = vsub.s32 0, %v2647
        %v2649 = vrot.slane %v512, %v2648
        %vm2650 = vcmask 261120
        %v2652 = vsel %vm2650, %v2630, 0
        %v2655 = vsel %vm2650, %v2631, 0
        %v2658 = vsel %vm2650, %v2632, 0
        %v2661 = vsel %vm2650, %v2633, 0
        %v2664 = vsel %vm2650, %v2634, 0
        %v2667 = vsel %vm2650, %v2635, 0
        %v2670 = vsel %vm2650, %v2636, 0
        %v2673 = vsel %vm2650, %v2637, 0
        %v2676 = vsel %vm2650, %v2638, 0
        %v2679 = vsel %vm2650, %v2639, 0
        %v2682 = vsel %vm2650, %v2640, 0
        %v2685 = vsel %vm2650, %v2641, 0
        %v2688 = vsel %vm2650, %v2642, 0
        %v2691 = vsel %vm2650, %v2643, 0
        %v2694 = vsel %vm2650, %v2644, 0
        %v2697 = vsel %vm2650, %v2645, 0
        %2699 = vmatprep.subr.mxu0 0.0
        %2700 = vmatpush1.msra.mxu0 %v478
        %2701 = vmatprep.subr.mxu0 0.0
        %2702 = vmatpush1.msra.mxu0 %v479
        %2703 = vmatprep.subr.mxu0 0.0
        %2704 = vmatpush1.msra.mxu0 %v480
        %2705 = vmatprep.subr.mxu0 0.0
        %2706 = vmatpush1.msra.mxu0 %v481
        %2707 = vmatprep.subr.mxu0 0.0
        %2708 = vmatpush1.msra.mxu0 0.0
        %2709 = vmatprep.subr.mxu0 0.0
        %2710 = vmatpush1.msra.mxu0 0.0
        %2711 = vmatprep.subr.mxu0 0.0
        %2712 = vmatpush1.msra.mxu0 0.0
        %2713 = vmatprep.subr.mxu0 0.0
        %2714 = vmatpush1.msra.mxu0 0.0
        %2715 = vmatprep.subr.mxu0 0.0
        %2716 = vmatpush1.msra.mxu0 0.0
        %2717 = vmatprep.subr.mxu0 0.0
        %2718 = vmatpush1.msra.mxu0 0.0
        %2719 = vmatprep.subr.mxu0 0.0
        %2720 = vmatpush1.msra.mxu0 0.0
        %2721 = vmatprep.subr.mxu0 0.0
        %2722 = vmatpush1.msra.mxu0 0.0
        %2723 = vmatprep.subr.mxu0 0.0
        %2724 = vmatpush1.msra.mxu0 0.0
        %2725 = vmatprep.subr.mxu0 0.0
        %2726 = vmatpush1.msra.mxu0 0.0
        %2727 = vmatprep.subr.mxu0 0.0
        %2728 = vmatpush1.msra.mxu0 0.0
        %2729 = vmatprep.subr.mxu0 0.0
        %2730 = vmatpush1.msra.mxu0 0.0
        %2731 = vmatprep.subr.mxu0 0.0
        %2732 = vmatpush1.msra.mxu0 0.0
        %2733 = vmatprep.subr.mxu0 0.0
        %2734 = vmatpush1.msra.mxu0 0.0
        %2735 = vmatprep.subr.mxu0 0.0
        %2736 = vmatpush1.msra.mxu0 0.0
        %2737 = vmatprep.subr.mxu0 0.0
        %2738 = vmatpush1.msra.mxu0 0.0
        %2739 = vmatprep.subr.mxu0 0.0
        %2740 = vmatpush1.msra.mxu0 0.0
        %2741 = vmatprep.subr.mxu0 0.0
        %2742 = vmatpush1.msra.mxu0 0.0
        %2743 = vmatprep.subr.mxu0 0.0
        %2744 = vmatpush1.msra.mxu0 0.0
        %2745 = vmatprep.subr.mxu0 0.0
        %2746 = vmatpush1.msra.mxu0 0.0
        %2747 = vmatprep.subr.mxu0 0.0
        %2748 = vmatpush1.msra.mxu0 0.0
        %2749 = vmatprep.subr.mxu0 0.0
        %2750 = vmatpush1.msra.mxu0 0.0
        %2751 = vmatprep.subr.mxu0 0.0
        %2752 = vmatpush1.msra.mxu0 0.0
        %2753 = vmatprep.subr.mxu0 0.0
        %2754 = vmatpush1.msra.mxu0 0.0
        %2755 = vmatprep.subr.mxu0 0.0
        %2756 = vmatpush1.msra.mxu0 0.0
        %2757 = vmatprep.subr.mxu0 0.0
        %2758 = vmatpush1.msra.mxu0 0.0
        %2759 = vmatprep.subr.mxu0 0.0
        %2760 = vmatpush1.msra.mxu0 0.0
        %2761 = vmatprep.subr.mxu0 0.0
        %2762 = vmatpush1.msra.mxu0 0.0
        %2763 = vmatprep.mubr.f32.mxu0 0.0
        %2764 = vmatmul.mubr.f32.gmra.mrb[0].mxu0 %v2652
        %v2765 = vpop.f32.mrb[0].mxu0
        %v2766 = vadd.f32 %v2649, %v2765
        %v2767 = vpop.f32.mrb[0].mxu0
        %2768 = vmatprep.mubr.f32.mxu0 0.0
        %2769 = vmatmul.mubr.f32.gmra.mrb[0].mxu0 %v2655
        %v2770 = vpop.f32.mrb[0].mxu0
        %v2771 = vadd.f32 %v2649, %v2770
        %v2772 = vpop.f32.mrb[0].mxu0
        %2773 = vmatprep.mubr.f32.mxu0 0.0
        %2774 = vmatmul.mubr.f32.gmra.mrb[0].mxu0 %v2658
        %v2775 = vpop.f32.mrb[0].mxu0
        %v2776 = vadd.f32 %v2649, %v2775
        %v2777 = vpop.f32.mrb[0].mxu0
        %2778 = vmatprep.mubr.f32.mxu0 0.0
        %2779 = vmatmul.mubr.f32.gmra.mrb[0].mxu0 %v2661
        %v2780 = vpop.f32.mrb[0].mxu0
        %v2781 = vadd.f32 %v2649, %v2780
        %v2782 = vpop.f32.mrb[0].mxu0
        %2783 = vmatprep.mubr.f32.mxu0 0.0
        %2784 = vmatmul.mubr.f32.gmra.mrb[0].mxu0 %v2664
        %v2785 = vpop.f32.mrb[0].mxu0
        %v2786 = vadd.f32 %v2649, %v2785
        %v2787 = vpop.f32.mrb[0].mxu0
        %2788 = vmatprep.mubr.f32.mxu0 0.0
        %2789 = vmatmul.mubr.f32.gmra.mrb[0].mxu0 %v2667
        %v2790 = vpop.f32.mrb[0].mxu0
        %v2791 = vadd.f32 %v2649, %v2790
        %v2792 = vpop.f32.mrb[0].mxu0
        %2793 = vmatprep.mubr.f32.mxu0 0.0
        %2794 = vmatmul.mubr.f32.gmra.mrb[0].mxu0 %v2670
        %v2795 = vpop.f32.mrb[0].mxu0
        %v2796 = vadd.f32 %v2649, %v2795
        %v2797 = vpop.f32.mrb[0].mxu0
        %2798 = vmatprep.mubr.f32.mxu0 0.0
        %2799 = vmatmul.mubr.f32.gmra.mrb[0].mxu0 %v2673
        %v2800 = vpop.f32.mrb[0].mxu0
        %v2801 = vadd.f32 %v2649, %v2800
        %v2802 = vpop.f32.mrb[0].mxu0
        %2803 = vmatprep.mubr.f32.mxu0 0.0
        %2804 = vmatmul.mubr.f32.gmra.mrb[0].mxu0 %v2676
        %v2805 = vpop.f32.mrb[0].mxu0
        %v2806 = vadd.f32 %v2649, %v2805
        %v2807 = vpop.f32.mrb[0].mxu0
        %2808 = vmatprep.mubr.f32.mxu0 0.0
        %2809 = vmatmul.mubr.f32.gmra.mrb[0].mxu0 %v2679
        %v2810 = vpop.f32.mrb[0].mxu0
        %v2811 = vadd.f32 %v2649, %v2810
        %v2812 = vpop.f32.mrb[0].mxu0
        %2813 = vmatprep.mubr.f32.mxu0 0.0
        %2814 = vmatmul.mubr.f32.gmra.mrb[0].mxu0 %v2682
        %v2815 = vpop.f32.mrb[0].mxu0
        %v2816 = vadd.f32 %v2649, %v2815
        %v2817 = vpop.f32.mrb[0].mxu0
        %2818 = vmatprep.mubr.f32.mxu0 0.0
        %2819 = vmatmul.mubr.f32.gmra.mrb[0].mxu0 %v2685
        %v2820 = vpop.f32.mrb[0].mxu0
        %v2821 = vadd.f32 %v2649, %v2820
        %v2822 = vpop.f32.mrb[0].mxu0
        %2823 = vmatprep.mubr.f32.mxu0 0.0
        %2824 = vmatmul.mubr.f32.gmra.mrb[0].mxu0 %v2688
        %v2825 = vpop.f32.mrb[0].mxu0
        %v2826 = vadd.f32 %v2649, %v2825
        %v2827 = vpop.f32.mrb[0].mxu0
        %2828 = vmatprep.mubr.f32.mxu0 0.0
        %2829 = vmatmul.mubr.f32.gmra.mrb[0].mxu0 %v2691
        %v2830 = vpop.f32.mrb[0].mxu0
        %v2831 = vadd.f32 %v2649, %v2830
        %v2832 = vpop.f32.mrb[0].mxu0
        %2833 = vmatprep.mubr.f32.mxu0 0.0
        %2834 = vmatmul.mubr.f32.gmra.mrb[0].mxu0 %v2694
        %v2835 = vpop.f32.mrb[0].mxu0
        %v2836 = vadd.f32 %v2649, %v2835
        %v2837 = vpop.f32.mrb[0].mxu0
        %2838 = vmatprep.mubr.f32.mxu0 0.0
        %2839 = vmatmul.mubr.f32.gmra.mrb[0].mxu0 %v2697
        %v2840 = vpop.f32.mrb[0].mxu0
        %v2841 = vadd.f32 %v2649, %v2840
        %v2842 = vpop.f32.mrb[0].mxu0
        %2843 = vdwg.mxu0
        %v2844 = vmax.f32 %v2766, 0.0
        %v2845 = vmax.f32 %v2771, 0.0
        %v2846 = vmax.f32 %v2776, 0.0
        %v2847 = vmax.f32 %v2781, 0.0
        %v2848 = vmax.f32 %v2786, 0.0
        %v2849 = vmax.f32 %v2791, 0.0
        %v2850 = vmax.f32 %v2796, 0.0
        %v2851 = vmax.f32 %v2801, 0.0
        %v2852 = vmax.f32 %v2806, 0.0
        %v2853 = vmax.f32 %v2811, 0.0
        %v2854 = vmax.f32 %v2816, 0.0
        %v2855 = vmax.f32 %v2821, 0.0
        %v2856 = vmax.f32 %v2826, 0.0
        %v2857 = vmax.f32 %v2831, 0.0
        %v2858 = vmax.f32 %v2836, 0.0
        %v2859 = vmax.f32 %v2841, 0.0
        %vm2860 = vcmp.gt.f32.partialorder %v2766, 0.0
        %vm2861 = vcmp.gt.f32.partialorder %v2771, 0.0
        %vm2862 = vcmp.gt.f32.partialorder %v2776, 0.0
        %vm2863 = vcmp.gt.f32.partialorder %v2781, 0.0
        %vm2864 = vcmp.gt.f32.partialorder %v2786, 0.0
        %vm2865 = vcmp.gt.f32.partialorder %v2791, 0.0
        %vm2866 = vcmp.gt.f32.partialorder %v2796, 0.0
        %vm2867 = vcmp.gt.f32.partialorder %v2801, 0.0
        %vm2868 = vcmp.gt.f32.partialorder %v2806, 0.0
        %vm2869 = vcmp.gt.f32.partialorder %v2811, 0.0
        %vm2870 = vcmp.gt.f32.partialorder %v2816, 0.0
        %vm2871 = vcmp.gt.f32.partialorder %v2821, 0.0
        %vm2872 = vcmp.gt.f32.partialorder %v2826, 0.0
        %vm2873 = vcmp.gt.f32.partialorder %v2831, 0.0
        %vm2874 = vcmp.gt.f32.partialorder %v2836, 0.0
        %vm2875 = vcmp.gt.f32.partialorder %v2841, 0.0
        %v2876 = vsel %vm2860, 1, 0
        %v2877 = vsel %vm2861, 1, 0
        %v2878 = vsel %vm2862, 1, 0
        %v2879 = vsel %vm2863, 1, 0
        %v2880 = vsel %vm2864, 1, 0
        %v2881 = vsel %vm2865, 1, 0
        %v2882 = vsel %vm2866, 1, 0
        %v2883 = vsel %vm2867, 1, 0
        %v2884 = vsel %vm2868, 1, 0
        %v2885 = vsel %vm2869, 1, 0
        %v2886 = vsel %vm2870, 1, 0
        %v2887 = vsel %vm2871, 1, 0
        %v2888 = vsel %vm2872, 1, 0
        %v2889 = vsel %vm2873, 1, 0
        %v2890 = vsel %vm2874, 1, 0
        %v2891 = vsel %vm2875, 1, 0
        %v2892 = vcvt.s32.f32 %v2876
        %v2893 = vcvt.s32.f32 %v2877
        %v2894 = vcvt.s32.f32 %v2878
        %v2895 = vcvt.s32.f32 %v2879
        %v2896 = vcvt.s32.f32 %v2880
        %v2897 = vcvt.s32.f32 %v2881
        %v2898 = vcvt.s32.f32 %v2882
        %v2899 = vcvt.s32.f32 %v2883
        %v2900 = vcvt.s32.f32 %v2884
        %v2901 = vcvt.s32.f32 %v2885
        %v2902 = vcvt.s32.f32 %v2886
        %v2903 = vcvt.s32.f32 %v2887
        %v2904 = vcvt.s32.f32 %v2888
        %v2905 = vcvt.s32.f32 %v2889
        %v2906 = vcvt.s32.f32 %v2890
        %v2907 = vcvt.s32.f32 %v2891
        %v2908 = vlaneseq
        %v2909 = vshrl.u32 %v2908, 7
        %v2910 = vsub.s32 4, %v2909
        %v2911 = vrot.slane %v512, %v2910
        %v2912 = vmul.f32 %v2892, %v2911
        %v2913 = vmul.f32 %v2893, %v2911
        %v2914 = vmul.f32 %v2894, %v2911
        %v2915 = vmul.f32 %v2895, %v2911
        %v2916 = vmul.f32 %v2896, %v2911
        %v2917 = vmul.f32 %v2897, %v2911
        %v2918 = vmul.f32 %v2898, %v2911
        %v2919 = vmul.f32 %v2899, %v2911
        %v2920 = vmul.f32 %v2900, %v2911
        %v2921 = vmul.f32 %v2901, %v2911
        %v2922 = vmul.f32 %v2902, %v2911
        %v2923 = vmul.f32 %v2903, %v2911
        %v2924 = vmul.f32 %v2904, %v2911
        %v2925 = vmul.f32 %v2905, %v2911
        %v2926 = vmul.f32 %v2906, %v2911
        %v2927 = vmul.f32 %v2907, %v2911
        %2944 = vrot.lane.b32.xlu0 %v2912, 64
        %v2945 = vpop.permute.xlu0 %2944
        %2946 = vrot.lane.b32.xlu0 %v2913, 64
        %v2947 = vpop.permute.xlu0 %2946
        %2948 = vrot.lane.b32.xlu0 %v2914, 64
        %v2949 = vpop.permute.xlu0 %2948
        %2950 = vrot.lane.b32.xlu0 %v2915, 64
        %v2951 = vpop.permute.xlu0 %2950
        %2952 = vrot.lane.b32.xlu0 %v2916, 64
        %v2953 = vpop.permute.xlu0 %2952
        %2954 = vrot.lane.b32.xlu0 %v2917, 64
        %v2955 = vpop.permute.xlu0 %2954
        %2956 = vrot.lane.b32.xlu0 %v2918, 64
        %v2957 = vpop.permute.xlu0 %2956
        %2958 = vrot.lane.b32.xlu0 %v2919, 64
        %v2959 = vpop.permute.xlu0 %2958
        %2960 = vrot.lane.b32.xlu0 %v2920, 64
        %v2961 = vpop.permute.xlu0 %2960
        %2962 = vrot.lane.b32.xlu0 %v2921, 64
        %v2963 = vpop.permute.xlu0 %2962
        %2964 = vrot.lane.b32.xlu0 %v2922, 64
        %v2965 = vpop.permute.xlu0 %2964
        %2966 = vrot.lane.b32.xlu0 %v2923, 64
        %v2967 = vpop.permute.xlu0 %2966
        %2968 = vrot.lane.b32.xlu0 %v2924, 64
        %v2969 = vpop.permute.xlu0 %2968
        %2970 = vrot.lane.b32.xlu0 %v2925, 64
        %v2971 = vpop.permute.xlu0 %2970
        %2972 = vrot.lane.b32.xlu0 %v2926, 64
        %v2973 = vpop.permute.xlu0 %2972
        %2974 = vrot.lane.b32.xlu0 %v2927, 64
        %v2975 = vpop.permute.xlu0 %2974
        %vm2992 = vcmask 523264
        %v2993 = vsel %vm2992, %v2844, %v2945
        %v2994 = vsel %vm2992, %v2845, %v2947
        %v2995 = vsel %vm2992, %v2846, %v2949
        %v2996 = vsel %vm2992, %v2847, %v2951
        %v2997 = vsel %vm2992, %v2848, %v2953
        %v2998 = vsel %vm2992, %v2849, %v2955
        %v2999 = vsel %vm2992, %v2850, %v2957
        %v3000 = vsel %vm2992, %v2851, %v2959
        %v3001 = vsel %vm2992, %v2852, %v2961
        %v3002 = vsel %vm2992, %v2853, %v2963
        %v3003 = vsel %vm2992, %v2854, %v2965
        %v3004 = vsel %vm2992, %v2855, %v2967
        %v3005 = vsel %vm2992, %v2856, %v2969
        %v3006 = vsel %vm2992, %v2857, %v2971
        %v3007 = vsel %vm2992, %v2858, %v2973
        %v3008 = vsel %vm2992, %v2859, %v2975
        %v3009 = vpack.c.bf16 %v2994, %v2993
        %v3010 = vpack.c.bf16 %v2996, %v2995
        %v3011 = vpack.c.bf16 %v2998, %v2997
        %v3012 = vpack.c.bf16 %v3000, %v2999
        %v3013 = vpack.c.bf16 %v3002, %v3001
        %v3014 = vpack.c.bf16 %v3004, %v3003
        %v3015 = vpack.c.bf16 %v3006, %v3005
        %v3016 = vpack.c.bf16 %v3008, %v3007
        %v3017 = vlaneseq
        %v3018 = vshrl.u32 %v3017, 7
        %v3019 = vsub.s32 1, %v3018
        %v3020 = vrot.slane %v512, %v3019
        %v3037 = vunpack.c.l.b16 %v482
        %v3038 = vunpack.c.l.b16 %v483
        %v3039 = vunpack.c.l.b16 %v484
        %v3040 = vunpack.c.l.b16 %v485
        %v3041 = vunpack.c.l.b16 %v486
        %v3042 = vunpack.c.l.b16 %v487
        %v3043 = vunpack.c.l.b16 %v488
        %v3044 = vunpack.c.l.b16 %v489
        %v3045 = vunpack.c.l.b16 %v490
        %v3046 = vunpack.c.l.b16 %v491
        %v3047 = vunpack.c.l.b16 %v492
        %v3048 = vunpack.c.l.b16 %v493
        %v3049 = vunpack.c.l.b16 %v494
        %v3050 = vunpack.c.l.b16 %v495
        %v3051 = vunpack.c.l.b16 %v496
        %v3052 = vunpack.c.l.b16 %v497
        %v3053 = vpack.c.b16 %v3038, %v3037
        %v3054 = vpack.c.b16 %v3040, %v3039
        %v3055 = vpack.c.b16 %v3042, %v3041
        %v3056 = vpack.c.b16 %v3044, %v3043
        %v3057 = vpack.c.b16 %v3046, %v3045
        %v3058 = vpack.c.b16 %v3048, %v3047
        %v3059 = vpack.c.b16 %v3050, %v3049
        %v3060 = vpack.c.b16 %v3052, %v3051
        %3069 = vmatprep.subr.bf16.mxu0 0
        %3070 = vmatpush1.bf16.msra.mxu0 %v3053
        %3071 = vmatprep.subr.bf16.mxu0 0
        %3072 = vmatpush1.bf16.msra.mxu0 %v3054
        %3073 = vmatprep.subr.bf16.mxu0 0
        %3074 = vmatpush1.bf16.msra.mxu0 %v3055
        %3075 = vmatprep.subr.bf16.mxu0 0
        %3076 = vmatpush1.bf16.msra.mxu0 %v3056
        %3077 = vmatprep.subr.bf16.mxu0 0
        %3078 = vmatpush1.bf16.msra.mxu0 %v3057
        %3079 = vmatprep.subr.bf16.mxu0 0
        %3080 = vmatpush1.bf16.msra.mxu0 %v3058
        %3081 = vmatprep.subr.bf16.mxu0 0
        %3082 = vmatpush1.bf16.msra.mxu0 %v3059
        %3083 = vmatprep.subr.bf16.mxu0 0
        %3084 = vmatpush1.bf16.msra.mxu0 %v3060
        %3085 = vmatprep.subr.bf16.mxu0 0
        %3086 = vmatpush1.bf16.msra.mxu0 0
        %3087 = vmatprep.subr.bf16.mxu0 0
        %3088 = vmatpush1.bf16.msra.mxu0 0
        %3089 = vmatprep.subr.bf16.mxu0 0
        %3090 = vmatpush1.bf16.msra.mxu0 0
        %3091 = vmatprep.subr.bf16.mxu0 0
        %3092 = vmatpush1.bf16.msra.mxu0 0
        %3093 = vmatprep.subr.bf16.mxu0 0
        %3094 = vmatpush1.bf16.msra.mxu0 0
        %3095 = vmatprep.subr.bf16.mxu0 0
        %3096 = vmatpush1.bf16.msra.mxu0 0
        %3097 = vmatprep.subr.bf16.mxu0 0
        %3098 = vmatpush1.bf16.msra.mxu0 0
        %3099 = vmatprep.subr.bf16.mxu0 0
        %3100 = vmatpush1.bf16.msra.mxu0 0
        %3101 = vmatprep.mubr.bf16.mxu0 0
        %3102 = vmatmul.mubr.bf16.gmra.mrb[0].mxu0 %v3009
        %v3103 = vpop.f32.mrb[0].mxu0
        %v3104 = vadd.f32 %v3020, %v3103
        %v3105 = vpop.f32.mrb[0].mxu0
        %v3106 = vpop.f32.mrb[0].mxu0
        %v3107 = vadd.f32 %v3020, %v3106
        %v3108 = vpop.f32.mrb[0].mxu0
        %3109 = vmatprep.mubr.bf16.mxu0 0
        %3110 = vmatmul.mubr.bf16.gmra.mrb[0].mxu0 %v3010
        %v3111 = vpop.f32.mrb[0].mxu0
        %v3112 = vadd.f32 %v3020, %v3111
        %v3113 = vpop.f32.mrb[0].mxu0
        %v3114 = vpop.f32.mrb[0].mxu0
        %v3115 = vadd.f32 %v3020, %v3114
        %v3116 = vpop.f32.mrb[0].mxu0
        %3117 = vmatprep.mubr.bf16.mxu0 0
        %3118 = vmatmul.mubr.bf16.gmra.mrb[0].mxu0 %v3011
        %v3119 = vpop.f32.mrb[0].mxu0
        %v3120 = vadd.f32 %v3020, %v3119
        %v3121 = vpop.f32.mrb[0].mxu0
        %v3122 = vpop.f32.mrb[0].mxu0
        %v3123 = vadd.f32 %v3020, %v3122
        %v3124 = vpop.f32.mrb[0].mxu0
        %3125 = vmatprep.mubr.bf16.mxu0 0
        %3126 = vmatmul.mubr.bf16.gmra.mrb[0].mxu0 %v3012
        %v3127 = vpop.f32.mrb[0].mxu0
        %v3128 = vadd.f32 %v3020, %v3127
        %v3129 = vpop.f32.mrb[0].mxu0
        %v3130 = vpop.f32.mrb[0].mxu0
        %v3131 = vadd.f32 %v3020, %v3130
        %v3132 = vpop.f32.mrb[0].mxu0
        %3133 = vmatprep.mubr.bf16.mxu0 0
        %3134 = vmatmul.mubr.bf16.gmra.mrb[0].mxu0 %v3013
        %v3135 = vpop.f32.mrb[0].mxu0
        %v3136 = vadd.f32 %v3020, %v3135
        %v3137 = vpop.f32.mrb[0].mxu0
        %v3138 = vpop.f32.mrb[0].mxu0
        %v3139 = vadd.f32 %v3020, %v3138
        %v3140 = vpop.f32.mrb[0].mxu0
        %3141 = vmatprep.mubr.bf16.mxu0 0
        %3142 = vmatmul.mubr.bf16.gmra.mrb[0].mxu0 %v3014
        %v3143 = vpop.f32.mrb[0].mxu0
        %v3144 = vadd.f32 %v3020, %v3143
        %v3145 = vpop.f32.mrb[0].mxu0
        %v3146 = vpop.f32.mrb[0].mxu0
        %v3147 = vadd.f32 %v3020, %v3146
        %v3148 = vpop.f32.mrb[0].mxu0
        %3149 = vmatprep.mubr.bf16.mxu0 0
        %3150 = vmatmul.mubr.bf16.gmra.mrb[0].mxu0 %v3015
        %v3151 = vpop.f32.mrb[0].mxu0
        %v3152 = vadd.f32 %v3020, %v3151
        %v3153 = vpop.f32.mrb[0].mxu0
        %v3154 = vpop.f32.mrb[0].mxu0
        %v3155 = vadd.f32 %v3020, %v3154
        %v3156 = vpop.f32.mrb[0].mxu0
        %3157 = vmatprep.mubr.bf16.mxu0 0
        %3158 = vmatmul.mubr.bf16.gmra.mrb[0].mxu0 %v3016
        %v3159 = vpop.f32.mrb[0].mxu0
        %v3160 = vadd.f32 %v3020, %v3159
        %v3161 = vpop.f32.mrb[0].mxu0
        %v3162 = vpop.f32.mrb[0].mxu0
        %v3163 = vadd.f32 %v3020, %v3162
        %v3164 = vpop.f32.mrb[0].mxu0
        %3165 = vdwg.mxu0
        %3182 = vrot.lane.b32.xlu0 %v1004, 21
        %v3183 = vpop.permute.xlu0 %3182
        %3184 = vrot.lane.b32.xlu0 %v1108, 21
        %v3185 = vpop.permute.xlu0 %3184
        %3186 = vrot.lane.b32.xlu0 %v1212, 21
        %v3187 = vpop.permute.xlu0 %3186
        %3188 = vrot.lane.b32.xlu0 %v1316, 21
        %v3189 = vpop.permute.xlu0 %3188
        %3190 = vrot.lane.b32.xlu0 %v1420, 21
        %v3191 = vpop.permute.xlu0 %3190
        %3192 = vrot.lane.b32.xlu0 %v1524, 21
        %v3193 = vpop.permute.xlu0 %3192
        %3194 = vrot.lane.b32.xlu0 %v1628, 21
        %v3195 = vpop.permute.xlu0 %3194
        %3196 = vrot.lane.b32.xlu0 %v1732, 21
        %v3197 = vpop.permute.xlu0 %3196
        %3198 = vrot.lane.b32.xlu0 %v1836, 21
        %v3199 = vpop.permute.xlu0 %3198
        %3200 = vrot.lane.b32.xlu0 %v1940, 21
        %v3201 = vpop.permute.xlu0 %3200
        %3202 = vrot.lane.b32.xlu0 %v2044, 21
        %v3203 = vpop.permute.xlu0 %3202
        %3204 = vrot.lane.b32.xlu0 %v2148, 21
        %v3205 = vpop.permute.xlu0 %3204
        %3206 = vrot.lane.b32.xlu0 %v2252, 21
        %v3207 = vpop.permute.xlu0 %3206
        %3208 = vrot.lane.b32.xlu0 %v2356, 21
        %v3209 = vpop.permute.xlu0 %3208
        %3210 = vrot.lane.b32.xlu0 %v2460, 21
        %v3211 = vpop.permute.xlu0 %3210
        %3212 = vrot.lane.b32.xlu0 %v2564, 21
        %v3213 = vpop.permute.xlu0 %3212
        %v3230 = vmul.f32 %v3104, %v3183
        %v3231 = vmul.f32 %v3107, %v3185
        %v3232 = vmul.f32 %v3112, %v3187
        %v3233 = vmul.f32 %v3115, %v3189
        %v3234 = vmul.f32 %v3120, %v3191
        %v3235 = vmul.f32 %v3123, %v3193
        %v3236 = vmul.f32 %v3128, %v3195
        %v3237 = vmul.f32 %v3131, %v3197
        %v3238 = vmul.f32 %v3136, %v3199
        %v3239 = vmul.f32 %v3139, %v3201
        %v3240 = vmul.f32 %v3144, %v3203
        %v3241 = vmul.f32 %v3147, %v3205
        %v3242 = vmul.f32 %v3152, %v3207
        %v3243 = vmul.f32 %v3155, %v3209
        %v3244 = vmul.f32 %v3160, %v3211
        %v3245 = vmul.f32 %v3163, %v3213
        %3246 = vrot.lane.b32.xlu0 %v1004, 45
        %v3247 = vpop.permute.xlu0 %3246
        %3248 = vrot.lane.b32.xlu0 %v1108, 45
        %v3249 = vpop.permute.xlu0 %3248
        %3250 = vrot.lane.b32.xlu0 %v1212, 45
        %v3251 = vpop.permute.xlu0 %3250
        %3252 = vrot.lane.b32.xlu0 %v1316, 45
        %v3253 = vpop.permute.xlu0 %3252
        %3254 = vrot.lane.b32.xlu0 %v1420, 45
        %v3255 = vpop.permute.xlu0 %3254
        %3256 = vrot.lane.b32.xlu0 %v1524, 45
        %v3257 = vpop.permute.xlu0 %3256
        %3258 = vrot.lane.b32.xlu0 %v1628, 45
        %v3259 = vpop.permute.xlu0 %3258
        %3260 = vrot.lane.b32.xlu0 %v1732, 45
        %v3261 = vpop.permute.xlu0 %3260
        %3262 = vrot.lane.b32.xlu0 %v1836, 45
        %v3263 = vpop.permute.xlu0 %3262
        %3264 = vrot.lane.b32.xlu0 %v1940, 45
        %v3265 = vpop.permute.xlu0 %3264
        %3266 = vrot.lane.b32.xlu0 %v2044, 45
        %v3267 = vpop.permute.xlu0 %3266
        %3268 = vrot.lane.b32.xlu0 %v2148, 45
        %v3269 = vpop.permute.xlu0 %3268
        %3270 = vrot.lane.b32.xlu0 %v2252, 45
        %v3271 = vpop.permute.xlu0 %3270
        %3272 = vrot.lane.b32.xlu0 %v2356, 45
        %v3273 = vpop.permute.xlu0 %3272
        %3274 = vrot.lane.b32.xlu0 %v2460, 45
        %v3275 = vpop.permute.xlu0 %3274
        %3276 = vrot.lane.b32.xlu0 %v2564, 45
        %v3277 = vpop.permute.xlu0 %3276
        %v3294 = vmul.f32 %v3104, %v3247
        %v3295 = vmul.f32 %v3107, %v3249
        %v3296 = vmul.f32 %v3112, %v3251
        %v3297 = vmul.f32 %v3115, %v3253
        %v3298 = vmul.f32 %v3120, %v3255
        %v3299 = vmul.f32 %v3123, %v3257
        %v3300 = vmul.f32 %v3128, %v3259
        %v3301 = vmul.f32 %v3131, %v3261
        %v3302 = vmul.f32 %v3136, %v3263
        %v3303 = vmul.f32 %v3139, %v3265
        %v3304 = vmul.f32 %v3144, %v3267
        %v3305 = vmul.f32 %v3147, %v3269
        %v3306 = vmul.f32 %v3152, %v3271
        %v3307 = vmul.f32 %v3155, %v3273
        %v3308 = vmul.f32 %v3160, %v3275
        %v3309 = vmul.f32 %v3163, %v3277
        %3326 = vrot.lane.b32.xlu0 %v3294, 116
        %v3327 = vpop.permute.xlu0 %3326
        %3328 = vrot.lane.b32.xlu0 %v3295, 116
        %v3329 = vpop.permute.xlu0 %3328
        %3330 = vrot.lane.b32.xlu0 %v3296, 116
        %v3331 = vpop.permute.xlu0 %3330
        %3332 = vrot.lane.b32.xlu0 %v3297, 116
        %v3333 = vpop.permute.xlu0 %3332
        %3334 = vrot.lane.b32.xlu0 %v3298, 116
        %v3335 = vpop.permute.xlu0 %3334
        %3336 = vrot.lane.b32.xlu0 %v3299, 116
        %v3337 = vpop.permute.xlu0 %3336
        %3338 = vrot.lane.b32.xlu0 %v3300, 116
        %v3339 = vpop.permute.xlu0 %3338
        %3340 = vrot.lane.b32.xlu0 %v3301, 116
        %v3341 = vpop.permute.xlu0 %3340
        %3342 = vrot.lane.b32.xlu0 %v3302, 116
        %v3343 = vpop.permute.xlu0 %3342
        %3344 = vrot.lane.b32.xlu0 %v3303, 116
        %v3345 = vpop.permute.xlu0 %3344
        %3346 = vrot.lane.b32.xlu0 %v3304, 116
        %v3347 = vpop.permute.xlu0 %3346
        %3348 = vrot.lane.b32.xlu0 %v3305, 116
        %v3349 = vpop.permute.xlu0 %3348
        %3350 = vrot.lane.b32.xlu0 %v3306, 116
        %v3351 = vpop.permute.xlu0 %3350
        %3352 = vrot.lane.b32.xlu0 %v3307, 116
        %v3353 = vpop.permute.xlu0 %3352
        %3354 = vrot.lane.b32.xlu0 %v3308, 116
        %v3355 = vpop.permute.xlu0 %3354
        %3356 = vrot.lane.b32.xlu0 %v3309, 116
        %v3357 = vpop.permute.xlu0 %3356
        %v3374 = vsub.f32 %v3230, %v3327
        %v3375 = vsub.f32 %v3231, %v3329
        %v3376 = vsub.f32 %v3232, %v3331
        %v3377 = vsub.f32 %v3233, %v3333
        %v3378 = vsub.f32 %v3234, %v3335
        %v3379 = vsub.f32 %v3235, %v3337
        %v3380 = vsub.f32 %v3236, %v3339
        %v3381 = vsub.f32 %v3237, %v3341
        %v3382 = vsub.f32 %v3238, %v3343
        %v3383 = vsub.f32 %v3239, %v3345
        %v3384 = vsub.f32 %v3240, %v3347
        %v3385 = vsub.f32 %v3241, %v3349
        %v3386 = vsub.f32 %v3242, %v3351
        %v3387 = vsub.f32 %v3243, %v3353
        %v3388 = vsub.f32 %v3244, %v3355
        %v3389 = vsub.f32 %v3245, %v3357
        %3406 = vrot.lane.b32.xlu0 %v3374, 125
        %v3407 = vpop.permute.xlu0 %3406
        %3408 = vrot.lane.b32.xlu0 %v3375, 125
        %v3409 = vpop.permute.xlu0 %3408
        %3410 = vrot.lane.b32.xlu0 %v3376, 125
        %v3411 = vpop.permute.xlu0 %3410
        %3412 = vrot.lane.b32.xlu0 %v3377, 125
        %v3413 = vpop.permute.xlu0 %3412
        %3414 = vrot.lane.b32.xlu0 %v3378, 125
        %v3415 = vpop.permute.xlu0 %3414
        %3416 = vrot.lane.b32.xlu0 %v3379, 125
        %v3417 = vpop.permute.xlu0 %3416
        %3418 = vrot.lane.b32.xlu0 %v3380, 125
        %v3419 = vpop.permute.xlu0 %3418
        %3420 = vrot.lane.b32.xlu0 %v3381, 125
        %v3421 = vpop.permute.xlu0 %3420
        %3422 = vrot.lane.b32.xlu0 %v3382, 125
        %v3423 = vpop.permute.xlu0 %3422
        %3424 = vrot.lane.b32.xlu0 %v3383, 125
        %v3425 = vpop.permute.xlu0 %3424
        %3426 = vrot.lane.b32.xlu0 %v3384, 125
        %v3427 = vpop.permute.xlu0 %3426
        %3428 = vrot.lane.b32.xlu0 %v3385, 125
        %v3429 = vpop.permute.xlu0 %3428
        %3430 = vrot.lane.b32.xlu0 %v3386, 125
        %v3431 = vpop.permute.xlu0 %3430
        %3432 = vrot.lane.b32.xlu0 %v3387, 125
        %v3433 = vpop.permute.xlu0 %3432
        %3434 = vrot.lane.b32.xlu0 %v3388, 125
        %v3435 = vpop.permute.xlu0 %3434
        %3436 = vrot.lane.b32.xlu0 %v3389, 125
        %v3437 = vpop.permute.xlu0 %3436
        %v3454 = vadd.f32 %v3374, %v3407
        %v3455 = vadd.f32 %v3375, %v3409
        %v3456 = vadd.f32 %v3376, %v3411
        %v3457 = vadd.f32 %v3377, %v3413
        %v3458 = vadd.f32 %v3378, %v3415
        %v3459 = vadd.f32 %v3379, %v3417
        %v3460 = vadd.f32 %v3380, %v3419
        %v3461 = vadd.f32 %v3381, %v3421
        %v3462 = vadd.f32 %v3382, %v3423
        %v3463 = vadd.f32 %v3383, %v3425
        %v3464 = vadd.f32 %v3384, %v3427
        %v3465 = vadd.f32 %v3385, %v3429
        %v3466 = vadd.f32 %v3386, %v3431
        %v3467 = vadd.f32 %v3387, %v3433
        %v3468 = vadd.f32 %v3388, %v3435
        %v3469 = vadd.f32 %v3389, %v3437
        %3470 = vrot.lane.b32.xlu0 %v3374, 122
        %v3471 = vpop.permute.xlu0 %3470
        %3472 = vrot.lane.b32.xlu0 %v3375, 122
        %v3473 = vpop.permute.xlu0 %3472
        %3474 = vrot.lane.b32.xlu0 %v3376, 122
        %v3475 = vpop.permute.xlu0 %3474
        %3476 = vrot.lane.b32.xlu0 %v3377, 122
        %v3477 = vpop.permute.xlu0 %3476
        %3478 = vrot.lane.b32.xlu0 %v3378, 122
        %v3479 = vpop.permute.xlu0 %3478
        %3480 = vrot.lane.b32.xlu0 %v3379, 122
        %v3481 = vpop.permute.xlu0 %3480
        %3482 = vrot.lane.b32.xlu0 %v3380, 122
        %v3483 = vpop.permute.xlu0 %3482
        %3484 = vrot.lane.b32.xlu0 %v3381, 122
        %v3485 = vpop.permute.xlu0 %3484
        %3486 = vrot.lane.b32.xlu0 %v3382, 122
        %v3487 = vpop.permute.xlu0 %3486
        %3488 = vrot.lane.b32.xlu0 %v3383, 122
        %v3489 = vpop.permute.xlu0 %3488
        %3490 = vrot.lane.b32.xlu0 %v3384, 122
        %v3491 = vpop.permute.xlu0 %3490
        %3492 = vrot.lane.b32.xlu0 %v3385, 122
        %v3493 = vpop.permute.xlu0 %3492
        %3494 = vrot.lane.b32.xlu0 %v3386, 122
        %v3495 = vpop.permute.xlu0 %3494
        %3496 = vrot.lane.b32.xlu0 %v3387, 122
        %v3497 = vpop.permute.xlu0 %3496
        %3498 = vrot.lane.b32.xlu0 %v3388, 122
        %v3499 = vpop.permute.xlu0 %3498
        %3500 = vrot.lane.b32.xlu0 %v3389, 122
        %v3501 = vpop.permute.xlu0 %3500
        %v3518 = vadd.f32 %v3454, %v3471
        %v3519 = vadd.f32 %v3455, %v3473
        %v3520 = vadd.f32 %v3456, %v3475
        %v3521 = vadd.f32 %v3457, %v3477
        %v3522 = vadd.f32 %v3458, %v3479
        %v3523 = vadd.f32 %v3459, %v3481
        %v3524 = vadd.f32 %v3460, %v3483
        %v3525 = vadd.f32 %v3461, %v3485
        %v3526 = vadd.f32 %v3462, %v3487
        %v3527 = vadd.f32 %v3463, %v3489
        %v3528 = vadd.f32 %v3464, %v3491
        %v3529 = vadd.f32 %v3465, %v3493
        %v3530 = vadd.f32 %v3466, %v3495
        %v3531 = vadd.f32 %v3467, %v3497
        %v3532 = vadd.f32 %v3468, %v3499
        %v3533 = vadd.f32 %v3469, %v3501
        %3534 = vrot.lane.b32.xlu0 %v3374, 119
        %v3535 = vpop.permute.xlu0 %3534
        %3536 = vrot.lane.b32.xlu0 %v3375, 119
        %v3537 = vpop.permute.xlu0 %3536
        %3538 = vrot.lane.b32.xlu0 %v3376, 119
        %v3539 = vpop.permute.xlu0 %3538
        %3540 = vrot.lane.b32.xlu0 %v3377, 119
        %v3541 = vpop.permute.xlu0 %3540
        %3542 = vrot.lane.b32.xlu0 %v3378, 119
        %v3543 = vpop.permute.xlu0 %3542
        %3544 = vrot.lane.b32.xlu0 %v3379, 119
        %v3545 = vpop.permute.xlu0 %3544
        %3546 = vrot.lane.b32.xlu0 %v3380, 119
        %v3547 = vpop.permute.xlu0 %3546
        %3548 = vrot.lane.b32.xlu0 %v3381, 119
        %v3549 = vpop.permute.xlu0 %3548
        %3550 = vrot.lane.b32.xlu0 %v3382, 119
        %v3551 = vpop.permute.xlu0 %3550
        %3552 = vrot.lane.b32.xlu0 %v3383, 119
        %v3553 = vpop.permute.xlu0 %3552
        %3554 = vrot.lane.b32.xlu0 %v3384, 119
        %v3555 = vpop.permute.xlu0 %3554
        %3556 = vrot.lane.b32.xlu0 %v3385, 119
        %v3557 = vpop.permute.xlu0 %3556
        %3558 = vrot.lane.b32.xlu0 %v3386, 119
        %v3559 = vpop.permute.xlu0 %3558
        %3560 = vrot.lane.b32.xlu0 %v3387, 119
        %v3561 = vpop.permute.xlu0 %3560
        %3562 = vrot.lane.b32.xlu0 %v3388, 119
        %v3563 = vpop.permute.xlu0 %3562
        %3564 = vrot.lane.b32.xlu0 %v3389, 119
        %v3565 = vpop.permute.xlu0 %3564
        %v3582 = vadd.f32 %v3518, %v3535
        %v3583 = vadd.f32 %v3519, %v3537
        %v3584 = vadd.f32 %v3520, %v3539
        %v3585 = vadd.f32 %v3521, %v3541
        %v3586 = vadd.f32 %v3522, %v3543
        %v3587 = vadd.f32 %v3523, %v3545
        %v3588 = vadd.f32 %v3524, %v3547
        %v3589 = vadd.f32 %v3525, %v3549
        %v3590 = vadd.f32 %v3526, %v3551
        %v3591 = vadd.f32 %v3527, %v3553
        %v3592 = vadd.f32 %v3528, %v3555
        %v3593 = vadd.f32 %v3529, %v3557
        %v3594 = vadd.f32 %v3530, %v3559
        %v3595 = vadd.f32 %v3531, %v3561
        %v3596 = vadd.f32 %v3532, %v3563
        %v3597 = vadd.f32 %v3533, %v3565
        %v3598 = vmax.f32 %v3582, -1.0
        %v3599 = vmax.f32 %v3583, -1.0
        %v3600 = vmax.f32 %v3584, -1.0
        %v3601 = vmax.f32 %v3585, -1.0
        %v3602 = vmax.f32 %v3586, -1.0
        %v3603 = vmax.f32 %v3587, -1.0
        %v3604 = vmax.f32 %v3588, -1.0
        %v3605 = vmax.f32 %v3589, -1.0
        %v3606 = vmax.f32 %v3590, -1.0
        %v3607 = vmax.f32 %v3591, -1.0
        %v3608 = vmax.f32 %v3592, -1.0
        %v3609 = vmax.f32 %v3593, -1.0
        %v3610 = vmax.f32 %v3594, -1.0
        %v3611 = vmax.f32 %v3595, -1.0
        %v3612 = vmax.f32 %v3596, -1.0
        %v3613 = vmax.f32 %v3597, -1.0
        %v3614 = vmin.f32 %v3598, 1.0
        %v3615 = vmin.f32 %v3599, 1.0
        %v3616 = vmin.f32 %v3600, 1.0
        %v3617 = vmin.f32 %v3601, 1.0
        %v3618 = vmin.f32 %v3602, 1.0
        %v3619 = vmin.f32 %v3603, 1.0
        %v3620 = vmin.f32 %v3604, 1.0
        %v3621 = vmin.f32 %v3605, 1.0
        %v3622 = vmin.f32 %v3606, 1.0
        %v3623 = vmin.f32 %v3607, 1.0
        %v3624 = vmin.f32 %v3608, 1.0
        %v3625 = vmin.f32 %v3609, 1.0
        %v3626 = vmin.f32 %v3610, 1.0
        %v3627 = vmin.f32 %v3611, 1.0
        %v3628 = vmin.f32 %v3612, 1.0
        %v3629 = vmin.f32 %v3613, 1.0
        %3646 = vrot.lane.b32.xlu0 %v411, 32
        %v3647 = vpop.permute.xlu0 %3646
        %3648 = vrot.lane.b32.xlu0 %v412, 32
        %v3649 = vpop.permute.xlu0 %3648
        %3650 = vrot.lane.b32.xlu0 %v413, 32
        %v3651 = vpop.permute.xlu0 %3650
        %3652 = vrot.lane.b32.xlu0 %v414, 32
        %v3653 = vpop.permute.xlu0 %3652
        %3654 = vrot.lane.b32.xlu0 %v415, 32
        %v3655 = vpop.permute.xlu0 %3654
        %3656 = vrot.lane.b32.xlu0 %v416, 32
        %v3657 = vpop.permute.xlu0 %3656
        %3658 = vrot.lane.b32.xlu0 %v417, 32
        %v3659 = vpop.permute.xlu0 %3658
        %3660 = vrot.lane.b32.xlu0 %v418, 32
        %v3661 = vpop.permute.xlu0 %3660
        %3662 = vrot.lane.b32.xlu0 %v419, 32
        %v3663 = vpop.permute.xlu0 %3662
        %3664 = vrot.lane.b32.xlu0 %v420, 32
        %v3665 = vpop.permute.xlu0 %3664
        %3666 = vrot.lane.b32.xlu0 %v421, 32
        %v3667 = vpop.permute.xlu0 %3666
        %3668 = vrot.lane.b32.xlu0 %v422, 32
        %v3669 = vpop.permute.xlu0 %3668
        %3670 = vrot.lane.b32.xlu0 %v423, 32
        %v3671 = vpop.permute.xlu0 %3670
        %3672 = vrot.lane.b32.xlu0 %v424, 32
        %v3673 = vpop.permute.xlu0 %3672
        %3674 = vrot.lane.b32.xlu0 %v425, 32
        %v3675 = vpop.permute.xlu0 %3674
        %3676 = vrot.lane.b32.xlu0 %v426, 32
        %v3677 = vpop.permute.xlu0 %3676
        %3710 = vrot.lane.b32.xlu0 %v428, 35
        %v3711 = vpop.permute.xlu0 %3710
        %3712 = vrot.lane.b32.xlu0 %v429, 35
        %v3713 = vpop.permute.xlu0 %3712
        %3714 = vrot.lane.b32.xlu0 %v430, 35
        %v3715 = vpop.permute.xlu0 %3714
        %3716 = vrot.lane.b32.xlu0 %v431, 35
        %v3717 = vpop.permute.xlu0 %3716
        %3718 = vrot.lane.b32.xlu0 %v432, 35
        %v3719 = vpop.permute.xlu0 %3718
        %3720 = vrot.lane.b32.xlu0 %v433, 35
        %v3721 = vpop.permute.xlu0 %3720
        %3722 = vrot.lane.b32.xlu0 %v434, 35
        %v3723 = vpop.permute.xlu0 %3722
        %3724 = vrot.lane.b32.xlu0 %v435, 35
        %v3725 = vpop.permute.xlu0 %3724
        %3726 = vrot.lane.b32.xlu0 %v436, 35
        %v3727 = vpop.permute.xlu0 %3726
        %3728 = vrot.lane.b32.xlu0 %v437, 35
        %v3729 = vpop.permute.xlu0 %3728
        %3730 = vrot.lane.b32.xlu0 %v438, 35
        %v3731 = vpop.permute.xlu0 %3730
        %3732 = vrot.lane.b32.xlu0 %v439, 35
        %v3733 = vpop.permute.xlu0 %3732
        %3734 = vrot.lane.b32.xlu0 %v440, 35
        %v3735 = vpop.permute.xlu0 %3734
        %3736 = vrot.lane.b32.xlu0 %v441, 35
        %v3737 = vpop.permute.xlu0 %3736
        %3738 = vrot.lane.b32.xlu0 %v442, 35
        %v3739 = vpop.permute.xlu0 %3738
        %3740 = vrot.lane.b32.xlu0 %v443, 35
        %v3741 = vpop.permute.xlu0 %3740
        %3774 = vrot.lane.b32.xlu0 %v3614, 5
        %v3775 = vpop.permute.xlu0 %3774
        %3776 = vrot.lane.b32.xlu0 %v3615, 5
        %v3777 = vpop.permute.xlu0 %3776
        %3778 = vrot.lane.b32.xlu0 %v3616, 5
        %v3779 = vpop.permute.xlu0 %3778
        %3780 = vrot.lane.b32.xlu0 %v3617, 5
        %v3781 = vpop.permute.xlu0 %3780
        %3782 = vrot.lane.b32.xlu0 %v3618, 5
        %v3783 = vpop.permute.xlu0 %3782
        %3784 = vrot.lane.b32.xlu0 %v3619, 5
        %v3785 = vpop.permute.xlu0 %3784
        %3786 = vrot.lane.b32.xlu0 %v3620, 5
        %v3787 = vpop.permute.xlu0 %3786
        %3788 = vrot.lane.b32.xlu0 %v3621, 5
        %v3789 = vpop.permute.xlu0 %3788
        %3790 = vrot.lane.b32.xlu0 %v3622, 5
        %v3791 = vpop.permute.xlu0 %3790
        %3792 = vrot.lane.b32.xlu0 %v3623, 5
        %v3793 = vpop.permute.xlu0 %3792
        %3794 = vrot.lane.b32.xlu0 %v3624, 5
        %v3795 = vpop.permute.xlu0 %3794
        %3796 = vrot.lane.b32.xlu0 %v3625, 5
        %v3797 = vpop.permute.xlu0 %3796
        %3798 = vrot.lane.b32.xlu0 %v3626, 5
        %v3799 = vpop.permute.xlu0 %3798
        %3800 = vrot.lane.b32.xlu0 %v3627, 5
        %v3801 = vpop.permute.xlu0 %3800
        %3802 = vrot.lane.b32.xlu0 %v3628, 5
        %v3803 = vpop.permute.xlu0 %3802
        %3804 = vrot.lane.b32.xlu0 %v3629, 5
        %v3805 = vpop.permute.xlu0 %3804
        %3838 = vrot.lane.b32.xlu0 %v462, 41
        %v3839 = vpop.permute.xlu0 %3838
        %3840 = vrot.lane.b32.xlu0 %v463, 41
        %v3841 = vpop.permute.xlu0 %3840
        %3842 = vrot.lane.b32.xlu0 %v464, 41
        %v3843 = vpop.permute.xlu0 %3842
        %3844 = vrot.lane.b32.xlu0 %v465, 41
        %v3845 = vpop.permute.xlu0 %3844
        %3846 = vrot.lane.b32.xlu0 %v466, 41
        %v3847 = vpop.permute.xlu0 %3846
        %3848 = vrot.lane.b32.xlu0 %v467, 41
        %v3849 = vpop.permute.xlu0 %3848
        %3850 = vrot.lane.b32.xlu0 %v468, 41
        %v3851 = vpop.permute.xlu0 %3850
        %3852 = vrot.lane.b32.xlu0 %v469, 41
        %v3853 = vpop.permute.xlu0 %3852
        %3854 = vrot.lane.b32.xlu0 %v470, 41
        %v3855 = vpop.permute.xlu0 %3854
        %3856 = vrot.lane.b32.xlu0 %v471, 41
        %v3857 = vpop.permute.xlu0 %3856
        %3858 = vrot.lane.b32.xlu0 %v472, 41
        %v3859 = vpop.permute.xlu0 %3858
        %3860 = vrot.lane.b32.xlu0 %v473, 41
        %v3861 = vpop.permute.xlu0 %3860
        %3862 = vrot.lane.b32.xlu0 %v474, 41
        %v3863 = vpop.permute.xlu0 %3862
        %3864 = vrot.lane.b32.xlu0 %v475, 41
        %v3865 = vpop.permute.xlu0 %3864
        %3866 = vrot.lane.b32.xlu0 %v476, 41
        %v3867 = vpop.permute.xlu0 %3866
        %3868 = vrot.lane.b32.xlu0 %v477, 41
        %v3869 = vpop.permute.xlu0 %3868
        %v3886 = vsel %vm2650, %v3104, %v3647
        %v3887 = vsel %vm2650, %v3107, %v3649
        %v3888 = vsel %vm2650, %v3112, %v3651
        %v3889 = vsel %vm2650, %v3115, %v3653
        %v3890 = vsel %vm2650, %v3120, %v3655
        %v3891 = vsel %vm2650, %v3123, %v3657
        %v3892 = vsel %vm2650, %v3128, %v3659
        %v3893 = vsel %vm2650, %v3131, %v3661
        %v3894 = vsel %vm2650, %v3136, %v3663
        %v3895 = vsel %vm2650, %v3139, %v3665
        %v3896 = vsel %vm2650, %v3144, %v3667
        %v3897 = vsel %vm2650, %v3147, %v3669
        %v3898 = vsel %vm2650, %v3152, %v3671
        %v3899 = vsel %vm2650, %v3155, %v3673
        %v3900 = vsel %vm2650, %v3160, %v3675
        %v3901 = vsel %vm2650, %v3163, %v3677
        %vm3902 = vcmask 285696
        %v3903 = vsel %vm3902, %v3886, %v3711
        %v3904 = vsel %vm3902, %v3887, %v3713
        %v3905 = vsel %vm3902, %v3888, %v3715
        %v3906 = vsel %vm3902, %v3889, %v3717
        %v3907 = vsel %vm3902, %v3890, %v3719
        %v3908 = vsel %vm3902, %v3891, %v3721
        %v3909 = vsel %vm3902, %v3892, %v3723
        %v3910 = vsel %vm3902, %v3893, %v3725
        %v3911 = vsel %vm3902, %v3894, %v3727
        %v3912 = vsel %vm3902, %v3895, %v3729
        %v3913 = vsel %vm3902, %v3896, %v3731
        %v3914 = vsel %vm3902, %v3897, %v3733
        %v3915 = vsel %vm3902, %v3898, %v3735
        %v3916 = vsel %vm3902, %v3899, %v3737
        %v3917 = vsel %vm3902, %v3900, %v3739
        %v3918 = vsel %vm3902, %v3901, %v3741
        %vm3919 = vcmask 310272
        %v3920 = vsel %vm3919, %v3903, %v3775
        %v3921 = vsel %vm3919, %v3904, %v3777
        %v3922 = vsel %vm3919, %v3905, %v3779
        %v3923 = vsel %vm3919, %v3906, %v3781
        %v3924 = vsel %vm3919, %v3907, %v3783
        %v3925 = vsel %vm3919, %v3908, %v3785
        %v3926 = vsel %vm3919, %v3909, %v3787
        %v3927 = vsel %vm3919, %v3910, %v3789
        %v3928 = vsel %vm3919, %v3911, %v3791
        %v3929 = vsel %vm3919, %v3912, %v3793
        %v3930 = vsel %vm3919, %v3913, %v3795
        %v3931 = vsel %vm3919, %v3914, %v3797
        %v3932 = vsel %vm3919, %v3915, %v3799
        %v3933 = vsel %vm3919, %v3916, %v3801
        %v3934 = vsel %vm3919, %v3917, %v3803
        %v3935 = vsel %vm3919, %v3918, %v3805
        %vm3936 = vcmask 334848
        %v3937 = vsel %vm3936, %v3920, %v3839
        %v3938 = vsel %vm3936, %v3921, %v3841
        %v3939 = vsel %vm3936, %v3922, %v3843
        %v3940 = vsel %vm3936, %v3923, %v3845
        %v3941 = vsel %vm3936, %v3924, %v3847
        %v3942 = vsel %vm3936, %v3925, %v3849
        %v3943 = vsel %vm3936, %v3926, %v3851
        %v3944 = vsel %vm3936, %v3927, %v3853
        %v3945 = vsel %vm3936, %v3928, %v3855
        %v3946 = vsel %vm3936, %v3929, %v3857
        %v3947 = vsel %vm3936, %v3930, %v3859
        %v3948 = vsel %vm3936, %v3931, %v3861
        %v3949 = vsel %vm3936, %v3932, %v3863
        %v3950 = vsel %vm3936, %v3933, %v3865
        %v3951 = vsel %vm3936, %v3934, %v3867
        %v3952 = vsel %vm3936, %v3935, %v3869
        %v3953 = vpack.c.bf16 %v3938, %v3937
        %v3954 = vpack.c.bf16 %v3940, %v3939
        %v3955 = vpack.c.bf16 %v3942, %v3941
        %v3956 = vpack.c.bf16 %v3944, %v3943
        %v3957 = vpack.c.bf16 %v3946, %v3945
        %v3958 = vpack.c.bf16 %v3948, %v3947
        %v3959 = vpack.c.bf16 %v3950, %v3949
        %v3960 = vpack.c.bf16 %v3952, %v3951
        %v3961 = vlaneseq
        %v3962 = vshrl.u32 %v3961, 7
        %v3963 = vsub.s32 2, %v3962
        %v3964 = vrot.slane %v512, %v3963
        %v3971 = vunpack.c.l.b16 %v498
        %v3972 = vunpack.c.l.b16 %v499
        %v3973 = vunpack.c.l.b16 %v500
        %v3974 = vunpack.c.l.b16 %v501
        %v3975 = vunpack.c.l.b16 %v502
        %v3976 = vunpack.c.l.b16 %v503
        %v3977 = vpack.c.b16 %v3972, %v3971
        %v3978 = vpack.c.b16 %v3974, %v3973
        %v3979 = vpack.c.b16 %v3976, %v3975
        %vm3982 = vcmask 367616
        %v3984 = vsel %vm3982, %v3953, 0
        %v3987 = vsel %vm3982, %v3954, 0
        %v3990 = vsel %vm3982, %v3955, 0
        %v3993 = vsel %vm3982, %v3956, 0
        %v3996 = vsel %vm3982, %v3957, 0
        %v3999 = vsel %vm3982, %v3958, 0
        %v4002 = vsel %vm3982, %v3959, 0
        %v4005 = vsel %vm3982, %v3960, 0
        %vm4007 = vcmask 1045504
        %vm4008 = vcmask 1046528
        %v4009 = vsel %vm4007, 4294967295, 65535
        %v4010 = vsel %vm4008, %v4009, 0
        %v4012 = vand.u32 %v3979, %v4010
        %4014 = vmatprep.subr.bf16.mxu0 0
        %4015 = vmatpush1.bf16.msra.mxu0 %v3977
        %4016 = vmatprep.subr.bf16.mxu0 0
        %4017 = vmatpush1.bf16.msra.mxu0 %v3978
        %4018 = vmatprep.subr.bf16.mxu0 0
        %4019 = vmatpush1.bf16.msra.mxu0 %v4012
        %4020 = vmatprep.subr.bf16.mxu0 0
        %4021 = vmatpush1.bf16.msra.mxu0 0
        %4022 = vmatprep.subr.bf16.mxu0 0
        %4023 = vmatpush1.bf16.msra.mxu0 0
        %4024 = vmatprep.subr.bf16.mxu0 0
        %4025 = vmatpush1.bf16.msra.mxu0 0
        %4026 = vmatprep.subr.bf16.mxu0 0
        %4027 = vmatpush1.bf16.msra.mxu0 0
        %4028 = vmatprep.subr.bf16.mxu0 0
        %4029 = vmatpush1.bf16.msra.mxu0 0
        %4030 = vmatprep.subr.bf16.mxu0 0
        %4031 = vmatpush1.bf16.msra.mxu0 0
        %4032 = vmatprep.subr.bf16.mxu0 0
        %4033 = vmatpush1.bf16.msra.mxu0 0
        %4034 = vmatprep.subr.bf16.mxu0 0
        %4035 = vmatpush1.bf16.msra.mxu0 0
        %4036 = vmatprep.subr.bf16.mxu0 0
        %4037 = vmatpush1.bf16.msra.mxu0 0
        %4038 = vmatprep.subr.bf16.mxu0 0
        %4039 = vmatpush1.bf16.msra.mxu0 0
        %4040 = vmatprep.subr.bf16.mxu0 0
        %4041 = vmatpush1.bf16.msra.mxu0 0
        %4042 = vmatprep.subr.bf16.mxu0 0
        %4043 = vmatpush1.bf16.msra.mxu0 0
        %4044 = vmatprep.subr.bf16.mxu0 0
        %4045 = vmatpush1.bf16.msra.mxu0 0
        %4046 = vmatprep.mubr.bf16.mxu0 0
        %4047 = vmatmul.mubr.bf16.gmra.mrb[0].mxu0 %v3984
        %v4048 = vpop.f32.mrb[0].mxu0
        %v4049 = vadd.f32 %v3964, %v4048
        %v4050 = vpop.f32.mrb[0].mxu0
        %v4051 = vpop.f32.mrb[0].mxu0
        %v4052 = vadd.f32 %v3964, %v4051
        %v4053 = vpop.f32.mrb[0].mxu0
        %4054 = vmatprep.mubr.bf16.mxu0 0
        %4055 = vmatmul.mubr.bf16.gmra.mrb[0].mxu0 %v3987
        %v4056 = vpop.f32.mrb[0].mxu0
        %v4057 = vadd.f32 %v3964, %v4056
        %v4058 = vpop.f32.mrb[0].mxu0
        %v4059 = vpop.f32.mrb[0].mxu0
        %v4060 = vadd.f32 %v3964, %v4059
        %v4061 = vpop.f32.mrb[0].mxu0
        %4062 = vmatprep.mubr.bf16.mxu0 0
        %4063 = vmatmul.mubr.bf16.gmra.mrb[0].mxu0 %v3990
        %v4064 = vpop.f32.mrb[0].mxu0
        %v4065 = vadd.f32 %v3964, %v4064
        %v4066 = vpop.f32.mrb[0].mxu0
        %v4067 = vpop.f32.mrb[0].mxu0
        %v4068 = vadd.f32 %v3964, %v4067
        %v4069 = vpop.f32.mrb[0].mxu0
        %4070 = vmatprep.mubr.bf16.mxu0 0
        %4071 = vmatmul.mubr.bf16.gmra.mrb[0].mxu0 %v3993
        %v4072 = vpop.f32.mrb[0].mxu0
        %v4073 = vadd.f32 %v3964, %v4072
        %v4074 = vpop.f32.mrb[0].mxu0
        %v4075 = vpop.f32.mrb[0].mxu0
        %v4076 = vadd.f32 %v3964, %v4075
        %v4077 = vpop.f32.mrb[0].mxu0
        %4078 = vmatprep.mubr.bf16.mxu0 0
        %4079 = vmatmul.mubr.bf16.gmra.mrb[0].mxu0 %v3996
        %v4080 = vpop.f32.mrb[0].mxu0
        %v4081 = vadd.f32 %v3964, %v4080
        %v4082 = vpop.f32.mrb[0].mxu0
        %v4083 = vpop.f32.mrb[0].mxu0
        %v4084 = vadd.f32 %v3964, %v4083
        %v4085 = vpop.f32.mrb[0].mxu0
        %4086 = vmatprep.mubr.bf16.mxu0 0
        %4087 = vmatmul.mubr.bf16.gmra.mrb[0].mxu0 %v3999
        %v4088 = vpop.f32.mrb[0].mxu0
        %v4089 = vadd.f32 %v3964, %v4088
        %v4090 = vpop.f32.mrb[0].mxu0
        %v4091 = vpop.f32.mrb[0].mxu0
        %v4092 = vadd.f32 %v3964, %v4091
        %v4093 = vpop.f32.mrb[0].mxu0
        %4094 = vmatprep.mubr.bf16.mxu0 0
        %4095 = vmatmul.mubr.bf16.gmra.mrb[0].mxu0 %v4002
        %v4096 = vpop.f32.mrb[0].mxu0
        %v4097 = vadd.f32 %v3964, %v4096
        %v4098 = vpop.f32.mrb[0].mxu0
        %v4099 = vpop.f32.mrb[0].mxu0
        %v4100 = vadd.f32 %v3964, %v4099
        %v4101 = vpop.f32.mrb[0].mxu0
        %4102 = vmatprep.mubr.bf16.mxu0 0
        %4103 = vmatmul.mubr.bf16.gmra.mrb[0].mxu0 %v4005
        %v4104 = vpop.f32.mrb[0].mxu0
        %v4105 = vadd.f32 %v3964, %v4104
        %v4106 = vpop.f32.mrb[0].mxu0
        %v4107 = vpop.f32.mrb[0].mxu0
        %v4108 = vadd.f32 %v3964, %v4107
        %v4109 = vpop.f32.mrb[0].mxu0
        %4110 = vdwg.mxu0
        %v4111 = vmax.f32 %v4049, 0.0
        %v4112 = vmax.f32 %v4052, 0.0
        %v4113 = vmax.f32 %v4057, 0.0
        %v4114 = vmax.f32 %v4060, 0.0
        %v4115 = vmax.f32 %v4065, 0.0
        %v4116 = vmax.f32 %v4068, 0.0
        %v4117 = vmax.f32 %v4073, 0.0
        %v4118 = vmax.f32 %v4076, 0.0
        %v4119 = vmax.f32 %v4081, 0.0
        %v4120 = vmax.f32 %v4084, 0.0
        %v4121 = vmax.f32 %v4089, 0.0
        %v4122 = vmax.f32 %v4092, 0.0
        %v4123 = vmax.f32 %v4097, 0.0
        %v4124 = vmax.f32 %v4100, 0.0
        %v4125 = vmax.f32 %v4105, 0.0
        %v4126 = vmax.f32 %v4108, 0.0
        %v4127 = vpack.c.bf16 %v4112, %v4111
        %v4128 = vpack.c.bf16 %v4114, %v4113
        %v4129 = vpack.c.bf16 %v4116, %v4115
        %v4130 = vpack.c.bf16 %v4118, %v4117
        %v4131 = vpack.c.bf16 %v4120, %v4119
        %v4132 = vpack.c.bf16 %v4122, %v4121
        %v4133 = vpack.c.bf16 %v4124, %v4123
        %v4134 = vpack.c.bf16 %v4126, %v4125
        %v4135 = vlaneseq
        %v4136 = vshrl.u32 %v4135, 7
        %v4137 = vsub.s32 3, %v4136
        %v4138 = vrot.slane %v512, %v4137
        %v4147 = vunpack.c.l.b16 %v504
        %v4148 = vunpack.c.l.b16 %v505
        %v4149 = vunpack.c.l.b16 %v506
        %v4150 = vunpack.c.l.b16 %v507
        %v4151 = vunpack.c.l.b16 %v508
        %v4152 = vunpack.c.l.b16 %v509
        %v4153 = vunpack.c.l.b16 %v510
        %v4154 = vunpack.c.l.b16 %v511
        %v4155 = vpack.c.b16 %v4148, %v4147
        %v4156 = vpack.c.b16 %v4150, %v4149
        %v4157 = vpack.c.b16 %v4152, %v4151
        %v4158 = vpack.c.b16 %v4154, %v4153
        %v4164 = vsel %vm2992, %v4127, 0
        %v4167 = vsel %vm2992, %v4128, 0
        %v4170 = vsel %vm2992, %v4129, 0
        %v4173 = vsel %vm2992, %v4130, 0
        %v4176 = vsel %vm2992, %v4131, 0
        %v4179 = vsel %vm2992, %v4132, 0
        %v4182 = vsel %vm2992, %v4133, 0
        %v4185 = vsel %vm2992, %v4134, 0
        %4187 = vmatprep.subr.bf16.mxu0 0
        %4188 = vmatpush1.bf16.msra.mxu0 %v4155
        %4189 = vmatprep.subr.bf16.mxu0 0
        %4190 = vmatpush1.bf16.msra.mxu0 %v4156
        %4191 = vmatprep.subr.bf16.mxu0 0
        %4192 = vmatpush1.bf16.msra.mxu0 %v4157
        %4193 = vmatprep.subr.bf16.mxu0 0
        %4194 = vmatpush1.bf16.msra.mxu0 %v4158
        %4195 = vmatprep.subr.bf16.mxu0 0
        %4196 = vmatpush1.bf16.msra.mxu0 0
        %4197 = vmatprep.subr.bf16.mxu0 0
        %4198 = vmatpush1.bf16.msra.mxu0 0
        %4199 = vmatprep.subr.bf16.mxu0 0
        %4200 = vmatpush1.bf16.msra.mxu0 0
        %4201 = vmatprep.subr.bf16.mxu0 0
        %4202 = vmatpush1.bf16.msra.mxu0 0
        %4203 = vmatprep.subr.bf16.mxu0 0
        %4204 = vmatpush1.bf16.msra.mxu0 0
        %4205 = vmatprep.subr.bf16.mxu0 0
        %4206 = vmatpush1.bf16.msra.mxu0 0
        %4207 = vmatprep.subr.bf16.mxu0 0
        %4208 = vmatpush1.bf16.msra.mxu0 0
        %4209 = vmatprep.subr.bf16.mxu0 0
        %4210 = vmatpush1.bf16.msra.mxu0 0
        %4211 = vmatprep.subr.bf16.mxu0 0
        %4212 = vmatpush1.bf16.msra.mxu0 0
        %4213 = vmatprep.subr.bf16.mxu0 0
        %4214 = vmatpush1.bf16.msra.mxu0 0
        %4215 = vmatprep.subr.bf16.mxu0 0
        %4216 = vmatpush1.bf16.msra.mxu0 0
        %4217 = vmatprep.subr.bf16.mxu0 0
        %4218 = vmatpush1.bf16.msra.mxu0 0
        %4219 = vmatprep.mubr.bf16.mxu0 0
        %4220 = vmatmul.mubr.bf16.gmra.mrb[0].mxu0 %v4164
        %v4221 = vpop.f32.mrb[0].mxu0
        %v4222 = vadd.f32 %v4138, %v4221
        %v4223 = vpop.f32.mrb[0].mxu0
        %v4224 = vpop.f32.mrb[0].mxu0
        %v4225 = vadd.f32 %v4138, %v4224
        %v4226 = vpop.f32.mrb[0].mxu0
        %4227 = vmatprep.mubr.bf16.mxu0 0
        %4228 = vmatmul.mubr.bf16.gmra.mrb[0].mxu0 %v4167
        %v4229 = vpop.f32.mrb[0].mxu0
        %v4230 = vadd.f32 %v4138, %v4229
        %v4231 = vpop.f32.mrb[0].mxu0
        %v4232 = vpop.f32.mrb[0].mxu0
        %v4233 = vadd.f32 %v4138, %v4232
        %v4234 = vpop.f32.mrb[0].mxu0
        %4235 = vmatprep.mubr.bf16.mxu0 0
        %4236 = vmatmul.mubr.bf16.gmra.mrb[0].mxu0 %v4170
        %v4237 = vpop.f32.mrb[0].mxu0
        %v4238 = vadd.f32 %v4138, %v4237
        %v4239 = vpop.f32.mrb[0].mxu0
        %v4240 = vpop.f32.mrb[0].mxu0
        %v4241 = vadd.f32 %v4138, %v4240
        %v4242 = vpop.f32.mrb[0].mxu0
        %4243 = vmatprep.mubr.bf16.mxu0 0
        %4244 = vmatmul.mubr.bf16.gmra.mrb[0].mxu0 %v4173
        %v4245 = vpop.f32.mrb[0].mxu0
        %v4246 = vadd.f32 %v4138, %v4245
        %v4247 = vpop.f32.mrb[0].mxu0
        %v4248 = vpop.f32.mrb[0].mxu0
        %v4249 = vadd.f32 %v4138, %v4248
        %v4250 = vpop.f32.mrb[0].mxu0
        %4251 = vmatprep.mubr.bf16.mxu0 0
        %4252 = vmatmul.mubr.bf16.gmra.mrb[0].mxu0 %v4176
        %v4253 = vpop.f32.mrb[0].mxu0
        %v4254 = vadd.f32 %v4138, %v4253
        %v4255 = vpop.f32.mrb[0].mxu0
        %v4256 = vpop.f32.mrb[0].mxu0
        %v4257 = vadd.f32 %v4138, %v4256
        %v4258 = vpop.f32.mrb[0].mxu0
        %4259 = vmatprep.mubr.bf16.mxu0 0
        %4260 = vmatmul.mubr.bf16.gmra.mrb[0].mxu0 %v4179
        %v4261 = vpop.f32.mrb[0].mxu0
        %v4262 = vadd.f32 %v4138, %v4261
        %v4263 = vpop.f32.mrb[0].mxu0
        %v4264 = vpop.f32.mrb[0].mxu0
        %v4265 = vadd.f32 %v4138, %v4264
        %v4266 = vpop.f32.mrb[0].mxu0
        %4267 = vmatprep.mubr.bf16.mxu0 0
        %4268 = vmatmul.mubr.bf16.gmra.mrb[0].mxu0 %v4182
        %v4269 = vpop.f32.mrb[0].mxu0
        %v4270 = vadd.f32 %v4138, %v4269
        %v4271 = vpop.f32.mrb[0].mxu0
        %v4272 = vpop.f32.mrb[0].mxu0
        %v4273 = vadd.f32 %v4138, %v4272
        %v4274 = vpop.f32.mrb[0].mxu0
        %4275 = vmatprep.mubr.bf16.mxu0 0
        %4276 = vmatmul.mubr.bf16.gmra.mrb[0].mxu0 %v4185
        %v4277 = vpop.f32.mrb[0].mxu0
        %v4278 = vadd.f32 %v4138, %v4277
        %v4279 = vpop.f32.mrb[0].mxu0
        %v4280 = vpop.f32.mrb[0].mxu0
        %v4281 = vadd.f32 %v4138, %v4280
        %v4282 = vpop.f32.mrb[0].mxu0
        %4283 = vdwg.mxu0
        %v4284 = vxor.u32 %v4222, 2147483648
        %v4285 = vxor.u32 %v4225, 2147483648
        %v4286 = vxor.u32 %v4230, 2147483648
        %v4287 = vxor.u32 %v4233, 2147483648
        %v4288 = vxor.u32 %v4238, 2147483648
        %v4289 = vxor.u32 %v4241, 2147483648
        %v4290 = vxor.u32 %v4246, 2147483648
        %v4291 = vxor.u32 %v4249, 2147483648
        %v4292 = vxor.u32 %v4254, 2147483648
        %v4293 = vxor.u32 %v4257, 2147483648
        %v4294 = vxor.u32 %v4262, 2147483648
        %v4295 = vxor.u32 %v4265, 2147483648
        %v4296 = vxor.u32 %v4270, 2147483648
        %v4297 = vxor.u32 %v4273, 2147483648
        %v4298 = vxor.u32 %v4278, 2147483648
        %v4299 = vxor.u32 %v4281, 2147483648
        %v4300 = vmul.f32 %v4284, 1.442695
        %v4301 = vpow.pop %v4300
        %v4302 = vmul.f32 %v4285, 1.442695
        %v4303 = vpow.pop %v4302
        %v4304 = vmul.f32 %v4286, 1.442695
        %v4305 = vpow.pop %v4304
        %v4306 = vmul.f32 %v4287, 1.442695
        %v4307 = vpow.pop %v4306
        %v4308 = vmul.f32 %v4288, 1.442695
        %v4309 = vpow.pop %v4308
        %v4310 = vmul.f32 %v4289, 1.442695
        %v4311 = vpow.pop %v4310
        %v4312 = vmul.f32 %v4290, 1.442695
        %v4313 = vpow.pop %v4312
        %v4314 = vmul.f32 %v4291, 1.442695
        %v4315 = vpow.pop %v4314
        %v4316 = vmul.f32 %v4292, 1.442695
        %v4317 = vpow.pop %v4316
        %v4318 = vmul.f32 %v4293, 1.442695
        %v4319 = vpow.pop %v4318
        %v4320 = vmul.f32 %v4294, 1.442695
        %v4321 = vpow.pop %v4320
        %v4322 = vmul.f32 %v4295, 1.442695
        %v4323 = vpow.pop %v4322
        %v4324 = vmul.f32 %v4296, 1.442695
        %v4325 = vpow.pop %v4324
        %v4326 = vmul.f32 %v4297, 1.442695
        %v4327 = vpow.pop %v4326
        %v4328 = vmul.f32 %v4298, 1.442695
        %v4329 = vpow.pop %v4328
        %v4330 = vmul.f32 %v4299, 1.442695
        %v4331 = vpow.pop %v4330
        %v4332 = vadd.f32 %v4301, 1.0
        %v4333 = vadd.f32 %v4303, 1.0
        %v4334 = vadd.f32 %v4305, 1.0
        %v4335 = vadd.f32 %v4307, 1.0
        %v4336 = vadd.f32 %v4309, 1.0
        %v4337 = vadd.f32 %v4311, 1.0
        %v4338 = vadd.f32 %v4313, 1.0
        %v4339 = vadd.f32 %v4315, 1.0
        %v4340 = vadd.f32 %v4317, 1.0
        %v4341 = vadd.f32 %v4319, 1.0
        %v4342 = vadd.f32 %v4321, 1.0
        %v4343 = vadd.f32 %v4323, 1.0
        %v4344 = vadd.f32 %v4325, 1.0
        %v4345 = vadd.f32 %v4327, 1.0
        %v4346 = vadd.f32 %v4329, 1.0
        %v4347 = vadd.f32 %v4331, 1.0
        %v4348 = vrcp.pop %v4332
        %v4349 = vmul.f32 1.0, %v4348
        %v4350 = vrcp.pop %v4333
        %v4351 = vmul.f32 1.0, %v4350
        %v4352 = vrcp.pop %v4334
        %v4353 = vmul.f32 1.0, %v4352
        %v4354 = vrcp.pop %v4335
        %v4355 = vmul.f32 1.0, %v4354
        %v4356 = vrcp.pop %v4336
        %v4357 = vmul.f32 1.0, %v4356
        %v4358 = vrcp.pop %v4337
        %v4359 = vmul.f32 1.0, %v4358
        %v4360 = vrcp.pop %v4338
        %v4361 = vmul.f32 1.0, %v4360
        %v4362 = vrcp.pop %v4339
        %v4363 = vmul.f32 1.0, %v4362
        %v4364 = vrcp.pop %v4340
        %v4365 = vmul.f32 1.0, %v4364
        %v4366 = vrcp.pop %v4341
        %v4367 = vmul.f32 1.0, %v4366
        %v4368 = vrcp.pop %v4342
        %v4369 = vmul.f32 1.0, %v4368
        %v4370 = vrcp.pop %v4343
        %v4371 = vmul.f32 1.0, %v4370
        %v4372 = vrcp.pop %v4344
        %v4373 = vmul.f32 1.0, %v4372
        %v4374 = vrcp.pop %v4345
        %v4375 = vmul.f32 1.0, %v4374
        %v4376 = vrcp.pop %v4346
        %v4377 = vmul.f32 1.0, %v4376
        %v4378 = vrcp.pop %v4347
        %v4379 = vmul.f32 1.0, %v4378
        %4396 = vrot.lane.b32.xlu0 %v4349, 36
        %v4397 = vpop.permute.xlu0 %4396
        %4398 = vrot.lane.b32.xlu0 %v4351, 36
        %v4399 = vpop.permute.xlu0 %4398
        %4400 = vrot.lane.b32.xlu0 %v4353, 36
        %v4401 = vpop.permute.xlu0 %4400
        %4402 = vrot.lane.b32.xlu0 %v4355, 36
        %v4403 = vpop.permute.xlu0 %4402
        %4404 = vrot.lane.b32.xlu0 %v4357, 36
        %v4405 = vpop.permute.xlu0 %4404
        %4406 = vrot.lane.b32.xlu0 %v4359, 36
        %v4407 = vpop.permute.xlu0 %4406
        %4408 = vrot.lane.b32.xlu0 %v4361, 36
        %v4409 = vpop.permute.xlu0 %4408
        %4410 = vrot.lane.b32.xlu0 %v4363, 36
        %v4411 = vpop.permute.xlu0 %4410
        %4412 = vrot.lane.b32.xlu0 %v4365, 36
        %v4413 = vpop.permute.xlu0 %4412
        %4414 = vrot.lane.b32.xlu0 %v4367, 36
        %v4415 = vpop.permute.xlu0 %4414
        %4416 = vrot.lane.b32.xlu0 %v4369, 36
        %v4417 = vpop.permute.xlu0 %4416
        %4418 = vrot.lane.b32.xlu0 %v4371, 36
        %v4419 = vpop.permute.xlu0 %4418
        %4420 = vrot.lane.b32.xlu0 %v4373, 36
        %v4421 = vpop.permute.xlu0 %4420
        %4422 = vrot.lane.b32.xlu0 %v4375, 36
        %v4423 = vpop.permute.xlu0 %4422
        %4424 = vrot.lane.b32.xlu0 %v4377, 36
        %v4425 = vpop.permute.xlu0 %4424
        %4426 = vrot.lane.b32.xlu0 %v4379, 36
        %v4427 = vpop.permute.xlu0 %4426
        %vm4444 = vcmask 269312
        %v4445 = vsel %vm4444, %v3104, %v3582
        %v4446 = vsel %vm4444, %v3107, %v3583
        %v4447 = vsel %vm4444, %v3112, %v3584
        %v4448 = vsel %vm4444, %v3115, %v3585
        %v4449 = vsel %vm4444, %v3120, %v3586
        %v4450 = vsel %vm4444, %v3123, %v3587
        %v4451 = vsel %vm4444, %v3128, %v3588
        %v4452 = vsel %vm4444, %v3131, %v3589
        %v4453 = vsel %vm4444, %v3136, %v3590
        %v4454 = vsel %vm4444, %v3139, %v3591
        %v4455 = vsel %vm4444, %v3144, %v3592
        %v4456 = vsel %vm4444, %v3147, %v3593
        %v4457 = vsel %vm4444, %v3152, %v3594
        %v4458 = vsel %vm4444, %v3155, %v3595
        %v4459 = vsel %vm4444, %v3160, %v3596
        %v4460 = vsel %vm4444, %v3163, %v3597
        %vm4461 = vcmask 293888
        %v4462 = vsel %vm4461, %v4445, %v4397
        %v4463 = vsel %vm4461, %v4446, %v4399
        %v4464 = vsel %vm4461, %v4447, %v4401
        %v4465 = vsel %vm4461, %v4448, %v4403
        %v4466 = vsel %vm4461, %v4449, %v4405
        %v4467 = vsel %vm4461, %v4450, %v4407
        %v4468 = vsel %vm4461, %v4451, %v4409
        %v4469 = vsel %vm4461, %v4452, %v4411
        %v4470 = vsel %vm4461, %v4453, %v4413
        %v4471 = vsel %vm4461, %v4454, %v4415
        %v4472 = vsel %vm4461, %v4455, %v4417
        %v4473 = vsel %vm4461, %v4456, %v4419
        %v4474 = vsel %vm4461, %v4457, %v4421
        %v4475 = vsel %vm4461, %v4458, %v4423
        %v4476 = vsel %vm4461, %v4459, %v4425
        %v4477 = vsel %vm4461, %v4460, %v4427
        %s4478 = scalar_lea.vmem %s400, %s409
        %vm4479 = vcmask 318464
        %4480 = vst.msk [vmem:[%s4478] sm:$0xff] %vm4479, %v4462
        %4481 = vst.msk [vmem:[%s4478 + $0x8] sm:$0xff] %vm4479, %v4463
        %4482 = vst.msk [vmem:[%s4478 + $0x10] sm:$0xff] %vm4479, %v4464
        %4483 = vst.msk [vmem:[%s4478 + $0x18] sm:$0xff] %vm4479, %v4465
        %4484 = vst.msk [vmem:[%s4478 + $0x20] sm:$0xff] %vm4479, %v4466
        %4485 = vst.msk [vmem:[%s4478 + $0x28] sm:$0xff] %vm4479, %v4467
        %4486 = vst.msk [vmem:[%s4478 + $0x30] sm:$0xff] %vm4479, %v4468
        %4487 = vst.msk [vmem:[%s4478 + $0x38] sm:$0xff] %vm4479, %v4469
        %4488 = vst.msk [vmem:[%s4478 + $0x40] sm:$0xff] %vm4479, %v4470
        %4489 = vst.msk [vmem:[%s4478 + $0x48] sm:$0xff] %vm4479, %v4471
        %4490 = vst.msk [vmem:[%s4478 + $0x50] sm:$0xff] %vm4479, %v4472
        %4491 = vst.msk [vmem:[%s4478 + $0x58] sm:$0xff] %vm4479, %v4473
        %4492 = vst.msk [vmem:[%s4478 + $0x60] sm:$0xff] %vm4479, %v4474
        %4493 = vst.msk [vmem:[%s4478 + $0x68] sm:$0xff] %vm4479, %v4475
        %4494 = vst.msk [vmem:[%s4478 + $0x70] sm:$0xff] %vm4479, %v4476
        %4495 = vst.msk [vmem:[%s4478 + $0x78] sm:$0xff] %vm4479, %v4477
      $region61: #{tpu_custom_call.1} parent=55 // loop_footer
        %s408 = sadd.s32 1, %s404
      $region62: #{tpu_custom_call.1} parent=55 // loop_footer_branch
        %403 = sbr.rel target = $region58
      $region63: #{tpu_custom_call.1} parent=55 // loop_exit
        _
      %s4496 = smul.u32 32, %s20
      %p4497 = scmp.lt.s32.totalorder %s4496, 127
      %s4498 = scalar_select %p4497, %s4496, 127
      %s4499 = smul.addr %s4498, 8
      %s4500 = scalar_lea.vmem %s9, %s4499
      // Predicated region
      $region64: #{tpu_custom_call.1} parent=55 // pred_check
        %p4501 = pneg %p247
      $region65: #{tpu_custom_call.1} parent=55 // pred_check_branch
        %4503 = sbr.rel (%p4501) target = $region67
      $region66: #{tpu_custom_call.1} parent=55 // pred_region
        %s4504 = smul.u32 32, %s20
      $region67: #{tpu_custom_call.1} parent=55 // pred_fallthru
        _
    $region56: #{tpu_custom_call.1} parent=5 // pred_fallthru
      _
    %p4505 = scmp.le.s32.totalorder 2, %s15
    // Predicated region
    $region68: #{tpu_custom_call.1} parent=5 // pred_check
      %p4506 = pneg %p4505
    $region69: #{tpu_custom_call.1} parent=5 // pred_check_branch
      %4508 = sbr.rel (%p4506) target = $region71
    $region70: #{tpu_custom_call.1} parent=5 // pred_region
      %s4509 = ssub.s32 %s15, 2
      // Predicated region
      $region72: #{tpu_custom_call.1} parent=70 // pred_check
        %p4510 = pneg %p253
      $region73: #{tpu_custom_call.1} parent=70 // pred_check_branch
        %4512 = sbr.rel (%p4510) target = $region75
      $region74: #{tpu_custom_call.1} parent=70 // pred_region
        %s4513 = smul.u32 32, %s21
        %p4514 = scmp.lt.s32.totalorder %s4513, 127
        %s4515 = scalar_select %p4514, %s4513, 127
        %s4516 = smul.addr %s4515, 8
        %s4517 = scalar_lea.vmem %s9, %s4516
      $region75: #{tpu_custom_call.1} parent=70 // pred_fallthru
        _
    $region71: #{tpu_custom_call.1} parent=5 // pred_fallthru
      _
  $region6: #{tpu_custom_call.1} parent=0 // loop_footer
    %s19 = sadd.s32 1, %s15
  $region7: #{tpu_custom_call.1} parent=0 // loop_footer_branch
    %14 = sbr.rel target = $region3
  $region8: #{tpu_custom_call.1} parent=0 // loop_exit
    _

</llo_original>
